<compile_context>
chip_gen: v7x
topology: tpu7x:2x2x1
jax: 0.10.0
libtpu: 0.0.40
codegen_flags: <defaults>
</compile_context>

<pallas_src>
import functools

import jax
import jax.numpy as jnp
from jax import lax
from jax.experimental import pallas as pl
from jax.experimental.pallas import tpu as pltpu


VMEM_LIMIT_BYTES = 48 * 1024 * 1024   # v7x-safe (64 MiB physical per TC)

ATTN_TILE_TARGET = 512                # token tile for q and k/v axes
LIN_TM_TARGET = 512                   # linear row tile
LIN_TN_TARGET = 768                   # linear output-column tile
LIN_TK_MAX = 2048                     # single reduction step up to this Cin

NEG_BIAS = -30000.0                   # "minus infinity" for padded-key masking


# ----------------------------- small helpers -----------------------------

def _round_up(x, m):
    return (x + m - 1) // m * m


def _largest_aligned_divisor(n, target, align):
    """Largest divisor of n that is a multiple of `align` and <= target, or None."""
    t = (min(target, n) // align) * align
    while t >= align:
        if n % t == 0:
            return t
        t -= align
    return None


def _attention_tile(N, override=None):
    if override is not None:
        assert override % 16 == 0 and override >= 16
        return override
    if N % 16 == 0:
        t = _largest_aligned_divisor(N, ATTN_TILE_TARGET, 16)
        if t is not None and (t >= 64 or t == N):
            return t                       # exact tiling, no padding needed
    return min(ATTN_TILE_TARGET, _round_up(N, 16))   # pad N up to multiple of t


# ----------------------------- linear (tiled matmul) -----------------------------

def _linear_kernel_single(x_ref, w_ref, b_ref, o_ref):
    # Single reduction step: no accumulator scratch, no pl.when.
    o_ref[...] = (jnp.dot(x_ref[...], w_ref[...],
                          preferred_element_type=jnp.float32)
                  + b_ref[...]).astype(o_ref.dtype)


def _linear_kernel_multi(x_ref, w_ref, b_ref, o_ref, acc_ref):
    k = pl.program_id(2)

    @pl.when(k == 0)
    def _():
        acc_ref[...] = jnp.zeros_like(acc_ref)

    acc_ref[...] += jnp.dot(x_ref[...], w_ref[...],
                            preferred_element_type=jnp.float32)

    @pl.when(k == pl.num_programs(2) - 1)
    def _():
        o_ref[...] = (acc_ref[...] + b_ref[...]).astype(o_ref.dtype)


def pallas_linear(x, w, b, out_dtype):
    """x: (R, Cin) bf16; w: (Cin, Cout) bf16; b: (Cout,) f32 -> (R, Cout) out_dtype."""
    R, Cin = x.shape
    Cout = w.shape[1]

    tm = (_largest_aligned_divisor(R, LIN_TM_TARGET, 16)
          or _largest_aligned_divisor(R, LIN_TM_TARGET, 8))
    assert tm is not None, f"rows {R} not 8-aligned"
    if Cout <= LIN_TN_TARGET:
        tn = Cout
    else:
        tn = (_largest_aligned_divisor(Cout, LIN_TN_TARGET, 128)
              or _largest_aligned_divisor(Cout, LIN_TN_TARGET, 8) or Cout)
    if Cin <= LIN_TK_MAX:
        tk = Cin
    else:
        tk = (_largest_aligned_divisor(Cin, 1024, 128) or Cin)
    nk = Cin // tk

    b2 = b.reshape(1, Cout).astype(jnp.float32)

    if nk == 1:
        kernel = _linear_kernel_single
        scratch = []
    else:
        kernel = _linear_kernel_multi
        scratch = [pltpu.VMEM((tm, tn), jnp.float32)]

    return pl.pallas_call(
        kernel,
        out_shape=jax.ShapeDtypeStruct((R, Cout), out_dtype),
        grid=(R // tm, Cout // tn, nk),
        in_specs=[
            pl.BlockSpec((tm, tk), lambda i, j, k: (i, k)),
            pl.BlockSpec((tk, tn), lambda i, j, k: (k, j)),
            pl.BlockSpec((1, tn), lambda i, j, k: (0, j)),
        ],
        out_specs=pl.BlockSpec((tm, tn), lambda i, j, k: (i, j)),
        scratch_shapes=scratch,
        compiler_params=pltpu.CompilerParams(
            dimension_semantics=("parallel", "parallel", "arbitrary"),
            vmem_limit_bytes=VMEM_LIMIT_BYTES),
    )(x.astype(jnp.bfloat16), w, b2)


# ------------------- flash attention with fused rel-pos bias -------------------

def _attn_kernel(q_ref, k_ref, v_ref, rel_ref, oh_ref, o_ref,
                 m_ref, l_ref, acc_ref, *, nh, hd, Rp, scale):
    ki = pl.program_id(2)

    @pl.when(ki == 0)
    def _():
        m_ref[...] = jnp.full(m_ref.shape, -jnp.inf, m_ref.dtype)
        l_ref[...] = jnp.zeros_like(l_ref)
        acc_ref[...] = jnp.zeros_like(acc_ref)

    oh = oh_ref[...]                                     # (tk, Rp) bf16, shared by heads

    for h in range(nh):                                  # static unroll over heads
        qh = q_ref[:, h * hd:(h + 1) * hd] * scale       # (tq, hd) bf16
        kh = k_ref[:, h * hd:(h + 1) * hd]               # (tk, hd)
        vh = v_ref[:, h * hd:(h + 1) * hd]               # (tk, hd)
        relh = rel_ref[:, h * Rp:(h + 1) * Rp]           # (tq, Rp)

        # scores + decomposed rel-pos bias: two MXU dots, f32 accumulate
        s = lax.dot_general(qh, kh, (((1,), (1,)), ((), ())),
                            preferred_element_type=jnp.float32)
        s += lax.dot_general(relh, oh, (((1,), (1,)), ((), ())),
                             preferred_element_type=jnp.float32)

        # online softmax (f32 statistics)
        m_prev = m_ref[h]                                # (tq, 1)
        m_new = jnp.maximum(m_prev, jnp.max(s, axis=-1, keepdims=True))
        alpha = jnp.exp(m_prev - m_new)
        # TODO(synk): on v6e/v7x, check bundle dump whether the EUP exp saturates;
        # if so compute p in bf16 and drop the cast below.
        p = jnp.exp(s - m_new)
        l_ref[h] = alpha * l_ref[h] + jnp.sum(p, axis=-1, keepdims=True)
        acc_ref[h] = alpha * acc_ref[h] + lax.dot_general(
            p.astype(vh.dtype), vh, (((1,), (0,)), ((), ())),
            preferred_element_type=jnp.float32)
        m_ref[h] = m_new

    @pl.when(ki == pl.num_programs(2) - 1)
    def _():
        for h in range(nh):
            inv = pl.reciprocal(l_ref[h], approx=True)
            o_ref[:, h * hd:(h + 1) * hd] = (acc_ref[h] * inv).astype(o_ref.dtype)


def pallas_flash_attention(q, k, v, rel, onehot, *, nh, hd, Rp, scale, t):
    """q/k/v: (B, Npad, C) bf16; rel: (B, Npad, nh*Rp) bf16; onehot: (Npad, Rp) bf16.
    Returns (B, Npad, C) bf16 (lane-dense, directly consumable by the proj matmul)."""
    B, Npad, C = q.shape
    kernel = functools.partial(_attn_kernel, nh=nh, hd=hd, Rp=Rp, scale=scale)
    return pl.pallas_call(
        kernel,
        out_shape=jax.ShapeDtypeStruct((B, Npad, C), jnp.bfloat16),
        grid=(B, Npad // t, Npad // t),
        in_specs=[
            pl.BlockSpec((None, t, C), lambda b, qi, ki: (b, qi, 0)),        # q
            pl.BlockSpec((None, t, C), lambda b, qi, ki: (b, ki, 0)),        # k
            pl.BlockSpec((None, t, C), lambda b, qi, ki: (b, ki, 0)),        # v
            pl.BlockSpec((None, t, nh * Rp), lambda b, qi, ki: (b, qi, 0)),  # rel
            pl.BlockSpec((t, Rp), lambda b, qi, ki: (ki, 0)),                # onehot (shared)
        ],
        out_specs=pl.BlockSpec((None, t, C), lambda b, qi, ki: (b, qi, 0)),
        scratch_shapes=[
            pltpu.VMEM((nh, t, 1), jnp.float32),    # running max m
            pltpu.VMEM((nh, t, 1), jnp.float32),    # running sum l
            pltpu.VMEM((nh, t, hd), jnp.float32),   # per-head output accumulator
        ],
        compiler_params=pltpu.CompilerParams(
            dimension_semantics=("parallel", "parallel", "arbitrary"),
            vmem_limit_bytes=VMEM_LIMIT_BYTES),
    )(q, k, v, rel, onehot)


# ----------------------------- glue / params -----------------------------

def get_rel_pos(rel_pos, d):
    if rel_pos.shape[0] == d:
        return rel_pos
    # TODO(synk): F.interpolate(mode='linear') resize path (only triggered when the
    # runtime grid differs from the init input_size); not exercised here.
    raise NotImplementedError("rel-pos interpolation not implemented")


def init_params(key, dim, num_heads, input_size, qkv_bias=False, rel_pos_init_std=0.02):
    head_dim = dim // num_heads
    T, H, W = input_size
    assert H == W
    rel_sp_dim = 2 * max(H, W) - 1
    ks = jax.random.split(key, 7)

    def tn(k, shape, std):
        return jax.random.truncated_normal(k, -2.0, 2.0, shape, jnp.float32) * std

    return {
        "qkv_w": tn(ks[0], (3 * dim, dim), 0.02),                      # (out, in)
        "qkv_b": (tn(ks[1], (3 * dim,), 0.02) if qkv_bias
                  else jnp.zeros((3 * dim,), jnp.float32)),
        "proj_w": tn(ks[2], (dim, dim), 0.02),
        "proj_b": tn(ks[3], (dim,), 0.02),
        "rel_pos_h": tn(ks[4], (rel_sp_dim, head_dim), rel_pos_init_std),
        "rel_pos_w": tn(ks[5], (rel_sp_dim, head_dim), rel_pos_init_std),
        "rel_pos_t": tn(ks[6], (2 * T - 1, head_dim), rel_pos_init_std),
    }


def prepare_weights(params, dim):
    """Pre-transpose (Cin, Cout) + pre-cast weights to bf16 ONCE (outside jit)."""
    C = dim
    qkv_w, qkv_b = params["qkv_w"], params["qkv_b"]

    def cvt(w):
        return jnp.asarray(w.T, jnp.bfloat16)

    return {
        "wq": cvt(qkv_w[:C]), "wk": cvt(qkv_w[C:2 * C]), "wv": cvt(qkv_w[2 * C:]),
        "bq": jnp.asarray(qkv_b[:C], jnp.float32),
        "bk": jnp.asarray(qkv_b[C:2 * C], jnp.float32),
        "bv": jnp.asarray(qkv_b[2 * C:], jnp.float32),
        "wp": jnp.asarray(params["proj_w"].T, jnp.bfloat16),
        "bp": jnp.asarray(params["proj_b"], jnp.float32),
        "rel_pos_h": params["rel_pos_h"],
        "rel_pos_w": params["rel_pos_w"],
        "rel_pos_t": params["rel_pos_t"],
    }


def attention_rel_pos_forward(x, w, num_heads, attn_tile=None):
    B, T, S, C = x.shape
    H = W = int(round(S ** 0.5))
    assert H * W == S
    N = T * S
    nh = num_heads
    hd = C // nh
    scale = hd ** (-0.5)

    t = _attention_tile(N, attn_tile)
    Npad = _round_up(N, t)

    # ---- qkv projections: emit q/k/v directly as (B, Npad, C) bf16, no transposes
    x2 = x.reshape(B, N, C)
    if Npad != N:
        x2 = jnp.pad(x2, ((0, 0), (0, Npad - N), (0, 0)))
    x2 = x2.reshape(B * Npad, C).astype(jnp.bfloat16)

    q3 = pallas_linear(x2, w["wq"], w["bq"], jnp.bfloat16).reshape(B, Npad, C)
    k3 = pallas_linear(x2, w["wk"], w["bk"], jnp.bfloat16).reshape(B, Npad, C)
    v3 = pallas_linear(x2, w["wv"], w["bv"], jnp.bfloat16).reshape(B, Npad, C)

    # ---- decomposed rel-pos: q-side projections (XLA einsums), key-side one-hots
    rel_pos_h = get_rel_pos(w["rel_pos_h"], 2 * H - 1)
    rel_pos_w = get_rel_pos(w["rel_pos_w"], 2 * W - 1)
    rel_pos_t = get_rel_pos(w["rel_pos_t"], 2 * T - 1)
    dist_h = jnp.arange(H)[:, None] - jnp.arange(H)[None, :] + (H - 1)
    dist_w = jnp.arange(W)[:, None] - jnp.arange(W)[None, :] + (W - 1)
    dist_t = jnp.arange(T)[:, None] - jnp.arange(T)[None, :] + (T - 1)
    Rh, Rw, Rt = rel_pos_h[dist_h], rel_pos_w[dist_w], rel_pos_t[dist_t]

    Rtot = H + W + T
    Rp = _round_up(Rtot + 1, 128)          # lane-pad per head (+1 validity lane)

    r_q = q3[:, :N].reshape(B, T, H, W, nh, hd)
    rel_h = jnp.einsum("bthwnc,hkc->bthwnk", r_q, Rh)        # (B,T,H,W,nh,H) f32
    rel_w = jnp.einsum("bthwnc,wkc->bthwnk", r_q, Rw)        # (B,T,H,W,nh,W)
    rel_t = jnp.einsum("bthwnc,tkc->bthwnk", r_q, Rt)        # (B,T,H,W,nh,T)
    rel = jnp.concatenate(
        [rel_h, rel_w, rel_t,
         jnp.full((B, T, H, W, nh, 1), NEG_BIAS, rel_h.dtype),      # validity lane
         jnp.zeros((B, T, H, W, nh, Rp - Rtot - 1), rel_h.dtype)],
        axis=-1).reshape(B, N, nh * Rp)
    if Npad != N:
        rel = jnp.pad(rel, ((0, 0), (0, Npad - N), (0, 0)))
    rel = rel.astype(jnp.bfloat16)

    n = jnp.arange(Npad)
    valid = (n < N).astype(jnp.float32)[:, None]
    oh = jnp.concatenate(
        [jax.nn.one_hot((n // W) % H, H, dtype=jnp.float32) * valid,
         jax.nn.one_hot(n % W, W, dtype=jnp.float32) * valid,
         jax.nn.one_hot(n // (H * W), T, dtype=jnp.float32) * valid,
         1.0 - valid,                                                # padded-key flag
         jnp.zeros((Npad, Rp - Rtot - 1), jnp.float32)],
        axis=-1).astype(jnp.bfloat16)                                # (Npad, Rp)

    # ---- flash attention (scores + bias fused in-kernel), bf16 lane-dense output
    attn_out = pallas_flash_attention(q3, k3, v3, rel, oh,
                                      nh=nh, hd=hd, Rp=Rp, scale=scale, t=t)

    # ---- output projection; proj_drop has p=0.0 -> identity
    out = pallas_linear(attn_out.reshape(B * Npad, C), w["wp"], w["bp"], jnp.float32)
    out = out.reshape(B, Npad, C)[:, :N].reshape(B, T, S, C)
    return out


# ----------------------------- pure-JAX reference -----------------------------

def reference_forward(x, params, num_heads):
    B, T, S, C = x.shape
    H = W = int(round(S ** 0.5))
    N = T * S
    hd = C // num_heads
    scale = hd ** (-0.5)

    x2 = x.reshape(B, N, C)
    qkv = x2 @ params["qkv_w"].T + params["qkv_b"]
    qkv = qkv.reshape(B, N, 3, num_heads, hd).transpose(2, 0, 3, 1, 4)
    q, k, v = qkv[0], qkv[1], qkv[2]
    attn = (q @ jnp.swapaxes(k, -2, -1)) * scale

    dist_h = jnp.arange(H)[:, None] - jnp.arange(H)[None, :] + (H - 1)
    dist_w = jnp.arange(W)[:, None] - jnp.arange(W)[None, :] + (W - 1)
    dist_t = jnp.arange(T)[:, None] - jnp.arange(T)[None, :] + (T - 1)
    Rh = params["rel_pos_h"][dist_h]
    Rw = params["rel_pos_w"][dist_w]
    Rt = params["rel_pos_t"][dist_t]

    r_q = q.reshape(B, num_heads, T, H, W, hd)
    rel_h = jnp.einsum("bythwc,hkc->bythwk", r_q, Rh)
    rel_w = jnp.einsum("bythwc,wkc->bythwk", r_q, Rw)
    rel_t = jnp.einsum("bythwc,tkc->bythwk", r_q, Rt)

    attn = attn.reshape(B, num_heads, T, H, W, T, H, W)
    attn = (attn
            + rel_h[:, :, :, :, :, None, :, None]
            + rel_w[:, :, :, :, :, None, None, :]
            + rel_t[:, :, :, :, :, :, None, None])
    attn = attn.reshape(B, num_heads, N, N)
    attn = jax.nn.softmax(attn, axis=-1)

    out = (attn @ v).transpose(0, 2, 1, 3).reshape(B, N, C)
    out = out @ params["proj_w"].T + params["proj_b"]
    return out.reshape(B, T, S, C)


# ----------------------------- main -----------------------------

if __name__ == "__main__":
    configs = [
        # single q/k tile, no padding
        dict(B=2, T=2, H=4, dim=32, heads=4, qkv_bias=False, attn_tile=None),
        # multiple q/k tiles: exercises the online-softmax m/l rescaling across ki
        dict(B=2, T=2, H=4, dim=32, heads=4, qkv_bias=True, attn_tile=16),
        # N=20 padded to 32: exercises padded-key masking + output slicing
        dict(B=1, T=5, H=2, dim=32, heads=4, qkv_bias=True, attn_tile=16),
    ]

    key = jax.random.PRNGKey(0)
    for cfg in configs:
        key, kx, kp = jax.random.split(key, 3)
        B, T, H, dim, heads = cfg["B"], cfg["T"], cfg["H"], cfg["dim"], cfg["heads"]
        S = H * H
        x = jax.random.normal(kx, (B, T, S, dim), jnp.float32)
        params = init_params(kp, dim, heads, (T, H, H), qkv_bias=cfg["qkv_bias"])
        w = prepare_weights(params, dim)

        fwd = jax.jit(functools.partial(attention_rel_pos_forward,
                                        num_heads=heads, attn_tile=cfg["attn_tile"]))
        y = jax.block_until_ready(fwd(x, w))
        y_ref = jax.block_until_ready(reference_forward(x, params, heads))

        assert y.shape == (B, T, S, dim)
        # bf16 MXU inputs + approx reciprocal -> slightly looser tolerance than f32
        assert jnp.allclose(y, y_ref, atol=5e-3, rtol=5e-2), \
            f"mismatch vs reference for cfg={cfg}"

    print("KERNEL_OK")
</pallas_src>

<mosaic_0001>
module attributes {stable_mosaic.version = 11 : i64} {
  func.func @_linear_kernel_single(%arg0: i32, %arg1: i32, %arg2: i32, %arg3: memref<64x32xbf16, #tpu.memory_space<vmem>>, %arg4: memref<32x32xbf16, #tpu.memory_space<vmem>>, %arg5: memref<1x32xf32, #tpu.memory_space<vmem>>, %arg6: memref<64x32xbf16, #tpu.memory_space<vmem>>) attributes {dimension_semantics = [#tpu.dimension_semantics<parallel>, #tpu.dimension_semantics<parallel>, #tpu.dimension_semantics<arbitrary>], iteration_bounds = array<i64: 1, 1, 1>, scalar_prefetch = 0 : i64, scratch_operands = 0 : i64, tpu.core_type = #tpu.core_type<tc>, window_params = [{transform_indices = @transform_0, window_bounds = array<i64: 64, 32>}, {transform_indices = @transform_1, window_bounds = array<i64: 32, 32>}, {transform_indices = @transform_2, window_bounds = array<i64: 1, 32>}, {transform_indices = @transform_3, window_bounds = array<i64: 64, 32>}]} {
    %c0 = arith.constant 0 : index
    %c0_0 = arith.constant 0 : index
    %0 = vector.load %arg3[%c0, %c0_0] : memref<64x32xbf16, #tpu.memory_space<vmem>>, vector<64x32xbf16>
    %c0_1 = arith.constant 0 : index
    %c0_2 = arith.constant 0 : index
    %1 = vector.load %arg4[%c0_1, %c0_2] : memref<32x32xbf16, #tpu.memory_space<vmem>>, vector<32x32xbf16>
    %cst = arith.constant dense<0.000000e+00> : vector<64x32xf32>
    %2 = tpu.matmul %0, %1, %cst {dimension_numbers = #tpu.dot_dimension_numbers<[1], [0], [0], [1], [0, 0, 1, 1], [], []>} : vector<64x32xbf16>, vector<32x32xbf16>, vector<64x32xf32> -> vector<64x32xf32>
    %c0_3 = arith.constant 0 : index
    %c0_4 = arith.constant 0 : index
    %3 = vector.load %arg5[%c0_3, %c0_4] : memref<1x32xf32, #tpu.memory_space<vmem>>, vector<1x32xf32>
    %4 = vector.broadcast %3 : vector<1x32xf32> to vector<64x32xf32>
    %5 = arith.addf %2, %4 : vector<64x32xf32>
    %6 = arith.truncf %5 : vector<64x32xf32> to vector<64x32xbf16>
    %c0_5 = arith.constant 0 : index
    %c0_6 = arith.constant 0 : index
    %7 = vector.load %arg6[%c0_5, %c0_6] : memref<64x32xbf16, #tpu.memory_space<vmem>>, vector<64x32xbf16>
    tpu.vector_store %arg6[%c0_5, %c0_6], %6 {strides = array<i32>} : memref<64x32xbf16, #tpu.memory_space<vmem>>, vector<64x32xbf16>,
    return
  }
  func.func @transform_0(%arg0: i32, %arg1: i32, %arg2: i32) -> (i32, i32) {
    %c0_i32 = arith.constant 0 : i32
    return %arg0, %arg2 : i32, i32
  }
  func.func @transform_1(%arg0: i32, %arg1: i32, %arg2: i32) -> (i32, i32) {
    %c0_i32 = arith.constant 0 : i32
    return %arg2, %arg1 : i32, i32
  }
  func.func @transform_2(%arg0: i32, %arg1: i32, %arg2: i32) -> (i32, i32) {
    %c0_i32 = arith.constant 0 : i32
    %c0_i32_0 = arith.constant 0 : i32
    return %c0_i32, %arg1 : i32, i32
  }
  func.func @transform_3(%arg0: i32, %arg1: i32, %arg2: i32) -> (i32, i32) {
    %c0_i32 = arith.constant 0 : i32
    return %arg0, %arg1 : i32, i32
  }
}

module attributes {stable_mosaic.version = 11 : i64} {
  func.func @_linear_kernel_single(%arg0: i32, %arg1: i32, %arg2: i32, %arg3: memref<64x32xbf16, #tpu.memory_space<vmem>>, %arg4: memref<32x32xbf16, #tpu.memory_space<vmem>>, %arg5: memref<1x32xf32, #tpu.memory_space<vmem>>, %arg6: memref<64x32xf32, #tpu.memory_space<vmem>>) attributes {dimension_semantics = [#tpu.dimension_semantics<parallel>, #tpu.dimension_semantics<parallel>, #tpu.dimension_semantics<arbitrary>], iteration_bounds = array<i64: 1, 1, 1>, scalar_prefetch = 0 : i64, scratch_operands = 0 : i64, tpu.core_type = #tpu.core_type<tc>, window_params = [{transform_indices = @transform_0, window_bounds = array<i64: 64, 32>}, {transform_indices = @transform_1, window_bounds = array<i64: 32, 32>}, {transform_indices = @transform_2, window_bounds = array<i64: 1, 32>}, {transform_indices = @transform_3, window_bounds = array<i64: 64, 32>}]} {
    %c0 = arith.constant 0 : index
    %c0_0 = arith.constant 0 : index
    %0 = vector.load %arg3[%c0, %c0_0] : memref<64x32xbf16, #tpu.memory_space<vmem>>, vector<64x32xbf16>
    %c0_1 = arith.constant 0 : index
    %c0_2 = arith.constant 0 : index
    %1 = vector.load %arg4[%c0_1, %c0_2] : memref<32x32xbf16, #tpu.memory_space<vmem>>, vector<32x32xbf16>
    %cst = arith.constant dense<0.000000e+00> : vector<64x32xf32>
    %2 = tpu.matmul %0, %1, %cst {dimension_numbers = #tpu.dot_dimension_numbers<[1], [0], [0], [1], [0, 0, 1, 1], [], []>} : vector<64x32xbf16>, vector<32x32xbf16>, vector<64x32xf32> -> vector<64x32xf32>
    %c0_3 = arith.constant 0 : index
    %c0_4 = arith.constant 0 : index
    %3 = vector.load %arg5[%c0_3, %c0_4] : memref<1x32xf32, #tpu.memory_space<vmem>>, vector<1x32xf32>
    %4 = vector.broadcast %3 : vector<1x32xf32> to vector<64x32xf32>
    %5 = arith.addf %2, %4 : vector<64x32xf32>
    %c0_5 = arith.constant 0 : index
    %c0_6 = arith.constant 0 : index
    %6 = vector.load %arg6[%c0_5, %c0_6] : memref<64x32xf32, #tpu.memory_space<vmem>>, vector<64x32xf32>
    tpu.vector_store %arg6[%c0_5, %c0_6], %5 {strides = array<i32>} : memref<64x32xf32, #tpu.memory_space<vmem>>, vector<64x32xf32>,
    return
  }
  func.func @transform_0(%arg0: i32, %arg1: i32, %arg2: i32) -> (i32, i32) {
    %c0_i32 = arith.constant 0 : i32
    return %arg0, %arg2 : i32, i32
  }
  func.func @transform_1(%arg0: i32, %arg1: i32, %arg2: i32) -> (i32, i32) {
    %c0_i32 = arith.constant 0 : i32
    return %arg2, %arg1 : i32, i32
  }
  func.func @transform_2(%arg0: i32, %arg1: i32, %arg2: i32) -> (i32, i32) {
    %c0_i32 = arith.constant 0 : i32
    %c0_i32_0 = arith.constant 0 : i32
    return %c0_i32, %arg1 : i32, i32
  }
  func.func @transform_3(%arg0: i32, %arg1: i32, %arg2: i32) -> (i32, i32) {
    %c0_i32 = arith.constant 0 : i32
    return %arg0, %arg1 : i32, i32
  }
}

module attributes {stable_mosaic.version = 11 : i64} {
  func.func @_attn_kernel(%arg0: i32, %arg1: i32, %arg2: i32, %arg3: memref<1x32x32xbf16, #tpu.memory_space<vmem>>, %arg4: memref<1x32x32xbf16, #tpu.memory_space<vmem>>, %arg5: memref<1x32x32xbf16, #tpu.memory_space<vmem>>, %arg6: memref<1x32x512xbf16, #tpu.memory_space<vmem>>, %arg7: memref<32x128xbf16, #tpu.memory_space<vmem>>, %arg8: memref<1x32x32xbf16, #tpu.memory_space<vmem>>, %arg9: memref<4x32x1xf32, #tpu.memory_space<vmem>>, %arg10: memref<4x32x1xf32, #tpu.memory_space<vmem>>, %arg11: memref<4x32x8xf32, #tpu.memory_space<vmem>>) attributes {dimension_semantics = [#tpu.dimension_semantics<parallel>, #tpu.dimension_semantics<parallel>, #tpu.dimension_semantics<arbitrary>], iteration_bounds = array<i64: 2, 1, 1>, scalar_prefetch = 0 : i64, scratch_operands = 3 : i64, tpu.core_type = #tpu.core_type<tc>, window_params = [{transform_indices = @transform_0, window_bounds = array<i64: 1, 32, 32>}, {transform_indices = @transform_1, window_bounds = array<i64: 1, 32, 32>}, {transform_indices = @transform_2, window_bounds = array<i64: 1, 32, 32>}, {transform_indices = @transform_3, window_bounds = array<i64: 1, 32, 512>}, {transform_indices = @transform_4, window_bounds = array<i64: 32, 128>}, {transform_indices = @transform_5, window_bounds = array<i64: 1, 32, 32>}]} {
    %c0_i32 = arith.constant 0 : i32
    %0 = arith.cmpi eq, %arg2, %c0_i32 : i32
    %1 = arith.extui %0 : i1 to i32
    %c0_i32_0 = arith.constant 0 : i32
    %2 = arith.cmpi ne, %1, %c0_i32_0 : i32
    scf.if %2 {
      %cst_138 = arith.constant 0xFF800000 : f32
      %187 = vector.broadcast %cst_138 : f32 to vector<4x32x1xf32>
      %c0_139 = arith.constant 0 : index
      %c0_140 = arith.constant 0 : index
      %c0_141 = arith.constant 0 : index
      %188 = vector.load %arg9[%c0_139, %c0_140, %c0_141] : memref<4x32x1xf32, #tpu.memory_space<vmem>>, vector<4x32x1xf32>
      tpu.vector_store %arg9[%c0_139, %c0_140, %c0_141], %187 {strides = array<i32>} : memref<4x32x1xf32, #tpu.memory_space<vmem>>, vector<4x32x1xf32>,
      %cst_142 = arith.constant 0.000000e+00 : f32
      %189 = vector.broadcast %cst_142 : f32 to vector<4x32x1xf32>
      %c0_143 = arith.constant 0 : index
      %c0_144 = arith.constant 0 : index
      %c0_145 = arith.constant 0 : index
      %190 = vector.load %arg10[%c0_143, %c0_144, %c0_145] : memref<4x32x1xf32, #tpu.memory_space<vmem>>, vector<4x32x1xf32>
      tpu.vector_store %arg10[%c0_143, %c0_144, %c0_145], %189 {strides = array<i32>} : memref<4x32x1xf32, #tpu.memory_space<vmem>>, vector<4x32x1xf32>,
      %cst_146 = arith.constant 0.000000e+00 : f32
      %191 = vector.broadcast %cst_146 : f32 to vector<4x32x8xf32>
      %c0_147 = arith.constant 0 : index
      %c0_148 = arith.constant 0 : index
      %c0_149 = arith.constant 0 : index
      %192 = vector.load %arg11[%c0_147, %c0_148, %c0_149] : memref<4x32x8xf32, #tpu.memory_space<vmem>>, vector<4x32x8xf32>
      tpu.vector_store %arg11[%c0_147, %c0_148, %c0_149], %191 {strides = array<i32>} : memref<4x32x8xf32, #tpu.memory_space<vmem>>, vector<4x32x8xf32>,
    } else {
    }
    %c0 = arith.constant 0 : index
    %c0_1 = arith.constant 0 : index
    %3 = vector.load %arg7[%c0, %c0_1] : memref<32x128xbf16, #tpu.memory_space<vmem>>, vector<32x128xbf16>
    %c0_2 = arith.constant 0 : index
    %c0_3 = arith.constant 0 : index
    %c0_4 = arith.constant 0 : index
    %4 = vector.load %arg3[%c0_2, %c0_3, %c0_4] : memref<1x32x32xbf16, #tpu.memory_space<vmem>>, vector<1x32x8xbf16>
    %5 = vector.shape_cast %4 : vector<1x32x8xbf16> to vector<32x8xbf16>
    %cst = arith.constant 3.535160e-01 : bf16
    %6 = vector.broadcast %cst : bf16 to vector<32x8xbf16>
    %7 = arith.mulf %5, %6 : vector<32x8xbf16>
    %c0_5 = arith.constant 0 : index
    %c0_6 = arith.constant 0 : index
    %c0_7 = arith.constant 0 : index
    %8 = vector.load %arg4[%c0_5, %c0_6, %c0_7] : memref<1x32x32xbf16, #tpu.memory_space<vmem>>, vector<1x32x8xbf16>
    %9 = vector.shape_cast %8 : vector<1x32x8xbf16> to vector<32x8xbf16>
    %c0_8 = arith.constant 0 : index
    %c0_9 = arith.constant 0 : index
    %c0_10 = arith.constant 0 : index
    %10 = vector.load %arg5[%c0_8, %c0_9, %c0_10] : memref<1x32x32xbf16, #tpu.memory_space<vmem>>, vector<1x32x8xbf16>
    %11 = vector.shape_cast %10 : vector<1x32x8xbf16> to vector<32x8xbf16>
    %c0_11 = arith.constant 0 : index
    %c0_12 = arith.constant 0 : index
    %c0_13 = arith.constant 0 : index
    %12 = vector.load %arg6[%c0_11, %c0_12, %c0_13] : memref<1x32x512xbf16, #tpu.memory_space<vmem>>, vector<1x32x128xbf16>
    %13 = vector.shape_cast %12 : vector<1x32x128xbf16> to vector<32x128xbf16>
    %cst_14 = arith.constant dense<0.000000e+00> : vector<32x32xf32>
    %14 = tpu.matmul %7, %9, %cst_14 {dimension_numbers = #tpu.dot_dimension_numbers<[1], [1], [0], [0], [0, 0, 1, 0], [], []>} : vector<32x8xbf16>, vector<32x8xbf16>, vector<32x32xf32> -> vector<32x32xf32>
    %cst_15 = arith.constant dense<0.000000e+00> : vector<32x32xf32>
    %15 = tpu.matmul %13, %3, %cst_15 {dimension_numbers = #tpu.dot_dimension_numbers<[1], [1], [0], [0], [0, 0, 1, 0], [], []>} : vector<32x128xbf16>, vector<32x128xbf16>, vector<32x32xf32> -> vector<32x32xf32>
    %16 = arith.addf %14, %15 : vector<32x32xf32>
    %c0_16 = arith.constant 0 : index
    %c0_17 = arith.constant 0 : index
    %c0_18 = arith.constant 0 : index
    %17 = vector.load %arg9[%c0_16, %c0_17, %c0_18] : memref<4x32x1xf32, #tpu.memory_space<vmem>>, vector<1x32x1xf32>
    %18 = vector.shape_cast %17 : vector<1x32x1xf32> to vector<32x1xf32>
    %cst_19 = arith.constant dense<0xFF800000> : vector<32xf32>
    %19 = vector.multi_reduction <maximumf>, %16, %cst_19 [1] : vector<32x32xf32> to vector<32xf32>
    %20 = vector.shape_cast %19 : vector<32xf32> to vector<32x1xf32>
    %21 = arith.maximumf %18, %20 : vector<32x1xf32>
    %22 = arith.subf %18, %21 : vector<32x1xf32>
    %23 = math.exp %22 : vector<32x1xf32>
    %24 = vector.broadcast %21 : vector<32x1xf32> to vector<32x32xf32>
    %25 = arith.subf %16, %24 : vector<32x32xf32>
    %26 = math.exp %25 : vector<32x32xf32>
    %c0_20 = arith.constant 0 : index
    %c0_21 = arith.constant 0 : index
    %c0_22 = arith.constant 0 : index
    %27 = vector.load %arg10[%c0_20, %c0_21, %c0_22] : memref<4x32x1xf32, #tpu.memory_space<vmem>>, vector<1x32x1xf32>
    %28 = vector.shape_cast %27 : vector<1x32x1xf32> to vector<32x1xf32>
    %29 = arith.mulf %23, %28 : vector<32x1xf32>
    %cst_23 = arith.constant dense<0.000000e+00> : vector<32xf32>
    %30 = vector.multi_reduction <add>, %26, %cst_23 [1] : vector<32x32xf32> to vector<32xf32>
    %31 = vector.shape_cast %30 : vector<32xf32> to vector<32x1xf32>
    %32 = arith.addf %29, %31 : vector<32x1xf32>
    %c0_24 = arith.constant 0 : index
    %c0_25 = arith.constant 0 : index
    %c0_26 = arith.constant 0 : index
    %33 = vector.load %arg10[%c0_24, %c0_25, %c0_26] : memref<4x32x1xf32, #tpu.memory_space<vmem>>, vector<1x32x1xf32>
    %34 = vector.shape_cast %33 : vector<1x32x1xf32> to vector<32x1xf32>
    %35 = vector.shape_cast %32 : vector<32x1xf32> to vector<1x32x1xf32>
    tpu.vector_store %arg10[%c0_24, %c0_25, %c0_26], %35 {strides = array<i32>} : memref<4x32x1xf32, #tpu.memory_space<vmem>>, vector<1x32x1xf32>,
    %c0_27 = arith.constant 0 : index
    %c0_28 = arith.constant 0 : index
    %c0_29 = arith.constant 0 : index
    %36 = vector.load %arg11[%c0_27, %c0_28, %c0_29] : memref<4x32x8xf32, #tpu.memory_space<vmem>>, vector<1x32x8xf32>
    %37 = vector.shape_cast %36 : vector<1x32x8xf32> to vector<32x8xf32>
    %38 = vector.broadcast %23 : vector<32x1xf32> to vector<32x8xf32>
    %39 = arith.mulf %38, %37 : vector<32x8xf32>
    %40 = arith.truncf %26 : vector<32x32xf32> to vector<32x32xbf16>
    %cst_30 = arith.constant dense<0.000000e+00> : vector<32x8xf32>
    %41 = tpu.matmul %40, %11, %cst_30 {dimension_numbers = #tpu.dot_dimension_numbers<[1], [0], [0], [1], [0, 0, 1, 1], [], []>} : vector<32x32xbf16>, vector<32x8xbf16>, vector<32x8xf32> -> vector<32x8xf32>
    %42 = arith.addf %39, %41 : vector<32x8xf32>
    %c0_31 = arith.constant 0 : index
    %c0_32 = arith.constant 0 : index
    %c0_33 = arith.constant 0 : index
    %43 = vector.load %arg11[%c0_31, %c0_32, %c0_33] : memref<4x32x8xf32, #tpu.memory_space<vmem>>, vector<1x32x8xf32>
    %44 = vector.shape_cast %43 : vector<1x32x8xf32> to vector<32x8xf32>
    %45 = vector.shape_cast %42 : vector<32x8xf32> to vector<1x32x8xf32>
    tpu.vector_store %arg11[%c0_31, %c0_32, %c0_33], %45 {strides = array<i32>} : memref<4x32x8xf32, #tpu.memory_space<vmem>>, vector<1x32x8xf32>,
    %c0_34 = arith.constant 0 : index
    %c0_35 = arith.constant 0 : index
    %c0_36 = arith.constant 0 : index
    %46 = vector.load %arg9[%c0_34, %c0_35, %c0_36] : memref<4x32x1xf32, #tpu.memory_space<vmem>>, vector<1x32x1xf32>
    %47 = vector.shape_cast %46 : vector<1x32x1xf32> to vector<32x1xf32>
    %48 = vector.shape_cast %21 : vector<32x1xf32> to vector<1x32x1xf32>
    tpu.vector_store %arg9[%c0_34, %c0_35, %c0_36], %48 {strides = array<i32>} : memref<4x32x1xf32, #tpu.memory_space<vmem>>, vector<1x32x1xf32>,
    %c0_37 = arith.constant 0 : index
    %c0_38 = arith.constant 0 : index
    %c8 = arith.constant 8 : index
    %49 = vector.load %arg3[%c0_37, %c0_38, %c8] : memref<1x32x32xbf16, #tpu.memory_space<vmem>>, vector<1x32x8xbf16>
    %50 = vector.shape_cast %49 : vector<1x32x8xbf16> to vector<32x8xbf16>
    %cst_39 = arith.constant 3.535160e-01 : bf16
    %51 = vector.broadcast %cst_39 : bf16 to vector<32x8xbf16>
    %52 = arith.mulf %50, %51 : vector<32x8xbf16>
    %c0_40 = arith.constant 0 : index
    %c0_41 = arith.constant 0 : index
    %c8_42 = arith.constant 8 : index
    %53 = vector.load %arg4[%c0_40, %c0_41, %c8_42] : memref<1x32x32xbf16, #tpu.memory_space<vmem>>, vector<1x32x8xbf16>
    %54 = vector.shape_cast %53 : vector<1x32x8xbf16> to vector<32x8xbf16>
    %c0_43 = arith.constant 0 : index
    %c0_44 = arith.constant 0 : index
    %c8_45 = arith.constant 8 : index
    %55 = vector.load %arg5[%c0_43, %c0_44, %c8_45] : memref<1x32x32xbf16, #tpu.memory_space<vmem>>, vector<1x32x8xbf16>
    %56 = vector.shape_cast %55 : vector<1x32x8xbf16> to vector<32x8xbf16>
    %c0_46 = arith.constant 0 : index
    %c0_47 = arith.constant 0 : index
    %c128 = arith.constant 128 : index
    %57 = vector.load %arg6[%c0_46, %c0_47, %c128] : memref<1x32x512xbf16, #tpu.memory_space<vmem>>, vector<1x32x128xbf16>
    %58 = vector.shape_cast %57 : vector<1x32x128xbf16> to vector<32x128xbf16>
    %cst_48 = arith.constant dense<0.000000e+00> : vector<32x32xf32>
    %59 = tpu.matmul %52, %54, %cst_48 {dimension_numbers = #tpu.dot_dimension_numbers<[1], [1], [0], [0], [0, 0, 1, 0], [], []>} : vector<32x8xbf16>, vector<32x8xbf16>, vector<32x32xf32> -> vector<32x32xf32>
    %cst_49 = arith.constant dense<0.000000e+00> : vector<32x32xf32>
    %60 = tpu.matmul %58, %3, %cst_49 {dimension_numbers = #tpu.dot_dimension_numbers<[1], [1], [0], [0], [0, 0, 1, 0], [], []>} : vector<32x128xbf16>, vector<32x128xbf16>, vector<32x32xf32> -> vector<32x32xf32>
    %61 = arith.addf %59, %60 : vector<32x32xf32>
    %c1 = arith.constant 1 : index
    %c0_50 = arith.constant 0 : index
    %c0_51 = arith.constant 0 : index
    %62 = vector.load %arg9[%c1, %c0_50, %c0_51] : memref<4x32x1xf32, #tpu.memory_space<vmem>>, vector<1x32x1xf32>
    %63 = vector.shape_cast %62 : vector<1x32x1xf32> to vector<32x1xf32>
    %cst_52 = arith.constant dense<0xFF800000> : vector<32xf32>
    %64 = vector.multi_reduction <maximumf>, %61, %cst_52 [1] : vector<32x32xf32> to vector<32xf32>
    %65 = vector.shape_cast %64 : vector<32xf32> to vector<32x1xf32>
    %66 = arith.maximumf %63, %65 : vector<32x1xf32>
    %67 = arith.subf %63, %66 : vector<32x1xf32>
    %68 = math.exp %67 : vector<32x1xf32>
    %69 = vector.broadcast %66 : vector<32x1xf32> to vector<32x32xf32>
    %70 = arith.subf %61, %69 : vector<32x32xf32>
    %71 = math.exp %70 : vector<32x32xf32>
    %c1_53 = arith.constant 1 : index
    %c0_54 = arith.constant 0 : index
    %c0_55 = arith.constant 0 : index
    %72 = vector.load %arg10[%c1_53, %c0_54, %c0_55] : memref<4x32x1xf32, #tpu.memory_space<vmem>>, vector<1x32x1xf32>
    %73 = vector.shape_cast %72 : vector<1x32x1xf32> to vector<32x1xf32>
    %74 = arith.mulf %68, %73 : vector<32x1xf32>
    %cst_56 = arith.constant dense<0.000000e+00> : vector<32xf32>
    %75 = vector.multi_reduction <add>, %71, %cst_56 [1] : vector<32x32xf32> to vector<32xf32>
    %76 = vector.shape_cast %75 : vector<32xf32> to vector<32x1xf32>
    %77 = arith.addf %74, %76 : vector<32x1xf32>
    %c1_57 = arith.constant 1 : index
    %c0_58 = arith.constant 0 : index
    %c0_59 = arith.constant 0 : index
    %78 = vector.load %arg10[%c1_57, %c0_58, %c0_59] : memref<4x32x1xf32, #tpu.memory_space<vmem>>, vector<1x32x1xf32>
    %79 = vector.shape_cast %78 : vector<1x32x1xf32> to vector<32x1xf32>
    %80 = vector.shape_cast %77 : vector<32x1xf32> to vector<1x32x1xf32>
    tpu.vector_store %arg10[%c1_57, %c0_58, %c0_59], %80 {strides = array<i32>} : memref<4x32x1xf32, #tpu.memory_space<vmem>>, vector<1x32x1xf32>,
    %c1_60 = arith.constant 1 : index
    %c0_61 = arith.constant 0 : index
    %c0_62 = arith.constant 0 : index
    %81 = vector.load %arg11[%c1_60, %c0_61, %c0_62] : memref<4x32x8xf32, #tpu.memory_space<vmem>>, vector<1x32x8xf32>
    %82 = vector.shape_cast %81 : vector<1x32x8xf32> to vector<32x8xf32>
    %83 = vector.broadcast %68 : vector<32x1xf32> to vector<32x8xf32>
    %84 = arith.mulf %83, %82 : vector<32x8xf32>
    %85 = arith.truncf %71 : vector<32x32xf32> to vector<32x32xbf16>
    %cst_63 = arith.constant dense<0.000000e+00> : vector<32x8xf32>
    %86 = tpu.matmul %85, %56, %cst_63 {dimension_numbers = #tpu.dot_dimension_numbers<[1], [0], [0], [1], [0, 0, 1, 1], [], []>} : vector<32x32xbf16>, vector<32x8xbf16>, vector<32x8xf32> -> vector<32x8xf32>
    %87 = arith.addf %84, %86 : vector<32x8xf32>
    %c1_64 = arith.constant 1 : index
    %c0_65 = arith.constant 0 : index
    %c0_66 = arith.constant 0 : index
    %88 = vector.load %arg11[%c1_64, %c0_65, %c0_66] : memref<4x32x8xf32, #tpu.memory_space<vmem>>, vector<1x32x8xf32>
    %89 = vector.shape_cast %88 : vector<1x32x8xf32> to vector<32x8xf32>
    %90 = vector.shape_cast %87 : vector<32x8xf32> to vector<1x32x8xf32>
    tpu.vector_store %arg11[%c1_64, %c0_65, %c0_66], %90 {strides = array<i32>} : memref<4x32x8xf32, #tpu.memory_space<vmem>>, vector<1x32x8xf32>,
    %c1_67 = arith.constant 1 : index
    %c0_68 = arith.constant 0 : index
    %c0_69 = arith.constant 0 : index
    %91 = vector.load %arg9[%c1_67, %c0_68, %c0_69] : memref<4x32x1xf32, #tpu.memory_space<vmem>>, vector<1x32x1xf32>
    %92 = vector.shape_cast %91 : vector<1x32x1xf32> to vector<32x1xf32>
    %93 = vector.shape_cast %66 : vector<32x1xf32> to vector<1x32x1xf32>
    tpu.vector_store %arg9[%c1_67, %c0_68, %c0_69], %93 {strides = array<i32>} : memref<4x32x1xf32, #tpu.memory_space<vmem>>, vector<1x32x1xf32>,
    %c0_70 = arith.constant 0 : index
    %c0_71 = arith.constant 0 : index
    %c16 = arith.constant 16 : index
    %94 = vector.load %arg3[%c0_70, %c0_71, %c16] : memref<1x32x32xbf16, #tpu.memory_space<vmem>>, vector<1x32x8xbf16>
    %95 = vector.shape_cast %94 : vector<1x32x8xbf16> to vector<32x8xbf16>
    %cst_72 = arith.constant 3.535160e-01 : bf16
    %96 = vector.broadcast %cst_72 : bf16 to vector<32x8xbf16>
    %97 = arith.mulf %95, %96 : vector<32x8xbf16>
    %c0_73 = arith.constant 0 : index
    %c0_74 = arith.constant 0 : index
    %c16_75 = arith.constant 16 : index
    %98 = vector.load %arg4[%c0_73, %c0_74, %c16_75] : memref<1x32x32xbf16, #tpu.memory_space<vmem>>, vector<1x32x8xbf16>
    %99 = vector.shape_cast %98 : vector<1x32x8xbf16> to vector<32x8xbf16>
    %c0_76 = arith.constant 0 : index
    %c0_77 = arith.constant 0 : index
    %c16_78 = arith.constant 16 : index
    %100 = vector.load %arg5[%c0_76, %c0_77, %c16_78] : memref<1x32x32xbf16, #tpu.memory_space<vmem>>, vector<1x32x8xbf16>
    %101 = vector.shape_cast %100 : vector<1x32x8xbf16> to vector<32x8xbf16>
    %c0_79 = arith.constant 0 : index
    %c0_80 = arith.constant 0 : index
    %c256 = arith.constant 256 : index
    %102 = vector.load %arg6[%c0_79, %c0_80, %c256] : memref<1x32x512xbf16, #tpu.memory_space<vmem>>, vector<1x32x128xbf16>
    %103 = vector.shape_cast %102 : vector<1x32x128xbf16> to vector<32x128xbf16>
    %cst_81 = arith.constant dense<0.000000e+00> : vector<32x32xf32>
    %104 = tpu.matmul %97, %99, %cst_81 {dimension_numbers = #tpu.dot_dimension_numbers<[1], [1], [0], [0], [0, 0, 1, 0], [], []>} : vector<32x8xbf16>, vector<32x8xbf16>, vector<32x32xf32> -> vector<32x32xf32>
    %cst_82 = arith.constant dense<0.000000e+00> : vector<32x32xf32>
    %105 = tpu.matmul %103, %3, %cst_82 {dimension_numbers = #tpu.dot_dimension_numbers<[1], [1], [0], [0], [0, 0, 1, 0], [], []>} : vector<32x128xbf16>, vector<32x128xbf16>, vector<32x32xf32> -> vector<32x32xf32>
    %106 = arith.addf %104, %105 : vector<32x32xf32>
    %c2 = arith.constant 2 : index
    %c0_83 = arith.constant 0 : index
    %c0_84 = arith.constant 0 : index
    %107 = vector.load %arg9[%c2, %c0_83, %c0_84] : memref<4x32x1xf32, #tpu.memory_space<vmem>>, vector<1x32x1xf32>
    %108 = vector.shape_cast %107 : vector<1x32x1xf32> to vector<32x1xf32>
    %cst_85 = arith.constant dense<0xFF800000> : vector<32xf32>
    %109 = vector.multi_reduction <maximumf>, %106, %cst_85 [1] : vector<32x32xf32> to vector<32xf32>
    %110 = vector.shape_cast %109 : vector<32xf32> to vector<32x1xf32>
    %111 = arith.maximumf %108, %110 : vector<32x1xf32>
    %112 = arith.subf %108, %111 : vector<32x1xf32>
    %113 = math.exp %112 : vector<32x1xf32>
    %114 = vector.broadcast %111 : vector<32x1xf32> to vector<32x32xf32>
    %115 = arith.subf %106, %114 : vector<32x32xf32>
    %116 = math.exp %115 : vector<32x32xf32>
    %c2_86 = arith.constant 2 : index
    %c0_87 = arith.constant 0 : index
    %c0_88 = arith.constant 0 : index
    %117 = vector.load %arg10[%c2_86, %c0_87, %c0_88] : memref<4x32x1xf32, #tpu.memory_space<vmem>>, vector<1x32x1xf32>
    %118 = vector.shape_cast %117 : vector<1x32x1xf32> to vector<32x1xf32>
    %119 = arith.mulf %113, %118 : vector<32x1xf32>
    %cst_89 = arith.constant dense<0.000000e+00> : vector<32xf32>
    %120 = vector.multi_reduction <add>, %116, %cst_89 [1] : vector<32x32xf32> to vector<32xf32>
    %121 = vector.shape_cast %120 : vector<32xf32> to vector<32x1xf32>
    %122 = arith.addf %119, %121 : vector<32x1xf32>
    %c2_90 = arith.constant 2 : index
    %c0_91 = arith.constant 0 : index
    %c0_92 = arith.constant 0 : index
    %123 = vector.load %arg10[%c2_90, %c0_91, %c0_92] : memref<4x32x1xf32, #tpu.memory_space<vmem>>, vector<1x32x1xf32>
    %124 = vector.shape_cast %123 : vector<1x32x1xf32> to vector<32x1xf32>
    %125 = vector.shape_cast %122 : vector<32x1xf32> to vector<1x32x1xf32>
    tpu.vector_store %arg10[%c2_90, %c0_91, %c0_92], %125 {strides = array<i32>} : memref<4x32x1xf32, #tpu.memory_space<vmem>>, vector<1x32x1xf32>,
    %c2_93 = arith.constant 2 : index
    %c0_94 = arith.constant 0 : index
    %c0_95 = arith.constant 0 : index
    %126 = vector.load %arg11[%c2_93, %c0_94, %c0_95] : memref<4x32x8xf32, #tpu.memory_space<vmem>>, vector<1x32x8xf32>
    %127 = vector.shape_cast %126 : vector<1x32x8xf32> to vector<32x8xf32>
    %128 = vector.broadcast %113 : vector<32x1xf32> to vector<32x8xf32>
    %129 = arith.mulf %128, %127 : vector<32x8xf32>
    %130 = arith.truncf %116 : vector<32x32xf32> to vector<32x32xbf16>
    %cst_96 = arith.constant dense<0.000000e+00> : vector<32x8xf32>
    %131 = tpu.matmul %130, %101, %cst_96 {dimension_numbers = #tpu.dot_dimension_numbers<[1], [0], [0], [1], [0, 0, 1, 1], [], []>} : vector<32x32xbf16>, vector<32x8xbf16>, vector<32x8xf32> -> vector<32x8xf32>
    %132 = arith.addf %129, %131 : vector<32x8xf32>
    %c2_97 = arith.constant 2 : index
    %c0_98 = arith.constant 0 : index
    %c0_99 = arith.constant 0 : index
    %133 = vector.load %arg11[%c2_97, %c0_98, %c0_99] : memref<4x32x8xf32, #tpu.memory_space<vmem>>, vector<1x32x8xf32>
    %134 = vector.shape_cast %133 : vector<1x32x8xf32> to vector<32x8xf32>
    %135 = vector.shape_cast %132 : vector<32x8xf32> to vector<1x32x8xf32>
    tpu.vector_store %arg11[%c2_97, %c0_98, %c0_99], %135 {strides = array<i32>} : memref<4x32x8xf32, #tpu.memory_space<vmem>>, vector<1x32x8xf32>,
    %c2_100 = arith.constant 2 : index
    %c0_101 = arith.constant 0 : index
    %c0_102 = arith.constant 0 : index
    %136 = vector.load %arg9[%c2_100, %c0_101, %c0_102] : memref<4x32x1xf32, #tpu.memory_space<vmem>>, vector<1x32x1xf32>
    %137 = vector.shape_cast %136 : vector<1x32x1xf32> to vector<32x1xf32>
    %138 = vector.shape_cast %111 : vector<32x1xf32> to vector<1x32x1xf32>
    tpu.vector_store %arg9[%c2_100, %c0_101, %c0_102], %138 {strides = array<i32>} : memref<4x32x1xf32, #tpu.memory_space<vmem>>, vector<1x32x1xf32>,
    %c0_103 = arith.constant 0 : index
    %c0_104 = arith.constant 0 : index
    %c24 = arith.constant 24 : index
    %139 = vector.load %arg3[%c0_103, %c0_104, %c24] : memref<1x32x32xbf16, #tpu.memory_space<vmem>>, vector<1x32x8xbf16>
    %140 = vector.shape_cast %139 : vector<1x32x8xbf16> to vector<32x8xbf16>
    %cst_105 = arith.constant 3.535160e-01 : bf16
    %141 = vector.broadcast %cst_105 : bf16 to vector<32x8xbf16>
    %142 = arith.mulf %140, %141 : vector<32x8xbf16>
    %c0_106 = arith.constant 0 : index
    %c0_107 = arith.constant 0 : index
    %c24_108 = arith.constant 24 : index
    %143 = vector.load %arg4[%c0_106, %c0_107, %c24_108] : memref<1x32x32xbf16, #tpu.memory_space<vmem>>, vector<1x32x8xbf16>
    %144 = vector.shape_cast %143 : vector<1x32x8xbf16> to vector<32x8xbf16>
    %c0_109 = arith.constant 0 : index
    %c0_110 = arith.constant 0 : index
    %c24_111 = arith.constant 24 : index
    %145 = vector.load %arg5[%c0_109, %c0_110, %c24_111] : memref<1x32x32xbf16, #tpu.memory_space<vmem>>, vector<1x32x8xbf16>
    %146 = vector.shape_cast %145 : vector<1x32x8xbf16> to vector<32x8xbf16>
    %c0_112 = arith.constant 0 : index
    %c0_113 = arith.constant 0 : index
    %c384 = arith.constant 384 : index
    %147 = vector.load %arg6[%c0_112, %c0_113, %c384] : memref<1x32x512xbf16, #tpu.memory_space<vmem>>, vector<1x32x128xbf16>
    %148 = vector.shape_cast %147 : vector<1x32x128xbf16> to vector<32x128xbf16>
    %cst_114 = arith.constant dense<0.000000e+00> : vector<32x32xf32>
    %149 = tpu.matmul %142, %144, %cst_114 {dimension_numbers = #tpu.dot_dimension_numbers<[1], [1], [0], [0], [0, 0, 1, 0], [], []>} : vector<32x8xbf16>, vector<32x8xbf16>, vector<32x32xf32> -> vector<32x32xf32>
    %cst_115 = arith.constant dense<0.000000e+00> : vector<32x32xf32>
    %150 = tpu.matmul %148, %3, %cst_115 {dimension_numbers = #tpu.dot_dimension_numbers<[1], [1], [0], [0], [0, 0, 1, 0], [], []>} : vector<32x128xbf16>, vector<32x128xbf16>, vector<32x32xf32> -> vector<32x32xf32>
    %151 = arith.addf %149, %150 : vector<32x32xf32>
    %c3 = arith.constant 3 : index
    %c0_116 = arith.constant 0 : index
    %c0_117 = arith.constant 0 : index
    %152 = vector.load %arg9[%c3, %c0_116, %c0_117] : memref<4x32x1xf32, #tpu.memory_space<vmem>>, vector<1x32x1xf32>
    %153 = vector.shape_cast %152 : vector<1x32x1xf32> to vector<32x1xf32>
    %cst_118 = arith.constant dense<0xFF800000> : vector<32xf32>
    %154 = vector.multi_reduction <maximumf>, %151, %cst_118 [1] : vector<32x32xf32> to vector<32xf32>
    %155 = vector.shape_cast %154 : vector<32xf32> to vector<32x1xf32>
    %156 = arith.maximumf %153, %155 : vector<32x1xf32>
    %157 = arith.subf %153, %156 : vector<32x1xf32>
    %158 = math.exp %157 : vector<32x1xf32>
    %159 = vector.broadcast %156 : vector<32x1xf32> to vector<32x32xf32>
    %160 = arith.subf %151, %159 : vector<32x32xf32>
    %161 = math.exp %160 : vector<32x32xf32>
    %c3_119 = arith.constant 3 : index
    %c0_120 = arith.constant 0 : index
    %c0_121 = arith.constant 0 : index
    %162 = vector.load %arg10[%c3_119, %c0_120, %c0_121] : memref<4x32x1xf32, #tpu.memory_space<vmem>>, vector<1x32x1xf32>
    %163 = vector.shape_cast %162 : vector<1x32x1xf32> to vector<32x1xf32>
    %164 = arith.mulf %158, %163 : vector<32x1xf32>
    %cst_122 = arith.constant dense<0.000000e+00> : vector<32xf32>
    %165 = vector.multi_reduction <add>, %161, %cst_122 [1] : vector<32x32xf32> to vector<32xf32>
    %166 = vector.shape_cast %165 : vector<32xf32> to vector<32x1xf32>
    %167 = arith.addf %164, %166 : vector<32x1xf32>
    %c3_123 = arith.constant 3 : index
    %c0_124 = arith.constant 0 : index
    %c0_125 = arith.constant 0 : index
    %168 = vector.load %arg10[%c3_123, %c0_124, %c0_125] : memref<4x32x1xf32, #tpu.memory_space<vmem>>, vector<1x32x1xf32>
    %169 = vector.shape_cast %168 : vector<1x32x1xf32> to vector<32x1xf32>
    %170 = vector.shape_cast %167 : vector<32x1xf32> to vector<1x32x1xf32>
    tpu.vector_store %arg10[%c3_123, %c0_124, %c0_125], %170 {strides = array<i32>} : memref<4x32x1xf32, #tpu.memory_space<vmem>>, vector<1x32x1xf32>,
    %c3_126 = arith.constant 3 : index
    %c0_127 = arith.constant 0 : index
    %c0_128 = arith.constant 0 : index
    %171 = vector.load %arg11[%c3_126, %c0_127, %c0_128] : memref<4x32x8xf32, #tpu.memory_space<vmem>>, vector<1x32x8xf32>
    %172 = vector.shape_cast %171 : vector<1x32x8xf32> to vector<32x8xf32>
    %173 = vector.broadcast %158 : vector<32x1xf32> to vector<32x8xf32>
    %174 = arith.mulf %173, %172 : vector<32x8xf32>
    %175 = arith.truncf %161 : vector<32x32xf32> to vector<32x32xbf16>
    %cst_129 = arith.constant dense<0.000000e+00> : vector<32x8xf32>
    %176 = tpu.matmul %175, %146, %cst_129 {dimension_numbers = #tpu.dot_dimension_numbers<[1], [0], [0], [1], [0, 0, 1, 1], [], []>} : vector<32x32xbf16>, vector<32x8xbf16>, vector<32x8xf32> -> vector<32x8xf32>
    %177 = arith.addf %174, %176 : vector<32x8xf32>
    %c3_130 = arith.constant 3 : index
    %c0_131 = arith.constant 0 : index
    %c0_132 = arith.constant 0 : index
    %178 = vector.load %arg11[%c3_130, %c0_131, %c0_132] : memref<4x32x8xf32, #tpu.memory_space<vmem>>, vector<1x32x8xf32>
    %179 = vector.shape_cast %178 : vector<1x32x8xf32> to vector<32x8xf32>
    %180 = vector.shape_cast %177 : vector<32x8xf32> to vector<1x32x8xf32>
    tpu.vector_store %arg11[%c3_130, %c0_131, %c0_132], %180 {strides = array<i32>} : memref<4x32x8xf32, #tpu.memory_space<vmem>>, vector<1x32x8xf32>,
    %c3_133 = arith.constant 3 : index
    %c0_134 = arith.constant 0 : index
    %c0_135 = arith.constant 0 : index
    %181 = vector.load %arg9[%c3_133, %c0_134, %c0_135] : memref<4x32x1xf32, #tpu.memory_space<vmem>>, vector<1x32x1xf32>
    %182 = vector.shape_cast %181 : vector<1x32x1xf32> to vector<32x1xf32>
    %183 = vector.shape_cast %156 : vector<32x1xf32> to vector<1x32x1xf32>
    tpu.vector_store %arg9[%c3_133, %c0_134, %c0_135], %183 {strides = array<i32>} : memref<4x32x1xf32, #tpu.memory_space<vmem>>, vector<1x32x1xf32>,
    %c0_i32_136 = arith.constant 0 : i32
    %184 = arith.cmpi eq, %arg2, %c0_i32_136 : i32
    %185 = arith.extui %184 : i1 to i32
    %c0_i32_137 = arith.constant 0 : i32
    %186 = arith.cmpi ne, %185, %c0_i32_137 : i32
    scf.if %186 {
      %c0_138 = arith.constant 0 : index
      %c0_139 = arith.constant 0 : index
      %c0_140 = arith.constant 0 : index
      %187 = vector.load %arg10[%c0_138, %c0_139, %c0_140] : memref<4x32x1xf32, #tpu.memory_space<vmem>>, vector<1x32x1xf32>
      %188 = vector.shape_cast %187 : vector<1x32x1xf32> to vector<32x1xf32>
      %189 = tpu.reciprocal %188 {approx = true} : vector<32x1xf32> -> vector<32x1xf32>
      %c0_141 = arith.constant 0 : index
      %c0_142 = arith.constant 0 : index
      %c0_143 = arith.constant 0 : index
      %190 = vector.load %arg11[%c0_141, %c0_142, %c0_143] : memref<4x32x8xf32, #tpu.memory_space<vmem>>, vector<1x32x8xf32>
      %191 = vector.shape_cast %190 : vector<1x32x8xf32> to vector<32x8xf32>
      %192 = vector.broadcast %189 : vector<32x1xf32> to vector<32x8xf32>
      %193 = arith.mulf %191, %192 : vector<32x8xf32>
      %194 = arith.truncf %193 : vector<32x8xf32> to vector<32x8xbf16>
      %c0_144 = arith.constant 0 : index
      %c0_145 = arith.constant 0 : index
      %c0_146 = arith.constant 0 : index
      %195 = vector.load %arg8[%c0_144, %c0_145, %c0_146] : memref<1x32x32xbf16, #tpu.memory_space<vmem>>, vector<1x32x8xbf16>
      %196 = vector.shape_cast %195 : vector<1x32x8xbf16> to vector<32x8xbf16>
      %197 = vector.shape_cast %194 : vector<32x8xbf16> to vector<1x32x8xbf16>
      tpu.vector_store %arg8[%c0_144, %c0_145, %c0_146], %197 {strides = array<i32>} : memref<1x32x32xbf16, #tpu.memory_space<vmem>>, vector<1x32x8xbf16>,
      %c1_147 = arith.constant 1 : index
      %c0_148 = arith.constant 0 : index
      %c0_149 = arith.constant 0 : index
      %198 = vector.load %arg10[%c1_147, %c0_148, %c0_149] : memref<4x32x1xf32, #tpu.memory_space<vmem>>, vector<1x32x1xf32>
      %199 = vector.shape_cast %198 : vector<1x32x1xf32> to vector<32x1xf32>
      %200 = tpu.reciprocal %199 {approx = true} : vector<32x1xf32> -> vector<32x1xf32>
      %c1_150 = arith.constant 1 : index
      %c0_151 = arith.constant 0 : index
      %c0_152 = arith.constant 0 : index
      %201 = vector.load %arg11[%c1_150, %c0_151, %c0_152] : memref<4x32x8xf32, #tpu.memory_space<vmem>>, vector<1x32x8xf32>
      %202 = vector.shape_cast %201 : vector<1x32x8xf32> to vector<32x8xf32>
      %203 = vector.broadcast %200 : vector<32x1xf32> to vector<32x8xf32>
      %204 = arith.mulf %202, %203 : vector<32x8xf32>
      %205 = arith.truncf %204 : vector<32x8xf32> to vector<32x8xbf16>
      %c0_153 = arith.constant 0 : index
      %c0_154 = arith.constant 0 : index
      %c8_155 = arith.constant 8 : index
      %206 = vector.load %arg8[%c0_153, %c0_154, %c8_155] : memref<1x32x32xbf16, #tpu.memory_space<vmem>>, vector<1x32x8xbf16>
      %207 = vector.shape_cast %206 : vector<1x32x8xbf16> to vector<32x8xbf16>
      %208 = vector.shape_cast %205 : vector<32x8xbf16> to vector<1x32x8xbf16>
      tpu.vector_store %arg8[%c0_153, %c0_154, %c8_155], %208 {strides = array<i32>} : memref<1x32x32xbf16, #tpu.memory_space<vmem>>, vector<1x32x8xbf16>,
      %c2_156 = arith.constant 2 : index
      %c0_157 = arith.constant 0 : index
      %c0_158 = arith.constant 0 : index
      %209 = vector.load %arg10[%c2_156, %c0_157, %c0_158] : memref<4x32x1xf32, #tpu.memory_space<vmem>>, vector<1x32x1xf32>
      %210 = vector.shape_cast %209 : vector<1x32x1xf32> to vector<32x1xf32>
      %211 = tpu.reciprocal %210 {approx = true} : vector<32x1xf32> -> vector<32x1xf32>
      %c2_159 = arith.constant 2 : index
      %c0_160 = arith.constant 0 : index
      %c0_161 = arith.constant 0 : index
      %212 = vector.load %arg11[%c2_159, %c0_160, %c0_161] : memref<4x32x8xf32, #tpu.memory_space<vmem>>, vector<1x32x8xf32>
      %213 = vector.shape_cast %212 : vector<1x32x8xf32> to vector<32x8xf32>
      %214 = vector.broadcast %211 : vector<32x1xf32> to vector<32x8xf32>
      %215 = arith.mulf %213, %214 : vector<32x8xf32>
      %216 = arith.truncf %215 : vector<32x8xf32> to vector<32x8xbf16>
      %c0_162 = arith.constant 0 : index
      %c0_163 = arith.constant 0 : index
      %c16_164 = arith.constant 16 : index
      %217 = vector.load %arg8[%c0_162, %c0_163, %c16_164] : memref<1x32x32xbf16, #tpu.memory_space<vmem>>, vector<1x32x8xbf16>
      %218 = vector.shape_cast %217 : vector<1x32x8xbf16> to vector<32x8xbf16>
      %219 = vector.shape_cast %216 : vector<32x8xbf16> to vector<1x32x8xbf16>
      tpu.vector_store %arg8[%c0_162, %c0_163, %c16_164], %219 {strides = array<i32>} : memref<1x32x32xbf16, #tpu.memory_space<vmem>>, vector<1x32x8xbf16>,
      %c3_165 = arith.constant 3 : index
      %c0_166 = arith.constant 0 : index
      %c0_167 = arith.constant 0 : index
      %220 = vector.load %arg10[%c3_165, %c0_166, %c0_167] : memref<4x32x1xf32, #tpu.memory_space<vmem>>, vector<1x32x1xf32>
      %221 = vector.shape_cast %220 : vector<1x32x1xf32> to vector<32x1xf32>
      %222 = tpu.reciprocal %221 {approx = true} : vector<32x1xf32> -> vector<32x1xf32>
      %c3_168 = arith.constant 3 : index
      %c0_169 = arith.constant 0 : index
      %c0_170 = arith.constant 0 : index
      %223 = vector.load %arg11[%c3_168, %c0_169, %c0_170] : memref<4x32x8xf32, #tpu.memory_space<vmem>>, vector<1x32x8xf32>
      %224 = vector.shape_cast %223 : vector<1x32x8xf32> to vector<32x8xf32>
      %225 = vector.broadcast %222 : vector<32x1xf32> to vector<32x8xf32>
      %226 = arith.mulf %224, %225 : vector<32x8xf32>
      %227 = arith.truncf %226 : vector<32x8xf32> to vector<32x8xbf16>
      %c0_171 = arith.constant 0 : index
      %c0_172 = arith.constant 0 : index
      %c24_173 = arith.constant 24 : index
      %228 = vector.load %arg8[%c0_171, %c0_172, %c24_173] : memref<1x32x32xbf16, #tpu.memory_space<vmem>>, vector<1x32x8xbf16>
      %229 = vector.shape_cast %228 : vector<1x32x8xbf16> to vector<32x8xbf16>
      %230 = vector.shape_cast %227 : vector<32x8xbf16> to vector<1x32x8xbf16>
      tpu.vector_store %arg8[%c0_171, %c0_172, %c24_173], %230 {strides = array<i32>} : memref<1x32x32xbf16, #tpu.memory_space<vmem>>, vector<1x32x8xbf16>,
    } else {
    }
    return
  }
  func.func @transform_0(%arg0: i32, %arg1: i32, %arg2: i32) -> (i32, i32, i32) {
    %c0_i32 = arith.constant 0 : i32
    %c0_i32_0 = arith.constant 0 : i32
    return %arg0, %arg1, %c0_i32 : i32, i32, i32
  }
  func.func @transform_1(%arg0: i32, %arg1: i32, %arg2: i32) -> (i32, i32, i32) {
    %c0_i32 = arith.constant 0 : i32
    %c0_i32_0 = arith.constant 0 : i32
    return %arg0, %arg2, %c0_i32 : i32, i32, i32
  }
  func.func @transform_2(%arg0: i32, %arg1: i32, %arg2: i32) -> (i32, i32, i32) {
    %c0_i32 = arith.constant 0 : i32
    %c0_i32_0 = arith.constant 0 : i32
    return %arg0, %arg2, %c0_i32 : i32, i32, i32
  }
  func.func @transform_3(%arg0: i32, %arg1: i32, %arg2: i32) -> (i32, i32, i32) {
    %c0_i32 = arith.constant 0 : i32
    %c0_i32_0 = arith.constant 0 : i32
    return %arg0, %arg1, %c0_i32 : i32, i32, i32
  }
  func.func @transform_4(%arg0: i32, %arg1: i32, %arg2: i32) -> (i32, i32) {
    %c0_i32 = arith.constant 0 : i32
    %c0_i32_0 = arith.constant 0 : i32
    return %arg2, %c0_i32 : i32, i32
  }
  func.func @transform_5(%arg0: i32, %arg1: i32, %arg2: i32) -> (i32, i32, i32) {
    %c0_i32 = arith.constant 0 : i32
    %c0_i32_0 = arith.constant 0 : i32
    return %arg0, %arg1, %c0_i32 : i32, i32, i32
  }
}

</mosaic_0001>

<llo_original>
// kernel: attention_rel_pos_forward.5
$region0: #{attention_rel_pos_forward.5}
  #allocation0 [shape = 'u32[]', space=smem, size = 0x4, offset = 0x4, fixed_abs, tag = 'smem constant byte address 0x4 - core index']
  #allocation1 [shape = 'u32[144,128]{1,0:T(1,128)}', space=vmem, size = 0x12000, scoped, tag = 'internal scratch']
  %s0 = inlined_call_operand.vmem [shape: bf16[64,32], index: 0, kind: input, shape index: {}]
  %s1 = inlined_call_operand.vmem [shape: bf16[32,32], index: 1, kind: input, shape index: {}]
  %s2 = inlined_call_operand.vmem [shape: f32[1,32], index: 2, kind: input, shape index: {}]
  %s3 = inlined_call_operand.vmem [shape: bf16[64,32], index: 3, kind: output, shape index: {}]
  %s4 = sld [smem:[#allocation0]]
  $region22: #{attention_rel_pos_forward.5} parent=0
    _
  %s6 = ssub.s32 1, %s4
  %s7 = scalar_select 0, %s6, %s4
  // Predicated region
  $region2: #{attention_rel_pos_forward.5} parent=0 // pred_check
    _
  $region3: #{attention_rel_pos_forward.5} parent=0 // pred_check_branch
    %9 = sbr.rel (0) target = $region5
  $region4: #{attention_rel_pos_forward.5} parent=0 // pred_region
    _
  $region5: #{attention_rel_pos_forward.5} parent=0 // pred_fallthru
    _
  // Predicated region
  $region6: #{attention_rel_pos_forward.5} parent=0 // pred_check
    _
  $region7: #{attention_rel_pos_forward.5} parent=0 // pred_check_branch
    %11 = sbr.rel (0) target = $region9
  $region8: #{attention_rel_pos_forward.5} parent=0 // pred_region
    _
  $region9: #{attention_rel_pos_forward.5} parent=0 // pred_fallthru
    _
  // Predicated region
  $region10: #{attention_rel_pos_forward.5} parent=0 // pred_check
    _
  $region11: #{attention_rel_pos_forward.5} parent=0 // pred_check_branch
    %13 = sbr.rel (0) target = $region13
  $region12: #{attention_rel_pos_forward.5} parent=0 // pred_region
    _
  $region13: #{attention_rel_pos_forward.5} parent=0 // pred_fallthru
    _
  %v15 = vld [vmem:[%s0] sm:$0xf]
  %v16 = vld [vmem:[%s0 + $0x4] sm:$0xf]
  %v17 = vld [vmem:[%s0 + $0x8] sm:$0xf]
  %v18 = vld [vmem:[%s0 + $0xc] sm:$0xf]
  %v19 = vld [vmem:[%s0 + $0x10] sm:$0xf]
  %v20 = vld [vmem:[%s0 + $0x14] sm:$0xf]
  %v21 = vld [vmem:[%s0 + $0x18] sm:$0xf]
  %v22 = vld [vmem:[%s0 + $0x1c] sm:$0xf]
  %v23 = vld [vmem:[%s1] sm:$0xf]
  %v24 = vld [vmem:[%s1 + $0x4] sm:$0xf]
  %v25 = vld [vmem:[%s1 + $0x8] sm:$0xf]
  %v26 = vld [vmem:[%s1 + $0xc] sm:$0xf]
  %v27 = vld [vmem:[%s2] sm:$0x1]
  %v29 = vlaneseq
  %v30 = vshrl.u32 %v29, 7
  %v31 = vsub.s32 0, %v30
  %v32 = vrot.slane %v27, %v31
  %v42 = vunpack.c.l.b16 %v15
  %v43 = vunpack.c.l.b16 %v16
  %v44 = vunpack.c.l.b16 %v17
  %v45 = vunpack.c.l.b16 %v18
  %v46 = vunpack.c.l.b16 %v19
  %v47 = vunpack.c.l.b16 %v20
  %v48 = vunpack.c.l.b16 %v21
  %v49 = vunpack.c.l.b16 %v22
  %v50 = vpack.c.b16 %v43, %v42
  %v51 = vpack.c.b16 %v45, %v44
  %v52 = vpack.c.b16 %v47, %v46
  %v53 = vpack.c.b16 %v49, %v48
  %v58 = vunpack.c.l.b16 %v23
  %v59 = vunpack.c.l.b16 %v24
  %v60 = vunpack.c.l.b16 %v25
  %v61 = vunpack.c.l.b16 %v26
  %v62 = vpack.c.b16 %v59, %v58
  %v63 = vpack.c.b16 %v61, %v60
  %vm66 = vcmask 261120
  %v68 = vsel %vm66, %v50, 0
  %v71 = vsel %vm66, %v51, 0
  %v74 = vsel %vm66, %v52, 0
  %v77 = vsel %vm66, %v53, 0
  %79 = vmatprep.subr.bf16.mxu0 0
  %80 = vmatpush1.bf16.msra.mxu0 %v62
  %81 = vmatprep.subr.bf16.mxu0 0
  %82 = vmatpush1.bf16.msra.mxu0 %v63
  %83 = vmatprep.subr.bf16.mxu0 0
  %84 = vmatpush1.bf16.msra.mxu0 0
  %85 = vmatprep.subr.bf16.mxu0 0
  %86 = vmatpush1.bf16.msra.mxu0 0
  %87 = vmatprep.subr.bf16.mxu0 0
  %88 = vmatpush1.bf16.msra.mxu0 0
  %89 = vmatprep.subr.bf16.mxu0 0
  %90 = vmatpush1.bf16.msra.mxu0 0
  %91 = vmatprep.subr.bf16.mxu0 0
  %92 = vmatpush1.bf16.msra.mxu0 0
  %93 = vmatprep.subr.bf16.mxu0 0
  %94 = vmatpush1.bf16.msra.mxu0 0
  %95 = vmatprep.subr.bf16.mxu0 0
  %96 = vmatpush1.bf16.msra.mxu0 0
  %97 = vmatprep.subr.bf16.mxu0 0
  %98 = vmatpush1.bf16.msra.mxu0 0
  %99 = vmatprep.subr.bf16.mxu0 0
  %100 = vmatpush1.bf16.msra.mxu0 0
  %101 = vmatprep.subr.bf16.mxu0 0
  %102 = vmatpush1.bf16.msra.mxu0 0
  %103 = vmatprep.subr.bf16.mxu0 0
  %104 = vmatpush1.bf16.msra.mxu0 0
  %105 = vmatprep.subr.bf16.mxu0 0
  %106 = vmatpush1.bf16.msra.mxu0 0
  %107 = vmatprep.subr.bf16.mxu0 0
  %108 = vmatpush1.bf16.msra.mxu0 0
  %109 = vmatprep.subr.bf16.mxu0 0
  %110 = vmatpush1.bf16.msra.mxu0 0
  %111 = vmatprep.mubr.bf16.mxu0 0
  %112 = vmatmul.mubr.bf16.gmra.mrb[0].mxu0 %v68
  %v113 = vpop.f32.mrb[0].mxu0
  %v114 = vadd.f32 %v32, %v113
  %v115 = vpop.f32.mrb[0].mxu0
  %v116 = vpop.f32.mrb[0].mxu0
  %v117 = vadd.f32 %v32, %v116
  %v118 = vpop.f32.mrb[0].mxu0
  %119 = vmatprep.mubr.bf16.mxu0 0
  %120 = vmatmul.mubr.bf16.gmra.mrb[0].mxu0 %v71
  %v121 = vpop.f32.mrb[0].mxu0
  %v122 = vadd.f32 %v32, %v121
  %v123 = vpop.f32.mrb[0].mxu0
  %v124 = vpop.f32.mrb[0].mxu0
  %v125 = vadd.f32 %v32, %v124
  %v126 = vpop.f32.mrb[0].mxu0
  %127 = vmatprep.mubr.bf16.mxu0 0
  %128 = vmatmul.mubr.bf16.gmra.mrb[0].mxu0 %v74
  %v129 = vpop.f32.mrb[0].mxu0
  %v130 = vadd.f32 %v32, %v129
  %v131 = vpop.f32.mrb[0].mxu0
  %v132 = vpop.f32.mrb[0].mxu0
  %v133 = vadd.f32 %v32, %v132
  %v134 = vpop.f32.mrb[0].mxu0
  %135 = vmatprep.mubr.bf16.mxu0 0
  %136 = vmatmul.mubr.bf16.gmra.mrb[0].mxu0 %v77
  %v137 = vpop.f32.mrb[0].mxu0
  %v138 = vadd.f32 %v32, %v137
  %v139 = vpop.f32.mrb[0].mxu0
  %v140 = vpop.f32.mrb[0].mxu0
  %v141 = vadd.f32 %v32, %v140
  %v142 = vpop.f32.mrb[0].mxu0
  %143 = vdwg.mxu0
  %v144 = vpack.c.bf16 %v117, %v114
  %v145 = vpack.c.bf16 %v125, %v122
  %v146 = vpack.c.bf16 %v133, %v130
  %v147 = vpack.c.bf16 %v141, %v138
  %v152 = vunpack.c.l.b16 %v144
  %v153 = vunpack.c.h.b16 %v144
  %v154 = vunpack.c.l.b16 %v145
  %v155 = vunpack.c.h.b16 %v145
  %v156 = vunpack.c.l.b16 %v146
  %v157 = vunpack.c.h.b16 %v146
  %v158 = vunpack.c.l.b16 %v147
  %v159 = vunpack.c.h.b16 %v147
  %v160 = vpack.c.b16 %v152, %v152
  %v161 = vpack.c.b16 %v153, %v153
  %v162 = vpack.c.b16 %v154, %v154
  %v163 = vpack.c.b16 %v155, %v155
  %v164 = vpack.c.b16 %v156, %v156
  %v165 = vpack.c.b16 %v157, %v157
  %v166 = vpack.c.b16 %v158, %v158
  %v167 = vpack.c.b16 %v159, %v159
  %vm176 = vcmask 257024
  %177 = vst.msk [vmem:[%s3] sm:$0xf] %vm176, %v160
  %178 = vst.msk [vmem:[%s3 + $0x4] sm:$0xf] %vm176, %v161
  %179 = vst.msk [vmem:[%s3 + $0x8] sm:$0xf] %vm176, %v162
  %180 = vst.msk [vmem:[%s3 + $0xc] sm:$0xf] %vm176, %v163
  %181 = vst.msk [vmem:[%s3 + $0x10] sm:$0xf] %vm176, %v164
  %182 = vst.msk [vmem:[%s3 + $0x14] sm:$0xf] %vm176, %v165
  %183 = vst.msk [vmem:[%s3 + $0x18] sm:$0xf] %vm176, %v166
  %184 = vst.msk [vmem:[%s3 + $0x1c] sm:$0xf] %vm176, %v167
  // Predicated region
  $region14: #{attention_rel_pos_forward.5} parent=0 // pred_check
    _
  $region15: #{attention_rel_pos_forward.5} parent=0 // pred_check_branch
    %186 = sbr.rel (0) target = $region17
  $region16: #{attention_rel_pos_forward.5} parent=0 // pred_region
    _
  $region17: #{attention_rel_pos_forward.5} parent=0 // pred_fallthru
    _
  // Predicated region
  $region18: #{attention_rel_pos_forward.5} parent=0 // pred_check
    _
  $region19: #{attention_rel_pos_forward.5} parent=0 // pred_check_branch
    %188 = sbr.rel (0) target = $region21
  $region20: #{attention_rel_pos_forward.5} parent=0 // pred_region
    _
  $region21: #{attention_rel_pos_forward.5} parent=0 // pred_fallthru
    _

// kernel: attention_rel_pos_forward.9
$region0: #{attention_rel_pos_forward.9}
  #allocation0 [shape = 'u32[]', space=smem, size = 0x4, offset = 0x4, fixed_abs, tag = 'smem constant byte address 0x4 - core index']
  #allocation1 [shape = 'u32[144,128]{1,0:T(1,128)}', space=vmem, size = 0x12000, scoped, tag = 'internal scratch']
  %s0 = inlined_call_operand.vmem [shape: bf16[64,32], index: 0, kind: input, shape index: {}]
  %s1 = inlined_call_operand.vmem [shape: bf16[32,32], index: 1, kind: input, shape index: {}]
  %s2 = inlined_call_operand.vmem [shape: f32[1,32], index: 2, kind: input, shape index: {}]
  %s3 = inlined_call_operand.hbm [shape: f32[64,32], index: 3, kind: output, shape index: {}]
  %s4 = sld [smem:[#allocation0]]
  $region22: #{attention_rel_pos_forward.9} parent=0
    _
  %s6 = ssub.s32 1, %s4
  %s7 = scalar_select 0, %s6, %s4
  $region1: #{attention_rel_pos_forward.9} parent=0
    #allocation2 [shape = 'u8[32768]{0}', space=vmem, size = 0x8000, scoped, tag = 'output window, operand 0, single buffered']
    #allocation3 [shape = 's32[1]{0}', space=sflag, size = 0x4, scoped, tag = 'scoped memory for attention_rel_pos_forward.9']
    %8 = vsyncpa [#allocation3], 0
    // Predicated region
    $region2: #{attention_rel_pos_forward.9} parent=1 // pred_check
      _
    $region3: #{attention_rel_pos_forward.9} parent=1 // pred_check_branch
      %10 = sbr.rel (0) target = $region5
    $region4: #{attention_rel_pos_forward.9} parent=1 // pred_region
      _
    $region5: #{attention_rel_pos_forward.9} parent=1 // pred_fallthru
      _
    // Predicated region
    $region6: #{attention_rel_pos_forward.9} parent=1 // pred_check
      _
    $region7: #{attention_rel_pos_forward.9} parent=1 // pred_check_branch
      %12 = sbr.rel (0) target = $region9
    $region8: #{attention_rel_pos_forward.9} parent=1 // pred_region
      _
    $region9: #{attention_rel_pos_forward.9} parent=1 // pred_fallthru
      _
    // Predicated region
    $region10: #{attention_rel_pos_forward.9} parent=1 // pred_check
      _
    $region11: #{attention_rel_pos_forward.9} parent=1 // pred_check_branch
      %14 = sbr.rel (0) target = $region13
    $region12: #{attention_rel_pos_forward.9} parent=1 // pred_region
      _
    $region13: #{attention_rel_pos_forward.9} parent=1 // pred_fallthru
      _
    %v16 = vld [vmem:[%s0] sm:$0xf]
    %v17 = vld [vmem:[%s0 + $0x4] sm:$0xf]
    %v18 = vld [vmem:[%s0 + $0x8] sm:$0xf]
    %v19 = vld [vmem:[%s0 + $0xc] sm:$0xf]
    %v20 = vld [vmem:[%s0 + $0x10] sm:$0xf]
    %v21 = vld [vmem:[%s0 + $0x14] sm:$0xf]
    %v22 = vld [vmem:[%s0 + $0x18] sm:$0xf]
    %v23 = vld [vmem:[%s0 + $0x1c] sm:$0xf]
    %v24 = vld [vmem:[%s1] sm:$0xf]
    %v25 = vld [vmem:[%s1 + $0x4] sm:$0xf]
    %v26 = vld [vmem:[%s1 + $0x8] sm:$0xf]
    %v27 = vld [vmem:[%s1 + $0xc] sm:$0xf]
    %v28 = vld [vmem:[%s2] sm:$0x1]
    %v30 = vlaneseq
    %v31 = vshrl.u32 %v30, 7
    %v32 = vsub.s32 0, %v31
    %v33 = vrot.slane %v28, %v32
    %v43 = vunpack.c.l.b16 %v16
    %v44 = vunpack.c.l.b16 %v17
    %v45 = vunpack.c.l.b16 %v18
    %v46 = vunpack.c.l.b16 %v19
    %v47 = vunpack.c.l.b16 %v20
    %v48 = vunpack.c.l.b16 %v21
    %v49 = vunpack.c.l.b16 %v22
    %v50 = vunpack.c.l.b16 %v23
    %v51 = vpack.c.b16 %v44, %v43
    %v52 = vpack.c.b16 %v46, %v45
    %v53 = vpack.c.b16 %v48, %v47
    %v54 = vpack.c.b16 %v50, %v49
    %v59 = vunpack.c.l.b16 %v24
    %v60 = vunpack.c.l.b16 %v25
    %v61 = vunpack.c.l.b16 %v26
    %v62 = vunpack.c.l.b16 %v27
    %v63 = vpack.c.b16 %v60, %v59
    %v64 = vpack.c.b16 %v62, %v61
    %vm67 = vcmask 261120
    %v69 = vsel %vm67, %v51, 0
    %v72 = vsel %vm67, %v52, 0
    %v75 = vsel %vm67, %v53, 0
    %v78 = vsel %vm67, %v54, 0
    %80 = vmatprep.subr.bf16.mxu0 0
    %81 = vmatpush1.bf16.msra.mxu0 %v63
    %82 = vmatprep.subr.bf16.mxu0 0
    %83 = vmatpush1.bf16.msra.mxu0 %v64
    %84 = vmatprep.subr.bf16.mxu0 0
    %85 = vmatpush1.bf16.msra.mxu0 0
    %86 = vmatprep.subr.bf16.mxu0 0
    %87 = vmatpush1.bf16.msra.mxu0 0
    %88 = vmatprep.subr.bf16.mxu0 0
    %89 = vmatpush1.bf16.msra.mxu0 0
    %90 = vmatprep.subr.bf16.mxu0 0
    %91 = vmatpush1.bf16.msra.mxu0 0
    %92 = vmatprep.subr.bf16.mxu0 0
    %93 = vmatpush1.bf16.msra.mxu0 0
    %94 = vmatprep.subr.bf16.mxu0 0
    %95 = vmatpush1.bf16.msra.mxu0 0
    %96 = vmatprep.subr.bf16.mxu0 0
    %97 = vmatpush1.bf16.msra.mxu0 0
    %98 = vmatprep.subr.bf16.mxu0 0
    %99 = vmatpush1.bf16.msra.mxu0 0
    %100 = vmatprep.subr.bf16.mxu0 0
    %101 = vmatpush1.bf16.msra.mxu0 0
    %102 = vmatprep.subr.bf16.mxu0 0
    %103 = vmatpush1.bf16.msra.mxu0 0
    %104 = vmatprep.subr.bf16.mxu0 0
    %105 = vmatpush1.bf16.msra.mxu0 0
    %106 = vmatprep.subr.bf16.mxu0 0
    %107 = vmatpush1.bf16.msra.mxu0 0
    %108 = vmatprep.subr.bf16.mxu0 0
    %109 = vmatpush1.bf16.msra.mxu0 0
    %110 = vmatprep.subr.bf16.mxu0 0
    %111 = vmatpush1.bf16.msra.mxu0 0
    %112 = vmatprep.mubr.bf16.mxu0 0
    %113 = vmatmul.mubr.bf16.gmra.mrb[0].mxu0 %v69
    %v114 = vpop.f32.mrb[0].mxu0
    %v115 = vadd.f32 %v33, %v114
    %v116 = vpop.f32.mrb[0].mxu0
    %v117 = vpop.f32.mrb[0].mxu0
    %v118 = vadd.f32 %v33, %v117
    %v119 = vpop.f32.mrb[0].mxu0
    %120 = vmatprep.mubr.bf16.mxu0 0
    %121 = vmatmul.mubr.bf16.gmra.mrb[0].mxu0 %v72
    %v122 = vpop.f32.mrb[0].mxu0
    %v123 = vadd.f32 %v33, %v122
    %v124 = vpop.f32.mrb[0].mxu0
    %v125 = vpop.f32.mrb[0].mxu0
    %v126 = vadd.f32 %v33, %v125
    %v127 = vpop.f32.mrb[0].mxu0
    %128 = vmatprep.mubr.bf16.mxu0 0
    %129 = vmatmul.mubr.bf16.gmra.mrb[0].mxu0 %v75
    %v130 = vpop.f32.mrb[0].mxu0
    %v131 = vadd.f32 %v33, %v130
    %v132 = vpop.f32.mrb[0].mxu0
    %v133 = vpop.f32.mrb[0].mxu0
    %v134 = vadd.f32 %v33, %v133
    %v135 = vpop.f32.mrb[0].mxu0
    %136 = vmatprep.mubr.bf16.mxu0 0
    %137 = vmatmul.mubr.bf16.gmra.mrb[0].mxu0 %v78
    %v138 = vpop.f32.mrb[0].mxu0
    %v139 = vadd.f32 %v33, %v138
    %v140 = vpop.f32.mrb[0].mxu0
    %v141 = vpop.f32.mrb[0].mxu0
    %v142 = vadd.f32 %v33, %v141
    %v143 = vpop.f32.mrb[0].mxu0
    %144 = vdwg.mxu0
    %145 = vst.msk [vmem:[#allocation2] sm:$0xff] %vm67, %v115
    %146 = vst.msk [vmem:[#allocation2 + $0x8] sm:$0xff] %vm67, %v118
    %147 = vst.msk [vmem:[#allocation2 + $0x10] sm:$0xff] %vm67, %v123
    %148 = vst.msk [vmem:[#allocation2 + $0x18] sm:$0xff] %vm67, %v126
    %149 = vst.msk [vmem:[#allocation2 + $0x20] sm:$0xff] %vm67, %v131
    %150 = vst.msk [vmem:[#allocation2 + $0x28] sm:$0xff] %vm67, %v134
    %151 = vst.msk [vmem:[#allocation2 + $0x30] sm:$0xff] %vm67, %v139
    %152 = vst.msk [vmem:[#allocation2 + $0x38] sm:$0xff] %vm67, %v142
    // Predicated region
    $region14: #{attention_rel_pos_forward.9} parent=1 // pred_check
      _
    $region15: #{attention_rel_pos_forward.9} parent=1 // pred_check_branch
      %154 = sbr.rel (0) target = $region17
    $region16: #{attention_rel_pos_forward.9} parent=1 // pred_region
      %s156 = ssub.s32 1024, 1024
      %157 = vsyncadd [#allocation3], %s156
      %s158 = sshll.u32 [#allocation2], 4
      %s159 = int_to_ptr.vmem [resolvable:$true] %s158
      %164 = dma.vmem_to_hbm [thread:$0]  %s159, 1024, %s3, [#allocation3], 128, 128, 8
    $region17: #{attention_rel_pos_forward.9} parent=1 // pred_fallthru
      _
    // Predicated region
    $region18: #{attention_rel_pos_forward.9} parent=1 // pred_check
      _
    $region19: #{attention_rel_pos_forward.9} parent=1 // pred_check_branch
      %166 = sbr.rel (0) target = $region21
    $region20: #{attention_rel_pos_forward.9} parent=1 // pred_region
      %167 = dma.done [#allocation3], 1024
    $region21: #{attention_rel_pos_forward.9} parent=1 // pred_fallthru
      _
    %168 = vsyncpa [#allocation3], 1

// kernel: attention_rel_pos_forward.8
$region0: #{attention_rel_pos_forward.8}
  #allocation0 [shape = 'u32[]', space=smem, size = 0x4, offset = 0x4, fixed_abs, tag = 'smem constant byte address 0x4 - core index']
  #allocation1 [shape = 'u32[144,128]{1,0:T(1,128)}', space=vmem, size = 0x12000, scoped, tag = 'internal scratch']
  #allocation2 [shape = 'f32[4,32,1]{2,1,0:T(8,128)}', space=vmem, size = 0x10000, scoped, tag = 'scratch operand']
  #allocation3 [shape = 'f32[4,32,1]{2,1,0:T(8,128)}', space=vmem, size = 0x10000, scoped, tag = 'scratch operand']
  #allocation4 [shape = 'f32[4,32,8]{2,1,0:T(8,128)}', space=vmem, size = 0x10000, scoped, tag = 'scratch operand']
  %s0 = inlined_call_operand.vmem [shape: bf16[2,32,32], index: 0, kind: input, shape index: {}]
  %s1 = inlined_call_operand.vmem [shape: bf16[2,32,32], index: 1, kind: input, shape index: {}]
  %s2 = inlined_call_operand.vmem [shape: bf16[2,32,32], index: 2, kind: input, shape index: {}]
  %s3 = inlined_call_operand.vmem [shape: bf16[2,32,512], index: 3, kind: input, shape index: {}]
  %s4 = inlined_call_operand.vmem [shape: bf16[32,128], index: 4, kind: input, shape index: {}]
  %s5 = inlined_call_operand.vmem [shape: bf16[2,32,32], index: 5, kind: output, shape index: {}]
  %s6 = sld [smem:[#allocation0]]
  $region61: #{attention_rel_pos_forward.8} parent=0
    _
  %s8 = ssub.s32 1, %s6
  %s9 = scalar_select 0, %s8, %s6
  loop: start=0, step=1, limit=4
  $region2: #{attention_rel_pos_forward.8} parent=0 // loop_pre_header
    _
  $region3: #{attention_rel_pos_forward.8} parent=0 // loop_header
    %s11 = sphi 0, %s15
    %p12 = scmp.ge.s32.totalorder %s11, 4
    %s18 = sphi 0, %s37
    %s19 = sphi 0, %s33
    %s20 = sphi 0, %s29
    %s21 = sphi 0, %s18
    %s22 = sphi 0, %s19
    %s23 = sphi 0, %s20
    %s24 = sphi 0, %s21
    %s25 = sphi 0, %s22
    %s26 = sphi 0, %s23
    %s42 = sphi 0, %s44
    %s45 = sphi 0, %s42
    %s46 = sphi 0, %s45
    %s62 = sphi 0, %s46
    %s70 = sphi 0, %s72
    %s73 = sphi 0, %s70
    %s74 = sphi 0, %s73
    %s90 = sphi 0, %s74
    %s98 = sphi 0, %s100
    %s101 = sphi 0, %s98
    %s102 = sphi 0, %s101
    %s118 = sphi 0, %s102
    %s126 = sphi 0, %s128
    %s129 = sphi 0, %s126
    %s130 = sphi 0, %s129
    %s146 = sphi 0, %s130
    %s152 = sphi 0, %s154
    %s155 = sphi 0, %s152
    %s156 = sphi 0, %s155
    %s172 = sphi 0, %s156
    %s180 = sphi 0, %s182
    %s183 = sphi 0, %s180
    %s184 = sphi 0, %s183
    %s200 = sphi 0, %s184
  $region4: #{attention_rel_pos_forward.8} parent=0 // loop_header_branch
    %14 = sbr.rel (%p12) target = $region8
  $region5: #{attention_rel_pos_forward.8} parent=0 // loop_body
    %s16 = ssub.s32 %s11, 1
    %s17 = ssub.s32 %s11, 2
    %s27 = sadd.s32 1, %s20
    %p28 = scmp.ge.s32.totalorder %s27, 1
    %s29 = scalar_select %p28, 0, %s27
    %s30 = sadd.s32 1, %s19
    %s31 = scalar_select %p28, %s30, %s19
    %p32 = scmp.ge.s32.totalorder %s31, 1
    %s33 = scalar_select %p32, 0, %s31
    %s34 = sadd.s32 1, %s18
    %s35 = scalar_select %p32, %s34, %s18
    %p36 = scmp.ge.s32.totalorder %s35, 2
    %s37 = scalar_select %p36, 0, %s35
    %s38 = ssub.s32 %s18, %s37
    %s39 = ssub.s32 %s19, %s33
    %s40 = sor.u32 %s38, %s39
    %p41 = scmp.eq.s32.totalorder %s40, 0
    %s43 = sadd.s32 %s42, 1
    %s44 = scalar_select %p41, %s42, %s43
    %p47 = pneg %p41
    %p48 = scmp.eq.s32.totalorder %s11, 1
    %p49 = por %p47, %p48
    %p50 = scmp.ne.s32.totalorder %s42, %s45
    %p51 = scmp.eq.s32.totalorder %s11, 0
    %p52 = por %p50, %p51
    %p53 = scmp.ne.s32.totalorder %s42, %s45
    %p54 = scmp.eq.s32.totalorder %s16, 1
    %p55 = por %p53, %p54
    %p56 = scmp.ne.s32.totalorder %s45, %s46
    %p57 = scmp.eq.s32.totalorder %s16, 0
    %p58 = por %p56, %p57
    %p59 = scmp.ne.s32.totalorder %s45, %s46
    %p60 = scmp.eq.s32.totalorder %s17, 1
    %p61 = por %p59, %p60
    %p63 = scmp.ne.s32.totalorder %s46, %s62
    %p64 = scmp.eq.s32.totalorder %s17, 0
    %p65 = por %p63, %p64
    %s66 = ssub.s32 %s18, %s37
    %s67 = ssub.s32 %s20, %s29
    %s68 = sor.u32 %s66, %s67
    %p69 = scmp.eq.s32.totalorder %s68, 0
    %s71 = sadd.s32 %s70, 1
    %s72 = scalar_select %p69, %s70, %s71
    %p75 = pneg %p69
    %p76 = scmp.eq.s32.totalorder %s11, 1
    %p77 = por %p75, %p76
    %p78 = scmp.ne.s32.totalorder %s70, %s73
    %p79 = scmp.eq.s32.totalorder %s11, 0
    %p80 = por %p78, %p79
    %p81 = scmp.ne.s32.totalorder %s70, %s73
    %p82 = scmp.eq.s32.totalorder %s16, 1
    %p83 = por %p81, %p82
    %p84 = scmp.ne.s32.totalorder %s73, %s74
    %p85 = scmp.eq.s32.totalorder %s16, 0
    %p86 = por %p84, %p85
    %p87 = scmp.ne.s32.totalorder %s73, %s74
    %p88 = scmp.eq.s32.totalorder %s17, 1
    %p89 = por %p87, %p88
    %p91 = scmp.ne.s32.totalorder %s74, %s90
    %p92 = scmp.eq.s32.totalorder %s17, 0
    %p93 = por %p91, %p92
    %s94 = ssub.s32 %s18, %s37
    %s95 = ssub.s32 %s20, %s29
    %s96 = sor.u32 %s94, %s95
    %p97 = scmp.eq.s32.totalorder %s96, 0
    %s99 = sadd.s32 %s98, 1
    %s100 = scalar_select %p97, %s98, %s99
    %p103 = pneg %p97
    %p104 = scmp.eq.s32.totalorder %s11, 1
    %p105 = por %p103, %p104
    %p106 = scmp.ne.s32.totalorder %s98, %s101
    %p107 = scmp.eq.s32.totalorder %s11, 0
    %p108 = por %p106, %p107
    %p109 = scmp.ne.s32.totalorder %s98, %s101
    %p110 = scmp.eq.s32.totalorder %s16, 1
    %p111 = por %p109, %p110
    %p112 = scmp.ne.s32.totalorder %s101, %s102
    %p113 = scmp.eq.s32.totalorder %s16, 0
    %p114 = por %p112, %p113
    %p115 = scmp.ne.s32.totalorder %s101, %s102
    %p116 = scmp.eq.s32.totalorder %s17, 1
    %p117 = por %p115, %p116
    %p119 = scmp.ne.s32.totalorder %s102, %s118
    %p120 = scmp.eq.s32.totalorder %s17, 0
    %p121 = por %p119, %p120
    %s122 = ssub.s32 %s18, %s37
    %s123 = ssub.s32 %s19, %s33
    %s124 = sor.u32 %s122, %s123
    %p125 = scmp.eq.s32.totalorder %s124, 0
    %s127 = sadd.s32 %s126, 1
    %s128 = scalar_select %p125, %s126, %s127
    %p131 = pneg %p125
    %p132 = scmp.eq.s32.totalorder %s11, 1
    %p133 = por %p131, %p132
    %p134 = scmp.ne.s32.totalorder %s126, %s129
    %p135 = scmp.eq.s32.totalorder %s11, 0
    %p136 = por %p134, %p135
    %p137 = scmp.ne.s32.totalorder %s126, %s129
    %p138 = scmp.eq.s32.totalorder %s16, 1
    %p139 = por %p137, %p138
    %p140 = scmp.ne.s32.totalorder %s129, %s130
    %p141 = scmp.eq.s32.totalorder %s16, 0
    %p142 = por %p140, %p141
    %p143 = scmp.ne.s32.totalorder %s129, %s130
    %p144 = scmp.eq.s32.totalorder %s17, 1
    %p145 = por %p143, %p144
    %p147 = scmp.ne.s32.totalorder %s130, %s146
    %p148 = scmp.eq.s32.totalorder %s17, 0
    %p149 = por %p147, %p148
    %s150 = ssub.s32 %s20, %s29
    %p151 = scmp.eq.s32.totalorder %s150, 0
    %s153 = sadd.s32 %s152, 1
    %s154 = scalar_select %p151, %s152, %s153
    %p157 = pneg %p151
    %p158 = scmp.eq.s32.totalorder %s11, 1
    %p159 = por %p157, %p158
    %p160 = scmp.ne.s32.totalorder %s152, %s155
    %p161 = scmp.eq.s32.totalorder %s11, 0
    %p162 = por %p160, %p161
    %p163 = scmp.ne.s32.totalorder %s152, %s155
    %p164 = scmp.eq.s32.totalorder %s16, 1
    %p165 = por %p163, %p164
    %p166 = scmp.ne.s32.totalorder %s155, %s156
    %p167 = scmp.eq.s32.totalorder %s16, 0
    %p168 = por %p166, %p167
    %p169 = scmp.ne.s32.totalorder %s155, %s156
    %p170 = scmp.eq.s32.totalorder %s17, 1
    %p171 = por %p169, %p170
    %p173 = scmp.ne.s32.totalorder %s156, %s172
    %p174 = scmp.eq.s32.totalorder %s17, 0
    %p175 = por %p173, %p174
    %s176 = ssub.s32 %s18, %s37
    %s177 = ssub.s32 %s19, %s33
    %s178 = sor.u32 %s176, %s177
    %p179 = scmp.eq.s32.totalorder %s178, 0
    %s181 = sadd.s32 %s180, 1
    %s182 = scalar_select %p179, %s180, %s181
    %p185 = pneg %p179
    %p186 = scmp.eq.s32.totalorder %s11, 1
    %p187 = por %p185, %p186
    %p188 = scmp.ne.s32.totalorder %s180, %s183
    %p189 = scmp.eq.s32.totalorder %s11, 0
    %p190 = por %p188, %p189
    %p191 = scmp.ne.s32.totalorder %s180, %s183
    %p192 = scmp.eq.s32.totalorder %s16, 1
    %p193 = por %p191, %p192
    %p194 = scmp.ne.s32.totalorder %s183, %s184
    %p195 = scmp.eq.s32.totalorder %s16, 0
    %p196 = por %p194, %p195
    %p197 = scmp.ne.s32.totalorder %s183, %s184
    %p198 = scmp.eq.s32.totalorder %s17, 1
    %p199 = por %p197, %p198
    %p201 = scmp.ne.s32.totalorder %s184, %s200
    %p202 = scmp.eq.s32.totalorder %s17, 0
    %p203 = por %p201, %p202
    %p204 = scmp.le.s32.totalorder 1, %s11
    %p205 = scmp.lt.s32.totalorder %s11, 3
    %p206 = pnand %p204, %p205
    %p207 = pneg %p206
    // Predicated region
    $region9: #{attention_rel_pos_forward.8} parent=5 // pred_check
      _
    $region10: #{attention_rel_pos_forward.8} parent=5 // pred_check_branch
      %209 = sbr.rel (%p206) target = $region12
    $region11: #{attention_rel_pos_forward.8} parent=5 // pred_region
      %s210 = ssub.s32 %s11, 1
      // Predicated region
      $region13: #{attention_rel_pos_forward.8} parent=11 // pred_check
        %p211 = pneg %p168
      $region14: #{attention_rel_pos_forward.8} parent=11 // pred_check_branch
        %213 = sbr.rel (%p211) target = $region16
      $region15: #{attention_rel_pos_forward.8} parent=11 // pred_region
        %s214 = smul.u32 4, %s23
        %p215 = scmp.lt.s32.totalorder %s214, 3
        %s216 = scalar_select %p215, %s214, 3
        %s217 = smul.addr %s216, 4
        %s218 = scalar_lea.vmem %s4, %s217
        %s219 = smul.u32 4, %s23
      $region16: #{attention_rel_pos_forward.8} parent=11 // pred_fallthru
        _
    $region12: #{attention_rel_pos_forward.8} parent=5 // pred_fallthru
      _
    %p220 = scmp.lt.s32.totalorder %s11, 2
    // Predicated region
    $region17: #{attention_rel_pos_forward.8} parent=5 // pred_check
      %p221 = pneg %p220
    $region18: #{attention_rel_pos_forward.8} parent=5 // pred_check_branch
      %223 = sbr.rel (%p221) target = $region20
    $region19: #{attention_rel_pos_forward.8} parent=5 // pred_region
      // Predicated region
      $region21: #{attention_rel_pos_forward.8} parent=19 // pred_check
        %p224 = pneg %p52
      $region22: #{attention_rel_pos_forward.8} parent=19 // pred_check_branch
        %226 = sbr.rel (%p224) target = $region24
      $region23: #{attention_rel_pos_forward.8} parent=19 // pred_region
        %s227 = smul.u32 4, %s19
        %p228 = scmp.lt.s32.totalorder %s18, 1
        %s229 = scalar_select %p228, %s18, 1
        %p230 = scmp.lt.s32.totalorder %s227, 3
        %s231 = scalar_select %p230, %s227, 3
        %s232 = smul.addr %s229, 4
        %s233 = sadd.s32 %s231, %s232
        %s234 = smul.addr %s233, 4
        %s235 = scalar_lea.vmem %s0, %s234
        %s236 = smul.u32 4, %s19
      $region24: #{attention_rel_pos_forward.8} parent=19 // pred_fallthru
        _
      // Predicated region
      $region25: #{attention_rel_pos_forward.8} parent=19 // pred_check
        %p237 = pneg %p80
      $region26: #{attention_rel_pos_forward.8} parent=19 // pred_check_branch
        %239 = sbr.rel (%p237) target = $region28
      $region27: #{attention_rel_pos_forward.8} parent=19 // pred_region
        %s240 = smul.u32 4, %s20
        %p241 = scmp.lt.s32.totalorder %s18, 1
        %s242 = scalar_select %p241, %s18, 1
        %p243 = scmp.lt.s32.totalorder %s240, 3
        %s244 = scalar_select %p243, %s240, 3
        %s245 = smul.addr %s242, 4
        %s246 = sadd.s32 %s244, %s245
        %s247 = smul.addr %s246, 4
        %s248 = scalar_lea.vmem %s1, %s247
        %s249 = smul.u32 4, %s20
      $region28: #{attention_rel_pos_forward.8} parent=19 // pred_fallthru
        _
      // Predicated region
      $region29: #{attention_rel_pos_forward.8} parent=19 // pred_check
        %p250 = pneg %p108
      $region30: #{attention_rel_pos_forward.8} parent=19 // pred_check_branch
        %252 = sbr.rel (%p250) target = $region32
      $region31: #{attention_rel_pos_forward.8} parent=19 // pred_region
        %s253 = smul.u32 4, %s20
        %p254 = scmp.lt.s32.totalorder %s18, 1
        %s255 = scalar_select %p254, %s18, 1
        %p256 = scmp.lt.s32.totalorder %s253, 3
        %s257 = scalar_select %p256, %s253, 3
        %s258 = smul.addr %s255, 4
        %s259 = sadd.s32 %s257, %s258
        %s260 = smul.addr %s259, 4
        %s261 = scalar_lea.vmem %s2, %s260
        %s262 = smul.u32 4, %s20
      $region32: #{attention_rel_pos_forward.8} parent=19 // pred_fallthru
        _
      // Predicated region
      $region33: #{attention_rel_pos_forward.8} parent=19 // pred_check
        %p263 = pneg %p136
      $region34: #{attention_rel_pos_forward.8} parent=19 // pred_check_branch
        %265 = sbr.rel (%p263) target = $region36
      $region35: #{attention_rel_pos_forward.8} parent=19 // pred_region
        %s266 = smul.u32 4, %s19
        %p267 = scmp.lt.s32.totalorder %s18, 1
        %s268 = scalar_select %p267, %s18, 1
        %p269 = scmp.lt.s32.totalorder %s266, 3
        %s270 = scalar_select %p269, %s266, 3
        %s271 = smul.addr %s270, 4
        %s272 = smul.addr %s268, 16
        %s273 = sadd.s32 %s271, %s272
        %s274 = smul.addr %s273, 4
        %s275 = scalar_lea.vmem %s3, %s274
        %s276 = smul.u32 4, %s19
      $region36: #{attention_rel_pos_forward.8} parent=19 // pred_fallthru
        _
    $region20: #{attention_rel_pos_forward.8} parent=5 // pred_fallthru
      _
    %p277 = scmp.le.s32.totalorder 1, %s11
    %p278 = scmp.lt.s32.totalorder %s11, 3
    %p279 = pnand %p277, %p278
    %p280 = pneg %p279
    // Predicated region
    $region37: #{attention_rel_pos_forward.8} parent=5 // pred_check
      _
    $region38: #{attention_rel_pos_forward.8} parent=5 // pred_check_branch
      %282 = sbr.rel (%p279) target = $region40
    $region39: #{attention_rel_pos_forward.8} parent=5 // pred_region
      %s283 = ssub.s32 %s11, 1
      %s284 = smul.u32 4, %s22
      %p285 = scmp.lt.s32.totalorder %s21, 1
      %s286 = scalar_select %p285, %s21, 1
      %p287 = scmp.lt.s32.totalorder %s284, 3
      %s288 = scalar_select %p287, %s284, 3
      %s289 = smul.addr %s286, 4
      %s290 = sadd.s32 %s288, %s289
      %s291 = smul.addr %s290, 4
      %s292 = scalar_lea.vmem %s0, %s291
      %p293 = pneg %p58
      %p294 = pneg %p55
      %s295 = smul.u32 4, %s23
      %p296 = scmp.lt.s32.totalorder %s21, 1
      %s297 = scalar_select %p296, %s21, 1
      %p298 = scmp.lt.s32.totalorder %s295, 3
      %s299 = scalar_select %p298, %s295, 3
      %s300 = smul.addr %s297, 4
      %s301 = sadd.s32 %s299, %s300
      %s302 = smul.addr %s301, 4
      %s303 = scalar_lea.vmem %s1, %s302
      %p304 = pneg %p86
      %p305 = pneg %p83
      %s306 = smul.u32 4, %s23
      %p307 = scmp.lt.s32.totalorder %s21, 1
      %s308 = scalar_select %p307, %s21, 1
      %p309 = scmp.lt.s32.totalorder %s306, 3
      %s310 = scalar_select %p309, %s306, 3
      %s311 = smul.addr %s308, 4
      %s312 = sadd.s32 %s310, %s311
      %s313 = smul.addr %s312, 4
      %s314 = scalar_lea.vmem %s2, %s313
      %p315 = pneg %p114
      %p316 = pneg %p111
      %s317 = smul.u32 4, %s22
      %p318 = scmp.lt.s32.totalorder %s21, 1
      %s319 = scalar_select %p318, %s21, 1
      %p320 = scmp.lt.s32.totalorder %s317, 3
      %s321 = scalar_select %p320, %s317, 3
      %s322 = smul.addr %s321, 4
      %s323 = smul.addr %s319, 16
      %s324 = sadd.s32 %s322, %s323
      %s325 = smul.addr %s324, 4
      %s326 = scalar_lea.vmem %s3, %s325
      %p327 = pneg %p142
      %p328 = pneg %p139
      %s329 = smul.u32 4, %s23
      %p330 = scmp.lt.s32.totalorder %s329, 3
      %s331 = scalar_select %p330, %s329, 3
      %s332 = smul.addr %s331, 4
      %s333 = scalar_lea.vmem %s4, %s332
      %p334 = pneg %p168
      %p335 = pneg %p165
      %p336 = pneg %p196
      %p337 = pneg %p193
      %s338 = smul.u32 4, %s22
      %p339 = scmp.lt.s32.totalorder %s21, 1
      %s340 = scalar_select %p339, %s21, 1
      %p341 = scmp.lt.s32.totalorder %s338, 3
      %s342 = scalar_select %p341, %s338, 3
      %s343 = smul.addr %s340, 4
      %s344 = sadd.s32 %s342, %s343
      %s345 = smul.addr %s344, 4
      %s346 = scalar_lea.vmem %s5, %s345
      %s347 = smul.u32 4, %s22
      %p348 = scmp.lt.s32.totalorder %s21, 1
      %s349 = scalar_select %p348, %s21, 1
      %p350 = scmp.lt.s32.totalorder %s347, 3
      %s351 = scalar_select %p350, %s347, 3
      %s352 = smul.addr %s349, 4
      %s353 = sadd.s32 %s351, %s352
      %s354 = smul.addr %s353, 4
      %s355 = scalar_lea.vmem %s0, %s354
      %s356 = smul.u32 4, %s22
      %s357 = smul.u32 4, %s23
      %p358 = scmp.lt.s32.totalorder %s21, 1
      %s359 = scalar_select %p358, %s21, 1
      %p360 = scmp.lt.s32.totalorder %s357, 3
      %s361 = scalar_select %p360, %s357, 3
      %s362 = smul.addr %s359, 4
      %s363 = sadd.s32 %s361, %s362
      %s364 = smul.addr %s363, 4
      %s365 = scalar_lea.vmem %s1, %s364
      %s366 = smul.u32 4, %s23
      %s367 = smul.u32 4, %s23
      %p368 = scmp.lt.s32.totalorder %s21, 1
      %s369 = scalar_select %p368, %s21, 1
      %p370 = scmp.lt.s32.totalorder %s367, 3
      %s371 = scalar_select %p370, %s367, 3
      %s372 = smul.addr %s369, 4
      %s373 = sadd.s32 %s371, %s372
      %s374 = smul.addr %s373, 4
      %s375 = scalar_lea.vmem %s2, %s374
      %s376 = smul.u32 4, %s23
      %s377 = smul.u32 4, %s22
      %p378 = scmp.lt.s32.totalorder %s21, 1
      %s379 = scalar_select %p378, %s21, 1
      %p380 = scmp.lt.s32.totalorder %s377, 3
      %s381 = scalar_select %p380, %s377, 3
      %s382 = smul.addr %s381, 4
      %s383 = smul.addr %s379, 16
      %s384 = sadd.s32 %s382, %s383
      %s385 = smul.addr %s384, 4
      %s386 = scalar_lea.vmem %s3, %s385
      %s387 = smul.u32 4, %s22
      %s388 = smul.u32 4, %s23
      %p389 = scmp.lt.s32.totalorder %s388, 3
      %s390 = scalar_select %p389, %s388, 3
      %s391 = smul.addr %s390, 4
      %s392 = scalar_lea.vmem %s4, %s391
      %s393 = smul.u32 4, %s23
      %s394 = smul.u32 4, %s22
      %p395 = scmp.lt.s32.totalorder %s21, 1
      %s396 = scalar_select %p395, %s21, 1
      %p397 = scmp.lt.s32.totalorder %s394, 3
      %s398 = scalar_select %p397, %s394, 3
      %s399 = smul.addr %s396, 4
      %s400 = sadd.s32 %s398, %s399
      %s401 = smul.addr %s400, 4
      %s402 = scalar_lea.vmem %s5, %s401
      %s403 = smul.u32 4, %s22
      %p406 = scmp.eq.s32.totalorder %s23, 0
      // Predicated region
      $region41: #{attention_rel_pos_forward.8} parent=39 // pred_check
        %p407 = pneg %p406
      $region42: #{attention_rel_pos_forward.8} parent=39 // pred_check_branch
        %409 = sbr.rel (%p407) target = $region44
      $region43: #{attention_rel_pos_forward.8} parent=39 // pred_region
        %vm410 = vcmask 7168
        %411 = vst.msk [vmem:[#allocation2] sm:$0xff] %vm410, -inf
        %412 = vst.msk [vmem:[#allocation2 + $0x8] sm:$0xff] %vm410, -inf
        %413 = vst.msk [vmem:[#allocation2 + $0x10] sm:$0xff] %vm410, -inf
        %414 = vst.msk [vmem:[#allocation2 + $0x18] sm:$0xff] %vm410, -inf
        %415 = vst.msk [vmem:[#allocation2 + $0x20] sm:$0xff] %vm410, -inf
        %416 = vst.msk [vmem:[#allocation2 + $0x28] sm:$0xff] %vm410, -inf
        %417 = vst.msk [vmem:[#allocation2 + $0x30] sm:$0xff] %vm410, -inf
        %418 = vst.msk [vmem:[#allocation2 + $0x38] sm:$0xff] %vm410, -inf
        %419 = vst.msk [vmem:[#allocation2 + $0x40] sm:$0xff] %vm410, -inf
        %420 = vst.msk [vmem:[#allocation2 + $0x48] sm:$0xff] %vm410, -inf
        %421 = vst.msk [vmem:[#allocation2 + $0x50] sm:$0xff] %vm410, -inf
        %422 = vst.msk [vmem:[#allocation2 + $0x58] sm:$0xff] %vm410, -inf
        %423 = vst.msk [vmem:[#allocation2 + $0x60] sm:$0xff] %vm410, -inf
        %424 = vst.msk [vmem:[#allocation2 + $0x68] sm:$0xff] %vm410, -inf
        %425 = vst.msk [vmem:[#allocation2 + $0x70] sm:$0xff] %vm410, -inf
        %426 = vst.msk [vmem:[#allocation2 + $0x78] sm:$0xff] %vm410, -inf
        %427 = vst.msk [vmem:[#allocation3] sm:$0xff] %vm410, 0.0
        %428 = vst.msk [vmem:[#allocation3 + $0x8] sm:$0xff] %vm410, 0.0
        %429 = vst.msk [vmem:[#allocation3 + $0x10] sm:$0xff] %vm410, 0.0
        %430 = vst.msk [vmem:[#allocation3 + $0x18] sm:$0xff] %vm410, 0.0
        %431 = vst.msk [vmem:[#allocation3 + $0x20] sm:$0xff] %vm410, 0.0
        %432 = vst.msk [vmem:[#allocation3 + $0x28] sm:$0xff] %vm410, 0.0
        %433 = vst.msk [vmem:[#allocation3 + $0x30] sm:$0xff] %vm410, 0.0
        %434 = vst.msk [vmem:[#allocation3 + $0x38] sm:$0xff] %vm410, 0.0
        %435 = vst.msk [vmem:[#allocation3 + $0x40] sm:$0xff] %vm410, 0.0
        %436 = vst.msk [vmem:[#allocation3 + $0x48] sm:$0xff] %vm410, 0.0
        %437 = vst.msk [vmem:[#allocation3 + $0x50] sm:$0xff] %vm410, 0.0
        %438 = vst.msk [vmem:[#allocation3 + $0x58] sm:$0xff] %vm410, 0.0
        %439 = vst.msk [vmem:[#allocation3 + $0x60] sm:$0xff] %vm410, 0.0
        %440 = vst.msk [vmem:[#allocation3 + $0x68] sm:$0xff] %vm410, 0.0
        %441 = vst.msk [vmem:[#allocation3 + $0x70] sm:$0xff] %vm410, 0.0
        %442 = vst.msk [vmem:[#allocation3 + $0x78] sm:$0xff] %vm410, 0.0
        %vm443 = vcmask 64512
        %444 = vst.msk [vmem:[#allocation4] sm:$0xff] %vm443, 0.0
        %445 = vst.msk [vmem:[#allocation4 + $0x8] sm:$0xff] %vm443, 0.0
        %446 = vst.msk [vmem:[#allocation4 + $0x10] sm:$0xff] %vm443, 0.0
        %447 = vst.msk [vmem:[#allocation4 + $0x18] sm:$0xff] %vm443, 0.0
        %448 = vst.msk [vmem:[#allocation4 + $0x20] sm:$0xff] %vm443, 0.0
        %449 = vst.msk [vmem:[#allocation4 + $0x28] sm:$0xff] %vm443, 0.0
        %450 = vst.msk [vmem:[#allocation4 + $0x30] sm:$0xff] %vm443, 0.0
        %451 = vst.msk [vmem:[#allocation4 + $0x38] sm:$0xff] %vm443, 0.0
        %452 = vst.msk [vmem:[#allocation4 + $0x40] sm:$0xff] %vm443, 0.0
        %453 = vst.msk [vmem:[#allocation4 + $0x48] sm:$0xff] %vm443, 0.0
        %454 = vst.msk [vmem:[#allocation4 + $0x50] sm:$0xff] %vm443, 0.0
        %455 = vst.msk [vmem:[#allocation4 + $0x58] sm:$0xff] %vm443, 0.0
        %456 = vst.msk [vmem:[#allocation4 + $0x60] sm:$0xff] %vm443, 0.0
        %457 = vst.msk [vmem:[#allocation4 + $0x68] sm:$0xff] %vm443, 0.0
        %458 = vst.msk [vmem:[#allocation4 + $0x70] sm:$0xff] %vm443, 0.0
        %459 = vst.msk [vmem:[#allocation4 + $0x78] sm:$0xff] %vm443, 0.0
      $region44: #{attention_rel_pos_forward.8} parent=39 // pred_fallthru
        _
      %v460 = vld [vmem:[%s392] sm:$0xf]
      %v461 = vld [vmem:[%s392 + $0x4] sm:$0xf]
      %v462 = vld [vmem:[%s392 + $0x8] sm:$0xf]
      %v463 = vld [vmem:[%s392 + $0xc] sm:$0xf]
      %v464 = vld [vmem:[%s355] sm:$0xf]
      %v465 = vld [vmem:[%s355 + $0x4] sm:$0xf]
      %v466 = vld [vmem:[%s355 + $0x8] sm:$0xf]
      %v467 = vld [vmem:[%s355 + $0xc] sm:$0xf]
      %v468 = vmul.bf16 %v464, 1052065461
      %v469 = vmul.bf16 %v465, 1052065461
      %v470 = vmul.bf16 %v466, 1052065461
      %v471 = vmul.bf16 %v467, 1052065461
      %v472 = vld [vmem:[%s365] sm:$0xf]
      %v473 = vld [vmem:[%s365 + $0x4] sm:$0xf]
      %v474 = vld [vmem:[%s365 + $0x8] sm:$0xf]
      %v475 = vld [vmem:[%s365 + $0xc] sm:$0xf]
      %v476 = vld [vmem:[%s375] sm:$0xf]
      %v477 = vld [vmem:[%s375 + $0x4] sm:$0xf]
      %v478 = vld [vmem:[%s375 + $0x8] sm:$0xf]
      %v479 = vld [vmem:[%s375 + $0xc] sm:$0xf]
      %v480 = vld [vmem:[%s386] sm:$0xf]
      %v481 = vld [vmem:[%s386 + $0x10] sm:$0xf]
      %v482 = vld [vmem:[%s386 + $0x20] sm:$0xf]
      %v483 = vld [vmem:[%s386 + $0x30] sm:$0xf]
      %v488 = vunpack.c.l.b16 %v480
      %v489 = vunpack.c.l.b16 %v481
      %v490 = vunpack.c.l.b16 %v482
      %v491 = vunpack.c.l.b16 %v483
      %v492 = vpack.c.b16 %v489, %v488
      %v493 = vpack.c.b16 %v491, %v490
      %v500 = vunpack.c.l.b16 %v460
      %v501 = vunpack.c.l.b16 %v461
      %v502 = vunpack.c.l.b16 %v462
      %v503 = vunpack.c.l.b16 %v463
      %v504 = vpack.c.b16 %v501, %v500
      %v505 = vpack.c.b16 %v503, %v502
      %508 = vmatprep.subr.bf16.mxu0 0
      %509 = vmatpush1.bf16.xpose.msra.mxu0 %v504
      %510 = vmatprep.subr.bf16.mxu0 0
      %511 = vmatpush1.bf16.xpose.msra.mxu0 %v505
      %512 = vmatprep.subr.bf16.mxu0 0
      %513 = vmatpush1.bf16.xpose.msra.mxu0 0
      %514 = vmatprep.subr.bf16.mxu0 0
      %515 = vmatpush1.bf16.xpose.msra.mxu0 0
      %516 = vmatprep.subr.bf16.mxu0 0
      %517 = vmatpush1.bf16.xpose.msra.mxu0 0
      %518 = vmatprep.subr.bf16.mxu0 0
      %519 = vmatpush1.bf16.xpose.msra.mxu0 0
      %520 = vmatprep.subr.bf16.mxu0 0
      %521 = vmatpush1.bf16.xpose.msra.mxu0 0
      %522 = vmatprep.subr.bf16.mxu0 0
      %523 = vmatpush1.bf16.xpose.msra.mxu0 0
      %524 = vmatprep.subr.bf16.mxu0 0
      %525 = vmatpush1.bf16.xpose.msra.mxu0 0
      %526 = vmatprep.subr.bf16.mxu0 0
      %527 = vmatpush1.bf16.xpose.msra.mxu0 0
      %528 = vmatprep.subr.bf16.mxu0 0
      %529 = vmatpush1.bf16.xpose.msra.mxu0 0
      %530 = vmatprep.subr.bf16.mxu0 0
      %531 = vmatpush1.bf16.xpose.msra.mxu0 0
      %532 = vmatprep.subr.bf16.mxu0 0
      %533 = vmatpush1.bf16.xpose.msra.mxu0 0
      %534 = vmatprep.subr.bf16.mxu0 0
      %535 = vmatpush1.bf16.xpose.msra.mxu0 0
      %536 = vmatprep.subr.bf16.mxu0 0
      %537 = vmatpush1.bf16.xpose.msra.mxu0 0
      %538 = vmatprep.subr.bf16.mxu0 0
      %539 = vmatpush1.bf16.xpose.msra.mxu0 0
      %540 = vmatprep.mubr.bf16.mxu0 0
      %541 = vmatmul.mubr.bf16.gmra.mrb[0].mxu0 %v492
      %v542 = vpop.f32.mrb[0].mxu0
      %v543 = vadd.f32 0.0, %v542
      %v544 = vpop.f32.mrb[0].mxu0
      %v545 = vpop.f32.mrb[0].mxu0
      %v546 = vadd.f32 0.0, %v545
      %v547 = vpop.f32.mrb[0].mxu0
      %548 = vmatprep.mubr.bf16.mxu0 0
      %549 = vmatmul.mubr.bf16.gmra.mrb[0].mxu0 %v493
      %v550 = vpop.f32.mrb[0].mxu0
      %v551 = vadd.f32 0.0, %v550
      %v552 = vpop.f32.mrb[0].mxu0
      %v553 = vpop.f32.mrb[0].mxu0
      %v554 = vadd.f32 0.0, %v553
      %v555 = vpop.f32.mrb[0].mxu0
      %556 = vdwg.mxu0
      %v561 = vunpack.c.l.b16 %v468
      %v562 = vunpack.c.l.b16 %v469
      %v563 = vunpack.c.l.b16 %v470
      %v564 = vunpack.c.l.b16 %v471
      %v565 = vpack.c.b16 %v562, %v561
      %v566 = vpack.c.b16 %v564, %v563
      %v571 = vunpack.c.l.b16 %v472
      %v572 = vunpack.c.l.b16 %v473
      %v573 = vunpack.c.l.b16 %v474
      %v574 = vunpack.c.l.b16 %v475
      %v575 = vpack.c.b16 %v572, %v571
      %v576 = vpack.c.b16 %v574, %v573
      %vm577 = vcmask 64512
      %v579 = vsel %vm577, %v565, 0
      %v582 = vsel %vm577, %v566, 0
      %v585 = vsel %vm577, %v575, 0
      %v588 = vsel %vm577, %v576, 0
      %590 = vmatprep.subr.bf16.mxu0 0
      %591 = vmatpush1.bf16.xpose.msra.mxu0 %v585
      %592 = vmatprep.subr.bf16.mxu0 0
      %593 = vmatpush1.bf16.xpose.msra.mxu0 %v588
      %594 = vmatprep.subr.bf16.mxu0 0
      %595 = vmatpush1.bf16.xpose.msra.mxu0 0
      %596 = vmatprep.subr.bf16.mxu0 0
      %597 = vmatpush1.bf16.xpose.msra.mxu0 0
      %598 = vmatprep.subr.bf16.mxu0 0
      %599 = vmatpush1.bf16.xpose.msra.mxu0 0
      %600 = vmatprep.subr.bf16.mxu0 0
      %601 = vmatpush1.bf16.xpose.msra.mxu0 0
      %602 = vmatprep.subr.bf16.mxu0 0
      %603 = vmatpush1.bf16.xpose.msra.mxu0 0
      %604 = vmatprep.subr.bf16.mxu0 0
      %605 = vmatpush1.bf16.xpose.msra.mxu0 0
      %606 = vmatprep.subr.bf16.mxu0 0
      %607 = vmatpush1.bf16.xpose.msra.mxu0 0
      %608 = vmatprep.subr.bf16.mxu0 0
      %609 = vmatpush1.bf16.xpose.msra.mxu0 0
      %610 = vmatprep.subr.bf16.mxu0 0
      %611 = vmatpush1.bf16.xpose.msra.mxu0 0
      %612 = vmatprep.subr.bf16.mxu0 0
      %613 = vmatpush1.bf16.xpose.msra.mxu0 0
      %614 = vmatprep.subr.bf16.mxu0 0
      %615 = vmatpush1.bf16.xpose.msra.mxu0 0
      %616 = vmatprep.subr.bf16.mxu0 0
      %617 = vmatpush1.bf16.xpose.msra.mxu0 0
      %618 = vmatprep.subr.bf16.mxu0 0
      %619 = vmatpush1.bf16.xpose.msra.mxu0 0
      %620 = vmatprep.subr.bf16.mxu0 0
      %621 = vmatpush1.bf16.xpose.msra.mxu0 0
      %622 = vmatprep.mubr.bf16.mxu0 0
      %623 = vmatmul.mubr.bf16.gmra.mrb[0].mxu0 %v579
      %v624 = vpop.f32.mrb[0].mxu0
      %v625 = vadd.f32 %v543, %v624
      %v626 = vpop.f32.mrb[0].mxu0
      %v627 = vpop.f32.mrb[0].mxu0
      %v628 = vadd.f32 %v546, %v627
      %v629 = vpop.f32.mrb[0].mxu0
      %630 = vmatprep.mubr.bf16.mxu0 0
      %631 = vmatmul.mubr.bf16.gmra.mrb[0].mxu0 %v582
      %v632 = vpop.f32.mrb[0].mxu0
      %v633 = vadd.f32 %v551, %v632
      %v634 = vpop.f32.mrb[0].mxu0
      %v635 = vpop.f32.mrb[0].mxu0
      %v636 = vadd.f32 %v554, %v635
      %v637 = vpop.f32.mrb[0].mxu0
      %638 = vdwg.mxu0
      %v639 = vld [vmem:[#allocation2] sm:$0xff]
      %v640 = vld [vmem:[#allocation2 + $0x8] sm:$0xff]
      %v641 = vld [vmem:[#allocation2 + $0x10] sm:$0xff]
      %v642 = vld [vmem:[#allocation2 + $0x18] sm:$0xff]
      %vm643 = vcmask 261120
      %v644 = vsel %vm643, %v625, -inf
      %645 = vmax.xlane.f32.xlu0 %v644
      %v646 = vpop.xlane.xlu0 %645
      %v647 = vsel %vm643, %v628, -inf
      %648 = vmax.xlane.f32.xlu0 %v647
      %v649 = vpop.xlane.xlu0 %648
      %v650 = vsel %vm643, %v633, -inf
      %651 = vmax.xlane.f32.xlu0 %v650
      %v652 = vpop.xlane.xlu0 %651
      %v653 = vsel %vm643, %v636, -inf
      %654 = vmax.xlane.f32.xlu0 %v653
      %v655 = vpop.xlane.xlu0 %654
      %v656 = vmax.f32 %v639, %v646
      %v657 = vmax.f32 %v640, %v649
      %v658 = vmax.f32 %v641, %v652
      %v659 = vmax.f32 %v642, %v655
      %v660 = vsub.f32 %v639, %v656
      %v661 = vsub.f32 %v640, %v657
      %v662 = vsub.f32 %v641, %v658
      %v663 = vsub.f32 %v642, %v659
      %v664 = vmul.f32 %v660, 1.442695
      %v665 = vpow.pop %v664
      %v666 = vmul.f32 %v661, 1.442695
      %v667 = vpow.pop %v666
      %v668 = vmul.f32 %v662, 1.442695
      %v669 = vpow.pop %v668
      %v670 = vmul.f32 %v663, 1.442695
      %v671 = vpow.pop %v670
      %673 = vset.pattern.permute.xlu0 0
      %674 = vperm.xlu0 %673, %v656
      %v675 = vpop.permute.xlu0 %674
      %678 = vset.pattern.permute.xlu0 0
      %679 = vperm.xlu0 %678, %v657
      %v680 = vpop.permute.xlu0 %679
      %683 = vset.pattern.permute.xlu0 0
      %684 = vperm.xlu0 %683, %v658
      %v685 = vpop.permute.xlu0 %684
      %688 = vset.pattern.permute.xlu0 0
      %689 = vperm.xlu0 %688, %v659
      %v690 = vpop.permute.xlu0 %689
      %v692 = vsub.f32 %v625, %v675
      %v693 = vsub.f32 %v628, %v680
      %v694 = vsub.f32 %v633, %v685
      %v695 = vsub.f32 %v636, %v690
      %v696 = vmul.f32 %v692, 1.442695
      %v697 = vpow.pop %v696
      %v698 = vmul.f32 %v693, 1.442695
      %v699 = vpow.pop %v698
      %v700 = vmul.f32 %v694, 1.442695
      %v701 = vpow.pop %v700
      %v702 = vmul.f32 %v695, 1.442695
      %v703 = vpow.pop %v702
      %v704 = vld [vmem:[#allocation3] sm:$0xff]
      %v705 = vld [vmem:[#allocation3 + $0x8] sm:$0xff]
      %v706 = vld [vmem:[#allocation3 + $0x10] sm:$0xff]
      %v707 = vld [vmem:[#allocation3 + $0x18] sm:$0xff]
      %v708 = vmul.f32 %v665, %v704
      %v709 = vmul.f32 %v667, %v705
      %v710 = vmul.f32 %v669, %v706
      %v711 = vmul.f32 %v671, %v707
      %v712 = vsel %vm643, %v697, 0.0
      %713 = vadd.xlane.f32.xlu0 %v712
      %v714 = vpop.xlane.xlu0 %713
      %v715 = vsel %vm643, %v699, 0.0
      %716 = vadd.xlane.f32.xlu0 %v715
      %v717 = vpop.xlane.xlu0 %716
      %v718 = vsel %vm643, %v701, 0.0
      %719 = vadd.xlane.f32.xlu0 %v718
      %v720 = vpop.xlane.xlu0 %719
      %v721 = vsel %vm643, %v703, 0.0
      %722 = vadd.xlane.f32.xlu0 %v721
      %v723 = vpop.xlane.xlu0 %722
      %v724 = vadd.f32 %v708, %v714
      %v725 = vadd.f32 %v709, %v717
      %v726 = vadd.f32 %v710, %v720
      %v727 = vadd.f32 %v711, %v723
      %vm728 = vcmask 7168
      %729 = vst.msk [vmem:[#allocation3] sm:$0xff] %vm728, %v724
      %730 = vst.msk [vmem:[#allocation3 + $0x8] sm:$0xff] %vm728, %v725
      %731 = vst.msk [vmem:[#allocation3 + $0x10] sm:$0xff] %vm728, %v726
      %732 = vst.msk [vmem:[#allocation3 + $0x18] sm:$0xff] %vm728, %v727
      %v733 = vld [vmem:[#allocation4] sm:$0xff]
      %v734 = vld [vmem:[#allocation4 + $0x8] sm:$0xff]
      %v735 = vld [vmem:[#allocation4 + $0x10] sm:$0xff]
      %v736 = vld [vmem:[#allocation4 + $0x18] sm:$0xff]
      %738 = vset.pattern.permute.xlu0 0
      %739 = vperm.xlu0 %738, %v665
      %v740 = vpop.permute.xlu0 %739
      %743 = vset.pattern.permute.xlu0 0
      %744 = vperm.xlu0 %743, %v667
      %v745 = vpop.permute.xlu0 %744
      %748 = vset.pattern.permute.xlu0 0
      %749 = vperm.xlu0 %748, %v669
      %v750 = vpop.permute.xlu0 %749
      %753 = vset.pattern.permute.xlu0 0
      %754 = vperm.xlu0 %753, %v671
      %v755 = vpop.permute.xlu0 %754
      %v757 = vmul.f32 %v740, %v733
      %v758 = vmul.f32 %v745, %v734
      %v759 = vmul.f32 %v750, %v735
      %v760 = vmul.f32 %v755, %v736
      %v761 = vpack.c.bf16 %v699, %v697
      %v762 = vpack.c.bf16 %v703, %v701
      %v767 = vunpack.c.l.b16 %v476
      %v768 = vunpack.c.l.b16 %v477
      %v769 = vunpack.c.l.b16 %v478
      %v770 = vunpack.c.l.b16 %v479
      %v771 = vpack.c.b16 %v768, %v767
      %v772 = vpack.c.b16 %v770, %v769
      %v776 = vsel %vm643, %v761, 0
      %v779 = vsel %vm643, %v762, 0
      %781 = vmatprep.subr.bf16.mxu0 0
      %782 = vmatpush1.bf16.msra.mxu0 %v771
      %783 = vmatprep.subr.bf16.mxu0 0
      %784 = vmatpush1.bf16.msra.mxu0 %v772
      %785 = vmatprep.subr.bf16.mxu0 0
      %786 = vmatpush1.bf16.msra.mxu0 0
      %787 = vmatprep.subr.bf16.mxu0 0
      %788 = vmatpush1.bf16.msra.mxu0 0
      %789 = vmatprep.subr.bf16.mxu0 0
      %790 = vmatpush1.bf16.msra.mxu0 0
      %791 = vmatprep.subr.bf16.mxu0 0
      %792 = vmatpush1.bf16.msra.mxu0 0
      %793 = vmatprep.subr.bf16.mxu0 0
      %794 = vmatpush1.bf16.msra.mxu0 0
      %795 = vmatprep.subr.bf16.mxu0 0
      %796 = vmatpush1.bf16.msra.mxu0 0
      %797 = vmatprep.subr.bf16.mxu0 0
      %798 = vmatpush1.bf16.msra.mxu0 0
      %799 = vmatprep.subr.bf16.mxu0 0
      %800 = vmatpush1.bf16.msra.mxu0 0
      %801 = vmatprep.subr.bf16.mxu0 0
      %802 = vmatpush1.bf16.msra.mxu0 0
      %803 = vmatprep.subr.bf16.mxu0 0
      %804 = vmatpush1.bf16.msra.mxu0 0
      %805 = vmatprep.subr.bf16.mxu0 0
      %806 = vmatpush1.bf16.msra.mxu0 0
      %807 = vmatprep.subr.bf16.mxu0 0
      %808 = vmatpush1.bf16.msra.mxu0 0
      %809 = vmatprep.subr.bf16.mxu0 0
      %810 = vmatpush1.bf16.msra.mxu0 0
      %811 = vmatprep.subr.bf16.mxu0 0
      %812 = vmatpush1.bf16.msra.mxu0 0
      %813 = vmatprep.mubr.bf16.mxu0 0
      %814 = vmatmul.mubr.bf16.gmra.mrb[0].mxu0 %v776
      %v815 = vpop.f32.mrb[0].mxu0
      %v816 = vadd.f32 0.0, %v815
      %v817 = vpop.f32.mrb[0].mxu0
      %v818 = vpop.f32.mrb[0].mxu0
      %v819 = vadd.f32 0.0, %v818
      %v820 = vpop.f32.mrb[0].mxu0
      %821 = vmatprep.mubr.bf16.mxu0 0
      %822 = vmatmul.mubr.bf16.gmra.mrb[0].mxu0 %v779
      %v823 = vpop.f32.mrb[0].mxu0
      %v824 = vadd.f32 0.0, %v823
      %v825 = vpop.f32.mrb[0].mxu0
      %v826 = vpop.f32.mrb[0].mxu0
      %v827 = vadd.f32 0.0, %v826
      %v828 = vpop.f32.mrb[0].mxu0
      %829 = vdwg.mxu0
      %v830 = vadd.f32 %v757, %v816
      %v831 = vadd.f32 %v758, %v819
      %v832 = vadd.f32 %v759, %v824
      %v833 = vadd.f32 %v760, %v827
      %834 = vst.msk [vmem:[#allocation4] sm:$0xff] %vm577, %v830
      %835 = vst.msk [vmem:[#allocation4 + $0x8] sm:$0xff] %vm577, %v831
      %836 = vst.msk [vmem:[#allocation4 + $0x10] sm:$0xff] %vm577, %v832
      %837 = vst.msk [vmem:[#allocation4 + $0x18] sm:$0xff] %vm577, %v833
      %838 = vst.msk [vmem:[#allocation2] sm:$0xff] %vm728, %v656
      %839 = vst.msk [vmem:[#allocation2 + $0x8] sm:$0xff] %vm728, %v657
      %840 = vst.msk [vmem:[#allocation2 + $0x10] sm:$0xff] %vm728, %v658
      %841 = vst.msk [vmem:[#allocation2 + $0x18] sm:$0xff] %vm728, %v659
      %v842 = vld [vmem:[%s355] sm:$0xf]
      %v843 = vld [vmem:[%s355 + $0x4] sm:$0xf]
      %v844 = vld [vmem:[%s355 + $0x8] sm:$0xf]
      %v845 = vld [vmem:[%s355 + $0xc] sm:$0xf]
      %v846 = vmul.bf16 %v842, 1052065461
      %v847 = vmul.bf16 %v843, 1052065461
      %v848 = vmul.bf16 %v844, 1052065461
      %v849 = vmul.bf16 %v845, 1052065461
      %v850 = vld [vmem:[%s365] sm:$0xf]
      %v851 = vld [vmem:[%s365 + $0x4] sm:$0xf]
      %v852 = vld [vmem:[%s365 + $0x8] sm:$0xf]
      %v853 = vld [vmem:[%s365 + $0xc] sm:$0xf]
      %v854 = vld [vmem:[%s375] sm:$0xf]
      %v855 = vld [vmem:[%s375 + $0x4] sm:$0xf]
      %v856 = vld [vmem:[%s375 + $0x8] sm:$0xf]
      %v857 = vld [vmem:[%s375 + $0xc] sm:$0xf]
      %v858 = vld [vmem:[%s386 + $0x4] sm:$0xf]
      %v859 = vld [vmem:[%s386 + $0x14] sm:$0xf]
      %v860 = vld [vmem:[%s386 + $0x24] sm:$0xf]
      %v861 = vld [vmem:[%s386 + $0x34] sm:$0xf]
      %v866 = vunpack.c.l.b16 %v858
      %v867 = vunpack.c.l.b16 %v859
      %v868 = vunpack.c.l.b16 %v860
      %v869 = vunpack.c.l.b16 %v861
      %v870 = vpack.c.b16 %v867, %v866
      %v871 = vpack.c.b16 %v869, %v868
      %874 = vmatprep.subr.bf16.mxu0 0
      %875 = vmatpush1.bf16.xpose.msra.mxu0 %v504
      %876 = vmatprep.subr.bf16.mxu0 0
      %877 = vmatpush1.bf16.xpose.msra.mxu0 %v505
      %878 = vmatprep.subr.bf16.mxu0 0
      %879 = vmatpush1.bf16.xpose.msra.mxu0 0
      %880 = vmatprep.subr.bf16.mxu0 0
      %881 = vmatpush1.bf16.xpose.msra.mxu0 0
      %882 = vmatprep.subr.bf16.mxu0 0
      %883 = vmatpush1.bf16.xpose.msra.mxu0 0
      %884 = vmatprep.subr.bf16.mxu0 0
      %885 = vmatpush1.bf16.xpose.msra.mxu0 0
      %886 = vmatprep.subr.bf16.mxu0 0
      %887 = vmatpush1.bf16.xpose.msra.mxu0 0
      %888 = vmatprep.subr.bf16.mxu0 0
      %889 = vmatpush1.bf16.xpose.msra.mxu0 0
      %890 = vmatprep.subr.bf16.mxu0 0
      %891 = vmatpush1.bf16.xpose.msra.mxu0 0
      %892 = vmatprep.subr.bf16.mxu0 0
      %893 = vmatpush1.bf16.xpose.msra.mxu0 0
      %894 = vmatprep.subr.bf16.mxu0 0
      %895 = vmatpush1.bf16.xpose.msra.mxu0 0
      %896 = vmatprep.subr.bf16.mxu0 0
      %897 = vmatpush1.bf16.xpose.msra.mxu0 0
      %898 = vmatprep.subr.bf16.mxu0 0
      %899 = vmatpush1.bf16.xpose.msra.mxu0 0
      %900 = vmatprep.subr.bf16.mxu0 0
      %901 = vmatpush1.bf16.xpose.msra.mxu0 0
      %902 = vmatprep.subr.bf16.mxu0 0
      %903 = vmatpush1.bf16.xpose.msra.mxu0 0
      %904 = vmatprep.subr.bf16.mxu0 0
      %905 = vmatpush1.bf16.xpose.msra.mxu0 0
      %906 = vmatprep.mubr.bf16.mxu0 0
      %907 = vmatmul.mubr.bf16.gmra.mrb[0].mxu0 %v870
      %v908 = vpop.f32.mrb[0].mxu0
      %v909 = vadd.f32 0.0, %v908
      %v910 = vpop.f32.mrb[0].mxu0
      %v911 = vpop.f32.mrb[0].mxu0
      %v912 = vadd.f32 0.0, %v911
      %v913 = vpop.f32.mrb[0].mxu0
      %914 = vmatprep.mubr.bf16.mxu0 0
      %915 = vmatmul.mubr.bf16.gmra.mrb[0].mxu0 %v871
      %v916 = vpop.f32.mrb[0].mxu0
      %v917 = vadd.f32 0.0, %v916
      %v918 = vpop.f32.mrb[0].mxu0
      %v919 = vpop.f32.mrb[0].mxu0
      %v920 = vadd.f32 0.0, %v919
      %v921 = vpop.f32.mrb[0].mxu0
      %922 = vdwg.mxu0
      %v927 = vunpack.c.l.b16 %v846
      %v928 = vunpack.c.l.b16 %v847
      %v929 = vunpack.c.l.b16 %v848
      %v930 = vunpack.c.l.b16 %v849
      %v931 = vpack.c.b16 %v928, %v927
      %v932 = vpack.c.b16 %v930, %v929
      %933 = vrot.lane.b32.xlu0 %v931, 120
      %v934 = vpop.permute.xlu0 %933
      %935 = vrot.lane.b32.xlu0 %v932, 120
      %v936 = vpop.permute.xlu0 %935
      %v941 = vunpack.c.l.b16 %v850
      %v942 = vunpack.c.l.b16 %v851
      %v943 = vunpack.c.l.b16 %v852
      %v944 = vunpack.c.l.b16 %v853
      %v945 = vpack.c.b16 %v942, %v941
      %v946 = vpack.c.b16 %v944, %v943
      %947 = vrot.lane.b32.xlu0 %v945, 120
      %v948 = vpop.permute.xlu0 %947
      %949 = vrot.lane.b32.xlu0 %v946, 120
      %v950 = vpop.permute.xlu0 %949
      %v952 = vsel %vm577, %v934, 0
      %v955 = vsel %vm577, %v936, 0
      %v958 = vsel %vm577, %v948, 0
      %v961 = vsel %vm577, %v950, 0
      %963 = vmatprep.subr.bf16.mxu0 0
      %964 = vmatpush1.bf16.xpose.msra.mxu0 %v958
      %965 = vmatprep.subr.bf16.mxu0 0
      %966 = vmatpush1.bf16.xpose.msra.mxu0 %v961
      %967 = vmatprep.subr.bf16.mxu0 0
      %968 = vmatpush1.bf16.xpose.msra.mxu0 0
      %969 = vmatprep.subr.bf16.mxu0 0
      %970 = vmatpush1.bf16.xpose.msra.mxu0 0
      %971 = vmatprep.subr.bf16.mxu0 0
      %972 = vmatpush1.bf16.xpose.msra.mxu0 0
      %973 = vmatprep.subr.bf16.mxu0 0
      %974 = vmatpush1.bf16.xpose.msra.mxu0 0
      %975 = vmatprep.subr.bf16.mxu0 0
      %976 = vmatpush1.bf16.xpose.msra.mxu0 0
      %977 = vmatprep.subr.bf16.mxu0 0
      %978 = vmatpush1.bf16.xpose.msra.mxu0 0
      %979 = vmatprep.subr.bf16.mxu0 0
      %980 = vmatpush1.bf16.xpose.msra.mxu0 0
      %981 = vmatprep.subr.bf16.mxu0 0
      %982 = vmatpush1.bf16.xpose.msra.mxu0 0
      %983 = vmatprep.subr.bf16.mxu0 0
      %984 = vmatpush1.bf16.xpose.msra.mxu0 0
      %985 = vmatprep.subr.bf16.mxu0 0
      %986 = vmatpush1.bf16.xpose.msra.mxu0 0
      %987 = vmatprep.subr.bf16.mxu0 0
      %988 = vmatpush1.bf16.xpose.msra.mxu0 0
      %989 = vmatprep.subr.bf16.mxu0 0
      %990 = vmatpush1.bf16.xpose.msra.mxu0 0
      %991 = vmatprep.subr.bf16.mxu0 0
      %992 = vmatpush1.bf16.xpose.msra.mxu0 0
      %993 = vmatprep.subr.bf16.mxu0 0
      %994 = vmatpush1.bf16.xpose.msra.mxu0 0
      %995 = vmatprep.mubr.bf16.mxu0 0
      %996 = vmatmul.mubr.bf16.gmra.mrb[0].mxu0 %v952
      %v997 = vpop.f32.mrb[0].mxu0
      %v998 = vadd.f32 %v909, %v997
      %v999 = vpop.f32.mrb[0].mxu0
      %v1000 = vpop.f32.mrb[0].mxu0
      %v1001 = vadd.f32 %v912, %v1000
      %v1002 = vpop.f32.mrb[0].mxu0
      %1003 = vmatprep.mubr.bf16.mxu0 0
      %1004 = vmatmul.mubr.bf16.gmra.mrb[0].mxu0 %v955
      %v1005 = vpop.f32.mrb[0].mxu0
      %v1006 = vadd.f32 %v917, %v1005
      %v1007 = vpop.f32.mrb[0].mxu0
      %v1008 = vpop.f32.mrb[0].mxu0
      %v1009 = vadd.f32 %v920, %v1008
      %v1010 = vpop.f32.mrb[0].mxu0
      %1011 = vdwg.mxu0
      %s1012 = scalar_lea.vmem [#allocation2], 32
      %v1013 = vld [vmem:[%s1012] sm:$0xff]
      %v1014 = vld [vmem:[%s1012 + $0x8] sm:$0xff]
      %v1015 = vld [vmem:[%s1012 + $0x10] sm:$0xff]
      %v1016 = vld [vmem:[%s1012 + $0x18] sm:$0xff]
      %v1017 = vsel %vm643, %v998, -inf
      %1018 = vmax.xlane.f32.xlu0 %v1017
      %v1019 = vpop.xlane.xlu0 %1018
      %v1020 = vsel %vm643, %v1001, -inf
      %1021 = vmax.xlane.f32.xlu0 %v1020
      %v1022 = vpop.xlane.xlu0 %1021
      %v1023 = vsel %vm643, %v1006, -inf
      %1024 = vmax.xlane.f32.xlu0 %v1023
      %v1025 = vpop.xlane.xlu0 %1024
      %v1026 = vsel %vm643, %v1009, -inf
      %1027 = vmax.xlane.f32.xlu0 %v1026
      %v1028 = vpop.xlane.xlu0 %1027
      %v1029 = vmax.f32 %v1013, %v1019
      %v1030 = vmax.f32 %v1014, %v1022
      %v1031 = vmax.f32 %v1015, %v1025
      %v1032 = vmax.f32 %v1016, %v1028
      %v1033 = vsub.f32 %v1013, %v1029
      %v1034 = vsub.f32 %v1014, %v1030
      %v1035 = vsub.f32 %v1015, %v1031
      %v1036 = vsub.f32 %v1016, %v1032
      %v1037 = vmul.f32 %v1033, 1.442695
      %v1038 = vpow.pop %v1037
      %v1039 = vmul.f32 %v1034, 1.442695
      %v1040 = vpow.pop %v1039
      %v1041 = vmul.f32 %v1035, 1.442695
      %v1042 = vpow.pop %v1041
      %v1043 = vmul.f32 %v1036, 1.442695
      %v1044 = vpow.pop %v1043
      %1046 = vset.pattern.permute.xlu0 0
      %1047 = vperm.xlu0 %1046, %v1029
      %v1048 = vpop.permute.xlu0 %1047
      %1051 = vset.pattern.permute.xlu0 0
      %1052 = vperm.xlu0 %1051, %v1030
      %v1053 = vpop.permute.xlu0 %1052
      %1056 = vset.pattern.permute.xlu0 0
      %1057 = vperm.xlu0 %1056, %v1031
      %v1058 = vpop.permute.xlu0 %1057
      %1061 = vset.pattern.permute.xlu0 0
      %1062 = vperm.xlu0 %1061, %v1032
      %v1063 = vpop.permute.xlu0 %1062
      %v1065 = vsub.f32 %v998, %v1048
      %v1066 = vsub.f32 %v1001, %v1053
      %v1067 = vsub.f32 %v1006, %v1058
      %v1068 = vsub.f32 %v1009, %v1063
      %v1069 = vmul.f32 %v1065, 1.442695
      %v1070 = vpow.pop %v1069
      %v1071 = vmul.f32 %v1066, 1.442695
      %v1072 = vpow.pop %v1071
      %v1073 = vmul.f32 %v1067, 1.442695
      %v1074 = vpow.pop %v1073
      %v1075 = vmul.f32 %v1068, 1.442695
      %v1076 = vpow.pop %v1075
      %s1077 = scalar_lea.vmem [#allocation3], 32
      %v1078 = vld [vmem:[%s1077] sm:$0xff]
      %v1079 = vld [vmem:[%s1077 + $0x8] sm:$0xff]
      %v1080 = vld [vmem:[%s1077 + $0x10] sm:$0xff]
      %v1081 = vld [vmem:[%s1077 + $0x18] sm:$0xff]
      %v1082 = vmul.f32 %v1038, %v1078
      %v1083 = vmul.f32 %v1040, %v1079
      %v1084 = vmul.f32 %v1042, %v1080
      %v1085 = vmul.f32 %v1044, %v1081
      %v1086 = vsel %vm643, %v1070, 0.0
      %1087 = vadd.xlane.f32.xlu0 %v1086
      %v1088 = vpop.xlane.xlu0 %1087
      %v1089 = vsel %vm643, %v1072, 0.0
      %1090 = vadd.xlane.f32.xlu0 %v1089
      %v1091 = vpop.xlane.xlu0 %1090
      %v1092 = vsel %vm643, %v1074, 0.0
      %1093 = vadd.xlane.f32.xlu0 %v1092
      %v1094 = vpop.xlane.xlu0 %1093
      %v1095 = vsel %vm643, %v1076, 0.0
      %1096 = vadd.xlane.f32.xlu0 %v1095
      %v1097 = vpop.xlane.xlu0 %1096
      %v1098 = vadd.f32 %v1082, %v1088
      %v1099 = vadd.f32 %v1083, %v1091
      %v1100 = vadd.f32 %v1084, %v1094
      %v1101 = vadd.f32 %v1085, %v1097
      %1102 = vst.msk [vmem:[%s1077] sm:$0xff] %vm728, %v1098
      %1103 = vst.msk [vmem:[%s1077 + $0x8] sm:$0xff] %vm728, %v1099
      %1104 = vst.msk [vmem:[%s1077 + $0x10] sm:$0xff] %vm728, %v1100
      %1105 = vst.msk [vmem:[%s1077 + $0x18] sm:$0xff] %vm728, %v1101
      %s1106 = scalar_lea.vmem [#allocation4], 32
      %v1107 = vld [vmem:[%s1106] sm:$0xff]
      %v1108 = vld [vmem:[%s1106 + $0x8] sm:$0xff]
      %v1109 = vld [vmem:[%s1106 + $0x10] sm:$0xff]
      %v1110 = vld [vmem:[%s1106 + $0x18] sm:$0xff]
      %1112 = vset.pattern.permute.xlu0 0
      %1113 = vperm.xlu0 %1112, %v1038
      %v1114 = vpop.permute.xlu0 %1113
      %1117 = vset.pattern.permute.xlu0 0
      %1118 = vperm.xlu0 %1117, %v1040
      %v1119 = vpop.permute.xlu0 %1118
      %1122 = vset.pattern.permute.xlu0 0
      %1123 = vperm.xlu0 %1122, %v1042
      %v1124 = vpop.permute.xlu0 %1123
      %1127 = vset.pattern.permute.xlu0 0
      %1128 = vperm.xlu0 %1127, %v1044
      %v1129 = vpop.permute.xlu0 %1128
      %v1131 = vmul.f32 %v1114, %v1107
      %v1132 = vmul.f32 %v1119, %v1108
      %v1133 = vmul.f32 %v1124, %v1109
      %v1134 = vmul.f32 %v1129, %v1110
      %v1135 = vpack.c.bf16 %v1072, %v1070
      %v1136 = vpack.c.bf16 %v1076, %v1074
      %v1141 = vunpack.c.l.b16 %v854
      %v1142 = vunpack.c.l.b16 %v855
      %v1143 = vunpack.c.l.b16 %v856
      %v1144 = vunpack.c.l.b16 %v857
      %v1145 = vpack.c.b16 %v1142, %v1141
      %v1146 = vpack.c.b16 %v1144, %v1143
      %1147 = vrot.lane.b32.xlu0 %v1145, 120
      %v1148 = vpop.permute.xlu0 %1147
      %1149 = vrot.lane.b32.xlu0 %v1146, 120
      %v1150 = vpop.permute.xlu0 %1149
      %v1154 = vsel %vm643, %v1135, 0
      %v1157 = vsel %vm643, %v1136, 0
      %1159 = vmatprep.subr.bf16.mxu0 0
      %1160 = vmatpush1.bf16.msra.mxu0 %v1148
      %1161 = vmatprep.subr.bf16.mxu0 0
      %1162 = vmatpush1.bf16.msra.mxu0 %v1150
      %1163 = vmatprep.subr.bf16.mxu0 0
      %1164 = vmatpush1.bf16.msra.mxu0 0
      %1165 = vmatprep.subr.bf16.mxu0 0
      %1166 = vmatpush1.bf16.msra.mxu0 0
      %1167 = vmatprep.subr.bf16.mxu0 0
      %1168 = vmatpush1.bf16.msra.mxu0 0
      %1169 = vmatprep.subr.bf16.mxu0 0
      %1170 = vmatpush1.bf16.msra.mxu0 0
      %1171 = vmatprep.subr.bf16.mxu0 0
      %1172 = vmatpush1.bf16.msra.mxu0 0
      %1173 = vmatprep.subr.bf16.mxu0 0
      %1174 = vmatpush1.bf16.msra.mxu0 0
      %1175 = vmatprep.subr.bf16.mxu0 0
      %1176 = vmatpush1.bf16.msra.mxu0 0
      %1177 = vmatprep.subr.bf16.mxu0 0
      %1178 = vmatpush1.bf16.msra.mxu0 0
      %1179 = vmatprep.subr.bf16.mxu0 0
      %1180 = vmatpush1.bf16.msra.mxu0 0
      %1181 = vmatprep.subr.bf16.mxu0 0
      %1182 = vmatpush1.bf16.msra.mxu0 0
      %1183 = vmatprep.subr.bf16.mxu0 0
      %1184 = vmatpush1.bf16.msra.mxu0 0
      %1185 = vmatprep.subr.bf16.mxu0 0
      %1186 = vmatpush1.bf16.msra.mxu0 0
      %1187 = vmatprep.subr.bf16.mxu0 0
      %1188 = vmatpush1.bf16.msra.mxu0 0
      %1189 = vmatprep.subr.bf16.mxu0 0
      %1190 = vmatpush1.bf16.msra.mxu0 0
      %1191 = vmatprep.mubr.bf16.mxu0 0
      %1192 = vmatmul.mubr.bf16.gmra.mrb[0].mxu0 %v1154
      %v1193 = vpop.f32.mrb[0].mxu0
      %v1194 = vadd.f32 0.0, %v1193
      %v1195 = vpop.f32.mrb[0].mxu0
      %v1196 = vpop.f32.mrb[0].mxu0
      %v1197 = vadd.f32 0.0, %v1196
      %v1198 = vpop.f32.mrb[0].mxu0
      %1199 = vmatprep.mubr.bf16.mxu0 0
      %1200 = vmatmul.mubr.bf16.gmra.mrb[0].mxu0 %v1157
      %v1201 = vpop.f32.mrb[0].mxu0
      %v1202 = vadd.f32 0.0, %v1201
      %v1203 = vpop.f32.mrb[0].mxu0
      %v1204 = vpop.f32.mrb[0].mxu0
      %v1205 = vadd.f32 0.0, %v1204
      %v1206 = vpop.f32.mrb[0].mxu0
      %1207 = vdwg.mxu0
      %v1208 = vadd.f32 %v1131, %v1194
      %v1209 = vadd.f32 %v1132, %v1197
      %v1210 = vadd.f32 %v1133, %v1202
      %v1211 = vadd.f32 %v1134, %v1205
      %1212 = vst.msk [vmem:[%s1106] sm:$0xff] %vm577, %v1208
      %1213 = vst.msk [vmem:[%s1106 + $0x8] sm:$0xff] %vm577, %v1209
      %1214 = vst.msk [vmem:[%s1106 + $0x10] sm:$0xff] %vm577, %v1210
      %1215 = vst.msk [vmem:[%s1106 + $0x18] sm:$0xff] %vm577, %v1211
      %1216 = vst.msk [vmem:[%s1012] sm:$0xff] %vm728, %v1029
      %1217 = vst.msk [vmem:[%s1012 + $0x8] sm:$0xff] %vm728, %v1030
      %1218 = vst.msk [vmem:[%s1012 + $0x10] sm:$0xff] %vm728, %v1031
      %1219 = vst.msk [vmem:[%s1012 + $0x18] sm:$0xff] %vm728, %v1032
      %v1220 = vld [vmem:[%s355] sm:$0xf]
      %v1221 = vld [vmem:[%s355 + $0x4] sm:$0xf]
      %v1222 = vld [vmem:[%s355 + $0x8] sm:$0xf]
      %v1223 = vld [vmem:[%s355 + $0xc] sm:$0xf]
      %v1224 = vmul.bf16 %v1220, 1052065461
      %v1225 = vmul.bf16 %v1221, 1052065461
      %v1226 = vmul.bf16 %v1222, 1052065461
      %v1227 = vmul.bf16 %v1223, 1052065461
      %v1228 = vld [vmem:[%s365] sm:$0xf]
      %v1229 = vld [vmem:[%s365 + $0x4] sm:$0xf]
      %v1230 = vld [vmem:[%s365 + $0x8] sm:$0xf]
      %v1231 = vld [vmem:[%s365 + $0xc] sm:$0xf]
      %v1232 = vld [vmem:[%s375] sm:$0xf]
      %v1233 = vld [vmem:[%s375 + $0x4] sm:$0xf]
      %v1234 = vld [vmem:[%s375 + $0x8] sm:$0xf]
      %v1235 = vld [vmem:[%s375 + $0xc] sm:$0xf]
      %v1236 = vld [vmem:[%s386 + $0x8] sm:$0xf]
      %v1237 = vld [vmem:[%s386 + $0x18] sm:$0xf]
      %v1238 = vld [vmem:[%s386 + $0x28] sm:$0xf]
      %v1239 = vld [vmem:[%s386 + $0x38] sm:$0xf]
      %v1244 = vunpack.c.l.b16 %v1236
      %v1245 = vunpack.c.l.b16 %v1237
      %v1246 = vunpack.c.l.b16 %v1238
      %v1247 = vunpack.c.l.b16 %v1239
      %v1248 = vpack.c.b16 %v1245, %v1244
      %v1249 = vpack.c.b16 %v1247, %v1246
      %1252 = vmatprep.subr.bf16.mxu0 0
      %1253 = vmatpush1.bf16.xpose.msra.mxu0 %v504
      %1254 = vmatprep.subr.bf16.mxu0 0
      %1255 = vmatpush1.bf16.xpose.msra.mxu0 %v505
      %1256 = vmatprep.subr.bf16.mxu0 0
      %1257 = vmatpush1.bf16.xpose.msra.mxu0 0
      %1258 = vmatprep.subr.bf16.mxu0 0
      %1259 = vmatpush1.bf16.xpose.msra.mxu0 0
      %1260 = vmatprep.subr.bf16.mxu0 0
      %1261 = vmatpush1.bf16.xpose.msra.mxu0 0
      %1262 = vmatprep.subr.bf16.mxu0 0
      %1263 = vmatpush1.bf16.xpose.msra.mxu0 0
      %1264 = vmatprep.subr.bf16.mxu0 0
      %1265 = vmatpush1.bf16.xpose.msra.mxu0 0
      %1266 = vmatprep.subr.bf16.mxu0 0
      %1267 = vmatpush1.bf16.xpose.msra.mxu0 0
      %1268 = vmatprep.subr.bf16.mxu0 0
      %1269 = vmatpush1.bf16.xpose.msra.mxu0 0
      %1270 = vmatprep.subr.bf16.mxu0 0
      %1271 = vmatpush1.bf16.xpose.msra.mxu0 0
      %1272 = vmatprep.subr.bf16.mxu0 0
      %1273 = vmatpush1.bf16.xpose.msra.mxu0 0
      %1274 = vmatprep.subr.bf16.mxu0 0
      %1275 = vmatpush1.bf16.xpose.msra.mxu0 0
      %1276 = vmatprep.subr.bf16.mxu0 0
      %1277 = vmatpush1.bf16.xpose.msra.mxu0 0
      %1278 = vmatprep.subr.bf16.mxu0 0
      %1279 = vmatpush1.bf16.xpose.msra.mxu0 0
      %1280 = vmatprep.subr.bf16.mxu0 0
      %1281 = vmatpush1.bf16.xpose.msra.mxu0 0
      %1282 = vmatprep.subr.bf16.mxu0 0
      %1283 = vmatpush1.bf16.xpose.msra.mxu0 0
      %1284 = vmatprep.mubr.bf16.mxu0 0
      %1285 = vmatmul.mubr.bf16.gmra.mrb[0].mxu0 %v1248
      %v1286 = vpop.f32.mrb[0].mxu0
      %v1287 = vadd.f32 0.0, %v1286
      %v1288 = vpop.f32.mrb[0].mxu0
      %v1289 = vpop.f32.mrb[0].mxu0
      %v1290 = vadd.f32 0.0, %v1289
      %v1291 = vpop.f32.mrb[0].mxu0
      %1292 = vmatprep.mubr.bf16.mxu0 0
      %1293 = vmatmul.mubr.bf16.gmra.mrb[0].mxu0 %v1249
      %v1294 = vpop.f32.mrb[0].mxu0
      %v1295 = vadd.f32 0.0, %v1294
      %v1296 = vpop.f32.mrb[0].mxu0
      %v1297 = vpop.f32.mrb[0].mxu0
      %v1298 = vadd.f32 0.0, %v1297
      %v1299 = vpop.f32.mrb[0].mxu0
      %1300 = vdwg.mxu0
      %v1305 = vunpack.c.l.b16 %v1224
      %v1306 = vunpack.c.l.b16 %v1225
      %v1307 = vunpack.c.l.b16 %v1226
      %v1308 = vunpack.c.l.b16 %v1227
      %v1309 = vpack.c.b16 %v1306, %v1305
      %v1310 = vpack.c.b16 %v1308, %v1307
      %1311 = vrot.lane.b32.xlu0 %v1309, 112
      %v1312 = vpop.permute.xlu0 %1311
      %1313 = vrot.lane.b32.xlu0 %v1310, 112
      %v1314 = vpop.permute.xlu0 %1313
      %v1319 = vunpack.c.l.b16 %v1228
      %v1320 = vunpack.c.l.b16 %v1229
      %v1321 = vunpack.c.l.b16 %v1230
      %v1322 = vunpack.c.l.b16 %v1231
      %v1323 = vpack.c.b16 %v1320, %v1319
      %v1324 = vpack.c.b16 %v1322, %v1321
      %1325 = vrot.lane.b32.xlu0 %v1323, 112
      %v1326 = vpop.permute.xlu0 %1325
      %1327 = vrot.lane.b32.xlu0 %v1324, 112
      %v1328 = vpop.permute.xlu0 %1327
      %v1330 = vsel %vm577, %v1312, 0
      %v1333 = vsel %vm577, %v1314, 0
      %v1336 = vsel %vm577, %v1326, 0
      %v1339 = vsel %vm577, %v1328, 0
      %1341 = vmatprep.subr.bf16.mxu0 0
      %1342 = vmatpush1.bf16.xpose.msra.mxu0 %v1336
      %1343 = vmatprep.subr.bf16.mxu0 0
      %1344 = vmatpush1.bf16.xpose.msra.mxu0 %v1339
      %1345 = vmatprep.subr.bf16.mxu0 0
      %1346 = vmatpush1.bf16.xpose.msra.mxu0 0
      %1347 = vmatprep.subr.bf16.mxu0 0
      %1348 = vmatpush1.bf16.xpose.msra.mxu0 0
      %1349 = vmatprep.subr.bf16.mxu0 0
      %1350 = vmatpush1.bf16.xpose.msra.mxu0 0
      %1351 = vmatprep.subr.bf16.mxu0 0
      %1352 = vmatpush1.bf16.xpose.msra.mxu0 0
      %1353 = vmatprep.subr.bf16.mxu0 0
      %1354 = vmatpush1.bf16.xpose.msra.mxu0 0
      %1355 = vmatprep.subr.bf16.mxu0 0
      %1356 = vmatpush1.bf16.xpose.msra.mxu0 0
      %1357 = vmatprep.subr.bf16.mxu0 0
      %1358 = vmatpush1.bf16.xpose.msra.mxu0 0
      %1359 = vmatprep.subr.bf16.mxu0 0
      %1360 = vmatpush1.bf16.xpose.msra.mxu0 0
      %1361 = vmatprep.subr.bf16.mxu0 0
      %1362 = vmatpush1.bf16.xpose.msra.mxu0 0
      %1363 = vmatprep.subr.bf16.mxu0 0
      %1364 = vmatpush1.bf16.xpose.msra.mxu0 0
      %1365 = vmatprep.subr.bf16.mxu0 0
      %1366 = vmatpush1.bf16.xpose.msra.mxu0 0
      %1367 = vmatprep.subr.bf16.mxu0 0
      %1368 = vmatpush1.bf16.xpose.msra.mxu0 0
      %1369 = vmatprep.subr.bf16.mxu0 0
      %1370 = vmatpush1.bf16.xpose.msra.mxu0 0
      %1371 = vmatprep.subr.bf16.mxu0 0
      %1372 = vmatpush1.bf16.xpose.msra.mxu0 0
      %1373 = vmatprep.mubr.bf16.mxu0 0
      %1374 = vmatmul.mubr.bf16.gmra.mrb[0].mxu0 %v1330
      %v1375 = vpop.f32.mrb[0].mxu0
      %v1376 = vadd.f32 %v1287, %v1375
      %v1377 = vpop.f32.mrb[0].mxu0
      %v1378 = vpop.f32.mrb[0].mxu0
      %v1379 = vadd.f32 %v1290, %v1378
      %v1380 = vpop.f32.mrb[0].mxu0
      %1381 = vmatprep.mubr.bf16.mxu0 0
      %1382 = vmatmul.mubr.bf16.gmra.mrb[0].mxu0 %v1333
      %v1383 = vpop.f32.mrb[0].mxu0
      %v1384 = vadd.f32 %v1295, %v1383
      %v1385 = vpop.f32.mrb[0].mxu0
      %v1386 = vpop.f32.mrb[0].mxu0
      %v1387 = vadd.f32 %v1298, %v1386
      %v1388 = vpop.f32.mrb[0].mxu0
      %1389 = vdwg.mxu0
      %s1390 = scalar_lea.vmem [#allocation2], 64
      %v1391 = vld [vmem:[%s1390] sm:$0xff]
      %v1392 = vld [vmem:[%s1390 + $0x8] sm:$0xff]
      %v1393 = vld [vmem:[%s1390 + $0x10] sm:$0xff]
      %v1394 = vld [vmem:[%s1390 + $0x18] sm:$0xff]
      %v1395 = vsel %vm643, %v1376, -inf
      %1396 = vmax.xlane.f32.xlu0 %v1395
      %v1397 = vpop.xlane.xlu0 %1396
      %v1398 = vsel %vm643, %v1379, -inf
      %1399 = vmax.xlane.f32.xlu0 %v1398
      %v1400 = vpop.xlane.xlu0 %1399
      %v1401 = vsel %vm643, %v1384, -inf
      %1402 = vmax.xlane.f32.xlu0 %v1401
      %v1403 = vpop.xlane.xlu0 %1402
      %v1404 = vsel %vm643, %v1387, -inf
      %1405 = vmax.xlane.f32.xlu0 %v1404
      %v1406 = vpop.xlane.xlu0 %1405
      %v1407 = vmax.f32 %v1391, %v1397
      %v1408 = vmax.f32 %v1392, %v1400
      %v1409 = vmax.f32 %v1393, %v1403
      %v1410 = vmax.f32 %v1394, %v1406
      %v1411 = vsub.f32 %v1391, %v1407
      %v1412 = vsub.f32 %v1392, %v1408
      %v1413 = vsub.f32 %v1393, %v1409
      %v1414 = vsub.f32 %v1394, %v1410
      %v1415 = vmul.f32 %v1411, 1.442695
      %v1416 = vpow.pop %v1415
      %v1417 = vmul.f32 %v1412, 1.442695
      %v1418 = vpow.pop %v1417
      %v1419 = vmul.f32 %v1413, 1.442695
      %v1420 = vpow.pop %v1419
      %v1421 = vmul.f32 %v1414, 1.442695
      %v1422 = vpow.pop %v1421
      %1424 = vset.pattern.permute.xlu0 0
      %1425 = vperm.xlu0 %1424, %v1407
      %v1426 = vpop.permute.xlu0 %1425
      %1429 = vset.pattern.permute.xlu0 0
      %1430 = vperm.xlu0 %1429, %v1408
      %v1431 = vpop.permute.xlu0 %1430
      %1434 = vset.pattern.permute.xlu0 0
      %1435 = vperm.xlu0 %1434, %v1409
      %v1436 = vpop.permute.xlu0 %1435
      %1439 = vset.pattern.permute.xlu0 0
      %1440 = vperm.xlu0 %1439, %v1410
      %v1441 = vpop.permute.xlu0 %1440
      %v1443 = vsub.f32 %v1376, %v1426
      %v1444 = vsub.f32 %v1379, %v1431
      %v1445 = vsub.f32 %v1384, %v1436
      %v1446 = vsub.f32 %v1387, %v1441
      %v1447 = vmul.f32 %v1443, 1.442695
      %v1448 = vpow.pop %v1447
      %v1449 = vmul.f32 %v1444, 1.442695
      %v1450 = vpow.pop %v1449
      %v1451 = vmul.f32 %v1445, 1.442695
      %v1452 = vpow.pop %v1451
      %v1453 = vmul.f32 %v1446, 1.442695
      %v1454 = vpow.pop %v1453
      %s1455 = scalar_lea.vmem [#allocation3], 64
      %v1456 = vld [vmem:[%s1455] sm:$0xff]
      %v1457 = vld [vmem:[%s1455 + $0x8] sm:$0xff]
      %v1458 = vld [vmem:[%s1455 + $0x10] sm:$0xff]
      %v1459 = vld [vmem:[%s1455 + $0x18] sm:$0xff]
      %v1460 = vmul.f32 %v1416, %v1456
      %v1461 = vmul.f32 %v1418, %v1457
      %v1462 = vmul.f32 %v1420, %v1458
      %v1463 = vmul.f32 %v1422, %v1459
      %v1464 = vsel %vm643, %v1448, 0.0
      %1465 = vadd.xlane.f32.xlu0 %v1464
      %v1466 = vpop.xlane.xlu0 %1465
      %v1467 = vsel %vm643, %v1450, 0.0
      %1468 = vadd.xlane.f32.xlu0 %v1467
      %v1469 = vpop.xlane.xlu0 %1468
      %v1470 = vsel %vm643, %v1452, 0.0
      %1471 = vadd.xlane.f32.xlu0 %v1470
      %v1472 = vpop.xlane.xlu0 %1471
      %v1473 = vsel %vm643, %v1454, 0.0
      %1474 = vadd.xlane.f32.xlu0 %v1473
      %v1475 = vpop.xlane.xlu0 %1474
      %v1476 = vadd.f32 %v1460, %v1466
      %v1477 = vadd.f32 %v1461, %v1469
      %v1478 = vadd.f32 %v1462, %v1472
      %v1479 = vadd.f32 %v1463, %v1475
      %1480 = vst.msk [vmem:[%s1455] sm:$0xff] %vm728, %v1476
      %1481 = vst.msk [vmem:[%s1455 + $0x8] sm:$0xff] %vm728, %v1477
      %1482 = vst.msk [vmem:[%s1455 + $0x10] sm:$0xff] %vm728, %v1478
      %1483 = vst.msk [vmem:[%s1455 + $0x18] sm:$0xff] %vm728, %v1479
      %s1484 = scalar_lea.vmem [#allocation4], 64
      %v1485 = vld [vmem:[%s1484] sm:$0xff]
      %v1486 = vld [vmem:[%s1484 + $0x8] sm:$0xff]
      %v1487 = vld [vmem:[%s1484 + $0x10] sm:$0xff]
      %v1488 = vld [vmem:[%s1484 + $0x18] sm:$0xff]
      %1490 = vset.pattern.permute.xlu0 0
      %1491 = vperm.xlu0 %1490, %v1416
      %v1492 = vpop.permute.xlu0 %1491
      %1495 = vset.pattern.permute.xlu0 0
      %1496 = vperm.xlu0 %1495, %v1418
      %v1497 = vpop.permute.xlu0 %1496
      %1500 = vset.pattern.permute.xlu0 0
      %1501 = vperm.xlu0 %1500, %v1420
      %v1502 = vpop.permute.xlu0 %1501
      %1505 = vset.pattern.permute.xlu0 0
      %1506 = vperm.xlu0 %1505, %v1422
      %v1507 = vpop.permute.xlu0 %1506
      %v1509 = vmul.f32 %v1492, %v1485
      %v1510 = vmul.f32 %v1497, %v1486
      %v1511 = vmul.f32 %v1502, %v1487
      %v1512 = vmul.f32 %v1507, %v1488
      %v1513 = vpack.c.bf16 %v1450, %v1448
      %v1514 = vpack.c.bf16 %v1454, %v1452
      %v1519 = vunpack.c.l.b16 %v1232
      %v1520 = vunpack.c.l.b16 %v1233
      %v1521 = vunpack.c.l.b16 %v1234
      %v1522 = vunpack.c.l.b16 %v1235
      %v1523 = vpack.c.b16 %v1520, %v1519
      %v1524 = vpack.c.b16 %v1522, %v1521
      %1525 = vrot.lane.b32.xlu0 %v1523, 112
      %v1526 = vpop.permute.xlu0 %1525
      %1527 = vrot.lane.b32.xlu0 %v1524, 112
      %v1528 = vpop.permute.xlu0 %1527
      %v1532 = vsel %vm643, %v1513, 0
      %v1535 = vsel %vm643, %v1514, 0
      %1537 = vmatprep.subr.bf16.mxu0 0
      %1538 = vmatpush1.bf16.msra.mxu0 %v1526
      %1539 = vmatprep.subr.bf16.mxu0 0
      %1540 = vmatpush1.bf16.msra.mxu0 %v1528
      %1541 = vmatprep.subr.bf16.mxu0 0
      %1542 = vmatpush1.bf16.msra.mxu0 0
      %1543 = vmatprep.subr.bf16.mxu0 0
      %1544 = vmatpush1.bf16.msra.mxu0 0
      %1545 = vmatprep.subr.bf16.mxu0 0
      %1546 = vmatpush1.bf16.msra.mxu0 0
      %1547 = vmatprep.subr.bf16.mxu0 0
      %1548 = vmatpush1.bf16.msra.mxu0 0
      %1549 = vmatprep.subr.bf16.mxu0 0
      %1550 = vmatpush1.bf16.msra.mxu0 0
      %1551 = vmatprep.subr.bf16.mxu0 0
      %1552 = vmatpush1.bf16.msra.mxu0 0
      %1553 = vmatprep.subr.bf16.mxu0 0
      %1554 = vmatpush1.bf16.msra.mxu0 0
      %1555 = vmatprep.subr.bf16.mxu0 0
      %1556 = vmatpush1.bf16.msra.mxu0 0
      %1557 = vmatprep.subr.bf16.mxu0 0
      %1558 = vmatpush1.bf16.msra.mxu0 0
      %1559 = vmatprep.subr.bf16.mxu0 0
      %1560 = vmatpush1.bf16.msra.mxu0 0
      %1561 = vmatprep.subr.bf16.mxu0 0
      %1562 = vmatpush1.bf16.msra.mxu0 0
      %1563 = vmatprep.subr.bf16.mxu0 0
      %1564 = vmatpush1.bf16.msra.mxu0 0
      %1565 = vmatprep.subr.bf16.mxu0 0
      %1566 = vmatpush1.bf16.msra.mxu0 0
      %1567 = vmatprep.subr.bf16.mxu0 0
      %1568 = vmatpush1.bf16.msra.mxu0 0
      %1569 = vmatprep.mubr.bf16.mxu0 0
      %1570 = vmatmul.mubr.bf16.gmra.mrb[0].mxu0 %v1532
      %v1571 = vpop.f32.mrb[0].mxu0
      %v1572 = vadd.f32 0.0, %v1571
      %v1573 = vpop.f32.mrb[0].mxu0
      %v1574 = vpop.f32.mrb[0].mxu0
      %v1575 = vadd.f32 0.0, %v1574
      %v1576 = vpop.f32.mrb[0].mxu0
      %1577 = vmatprep.mubr.bf16.mxu0 0
      %1578 = vmatmul.mubr.bf16.gmra.mrb[0].mxu0 %v1535
      %v1579 = vpop.f32.mrb[0].mxu0
      %v1580 = vadd.f32 0.0, %v1579
      %v1581 = vpop.f32.mrb[0].mxu0
      %v1582 = vpop.f32.mrb[0].mxu0
      %v1583 = vadd.f32 0.0, %v1582
      %v1584 = vpop.f32.mrb[0].mxu0
      %1585 = vdwg.mxu0
      %v1586 = vadd.f32 %v1509, %v1572
      %v1587 = vadd.f32 %v1510, %v1575
      %v1588 = vadd.f32 %v1511, %v1580
      %v1589 = vadd.f32 %v1512, %v1583
      %1590 = vst.msk [vmem:[%s1484] sm:$0xff] %vm577, %v1586
      %1591 = vst.msk [vmem:[%s1484 + $0x8] sm:$0xff] %vm577, %v1587
      %1592 = vst.msk [vmem:[%s1484 + $0x10] sm:$0xff] %vm577, %v1588
      %1593 = vst.msk [vmem:[%s1484 + $0x18] sm:$0xff] %vm577, %v1589
      %1594 = vst.msk [vmem:[%s1390] sm:$0xff] %vm728, %v1407
      %1595 = vst.msk [vmem:[%s1390 + $0x8] sm:$0xff] %vm728, %v1408
      %1596 = vst.msk [vmem:[%s1390 + $0x10] sm:$0xff] %vm728, %v1409
      %1597 = vst.msk [vmem:[%s1390 + $0x18] sm:$0xff] %vm728, %v1410
      %v1598 = vld [vmem:[%s355] sm:$0xf]
      %v1599 = vld [vmem:[%s355 + $0x4] sm:$0xf]
      %v1600 = vld [vmem:[%s355 + $0x8] sm:$0xf]
      %v1601 = vld [vmem:[%s355 + $0xc] sm:$0xf]
      %v1602 = vmul.bf16 %v1598, 1052065461
      %v1603 = vmul.bf16 %v1599, 1052065461
      %v1604 = vmul.bf16 %v1600, 1052065461
      %v1605 = vmul.bf16 %v1601, 1052065461
      %v1606 = vld [vmem:[%s365] sm:$0xf]
      %v1607 = vld [vmem:[%s365 + $0x4] sm:$0xf]
      %v1608 = vld [vmem:[%s365 + $0x8] sm:$0xf]
      %v1609 = vld [vmem:[%s365 + $0xc] sm:$0xf]
      %v1610 = vld [vmem:[%s375] sm:$0xf]
      %v1611 = vld [vmem:[%s375 + $0x4] sm:$0xf]
      %v1612 = vld [vmem:[%s375 + $0x8] sm:$0xf]
      %v1613 = vld [vmem:[%s375 + $0xc] sm:$0xf]
      %v1614 = vld [vmem:[%s386 + $0xc] sm:$0xf]
      %v1615 = vld [vmem:[%s386 + $0x1c] sm:$0xf]
      %v1616 = vld [vmem:[%s386 + $0x2c] sm:$0xf]
      %v1617 = vld [vmem:[%s386 + $0x3c] sm:$0xf]
      %v1622 = vunpack.c.l.b16 %v1614
      %v1623 = vunpack.c.l.b16 %v1615
      %v1624 = vunpack.c.l.b16 %v1616
      %v1625 = vunpack.c.l.b16 %v1617
      %v1626 = vpack.c.b16 %v1623, %v1622
      %v1627 = vpack.c.b16 %v1625, %v1624
      %1630 = vmatprep.subr.bf16.mxu0 0
      %1631 = vmatpush1.bf16.xpose.msra.mxu0 %v504
      %1632 = vmatprep.subr.bf16.mxu0 0
      %1633 = vmatpush1.bf16.xpose.msra.mxu0 %v505
      %1634 = vmatprep.subr.bf16.mxu0 0
      %1635 = vmatpush1.bf16.xpose.msra.mxu0 0
      %1636 = vmatprep.subr.bf16.mxu0 0
      %1637 = vmatpush1.bf16.xpose.msra.mxu0 0
      %1638 = vmatprep.subr.bf16.mxu0 0
      %1639 = vmatpush1.bf16.xpose.msra.mxu0 0
      %1640 = vmatprep.subr.bf16.mxu0 0
      %1641 = vmatpush1.bf16.xpose.msra.mxu0 0
      %1642 = vmatprep.subr.bf16.mxu0 0
      %1643 = vmatpush1.bf16.xpose.msra.mxu0 0
      %1644 = vmatprep.subr.bf16.mxu0 0
      %1645 = vmatpush1.bf16.xpose.msra.mxu0 0
      %1646 = vmatprep.subr.bf16.mxu0 0
      %1647 = vmatpush1.bf16.xpose.msra.mxu0 0
      %1648 = vmatprep.subr.bf16.mxu0 0
      %1649 = vmatpush1.bf16.xpose.msra.mxu0 0
      %1650 = vmatprep.subr.bf16.mxu0 0
      %1651 = vmatpush1.bf16.xpose.msra.mxu0 0
      %1652 = vmatprep.subr.bf16.mxu0 0
      %1653 = vmatpush1.bf16.xpose.msra.mxu0 0
      %1654 = vmatprep.subr.bf16.mxu0 0
      %1655 = vmatpush1.bf16.xpose.msra.mxu0 0
      %1656 = vmatprep.subr.bf16.mxu0 0
      %1657 = vmatpush1.bf16.xpose.msra.mxu0 0
      %1658 = vmatprep.subr.bf16.mxu0 0
      %1659 = vmatpush1.bf16.xpose.msra.mxu0 0
      %1660 = vmatprep.subr.bf16.mxu0 0
      %1661 = vmatpush1.bf16.xpose.msra.mxu0 0
      %1662 = vmatprep.mubr.bf16.mxu0 0
      %1663 = vmatmul.mubr.bf16.gmra.mrb[0].mxu0 %v1626
      %v1664 = vpop.f32.mrb[0].mxu0
      %v1665 = vadd.f32 0.0, %v1664
      %v1666 = vpop.f32.mrb[0].mxu0
      %v1667 = vpop.f32.mrb[0].mxu0
      %v1668 = vadd.f32 0.0, %v1667
      %v1669 = vpop.f32.mrb[0].mxu0
      %1670 = vmatprep.mubr.bf16.mxu0 0
      %1671 = vmatmul.mubr.bf16.gmra.mrb[0].mxu0 %v1627
      %v1672 = vpop.f32.mrb[0].mxu0
      %v1673 = vadd.f32 0.0, %v1672
      %v1674 = vpop.f32.mrb[0].mxu0
      %v1675 = vpop.f32.mrb[0].mxu0
      %v1676 = vadd.f32 0.0, %v1675
      %v1677 = vpop.f32.mrb[0].mxu0
      %1678 = vdwg.mxu0
      %v1683 = vunpack.c.l.b16 %v1602
      %v1684 = vunpack.c.l.b16 %v1603
      %v1685 = vunpack.c.l.b16 %v1604
      %v1686 = vunpack.c.l.b16 %v1605
      %v1687 = vpack.c.b16 %v1684, %v1683
      %v1688 = vpack.c.b16 %v1686, %v1685
      %1689 = vrot.lane.b32.xlu0 %v1687, 104
      %v1690 = vpop.permute.xlu0 %1689
      %1691 = vrot.lane.b32.xlu0 %v1688, 104
      %v1692 = vpop.permute.xlu0 %1691
      %v1697 = vunpack.c.l.b16 %v1606
      %v1698 = vunpack.c.l.b16 %v1607
      %v1699 = vunpack.c.l.b16 %v1608
      %v1700 = vunpack.c.l.b16 %v1609
      %v1701 = vpack.c.b16 %v1698, %v1697
      %v1702 = vpack.c.b16 %v1700, %v1699
      %1703 = vrot.lane.b32.xlu0 %v1701, 104
      %v1704 = vpop.permute.xlu0 %1703
      %1705 = vrot.lane.b32.xlu0 %v1702, 104
      %v1706 = vpop.permute.xlu0 %1705
      %v1708 = vsel %vm577, %v1690, 0
      %v1711 = vsel %vm577, %v1692, 0
      %v1714 = vsel %vm577, %v1704, 0
      %v1717 = vsel %vm577, %v1706, 0
      %1719 = vmatprep.subr.bf16.mxu0 0
      %1720 = vmatpush1.bf16.xpose.msra.mxu0 %v1714
      %1721 = vmatprep.subr.bf16.mxu0 0
      %1722 = vmatpush1.bf16.xpose.msra.mxu0 %v1717
      %1723 = vmatprep.subr.bf16.mxu0 0
      %1724 = vmatpush1.bf16.xpose.msra.mxu0 0
      %1725 = vmatprep.subr.bf16.mxu0 0
      %1726 = vmatpush1.bf16.xpose.msra.mxu0 0
      %1727 = vmatprep.subr.bf16.mxu0 0
      %1728 = vmatpush1.bf16.xpose.msra.mxu0 0
      %1729 = vmatprep.subr.bf16.mxu0 0
      %1730 = vmatpush1.bf16.xpose.msra.mxu0 0
      %1731 = vmatprep.subr.bf16.mxu0 0
      %1732 = vmatpush1.bf16.xpose.msra.mxu0 0
      %1733 = vmatprep.subr.bf16.mxu0 0
      %1734 = vmatpush1.bf16.xpose.msra.mxu0 0
      %1735 = vmatprep.subr.bf16.mxu0 0
      %1736 = vmatpush1.bf16.xpose.msra.mxu0 0
      %1737 = vmatprep.subr.bf16.mxu0 0
      %1738 = vmatpush1.bf16.xpose.msra.mxu0 0
      %1739 = vmatprep.subr.bf16.mxu0 0
      %1740 = vmatpush1.bf16.xpose.msra.mxu0 0
      %1741 = vmatprep.subr.bf16.mxu0 0
      %1742 = vmatpush1.bf16.xpose.msra.mxu0 0
      %1743 = vmatprep.subr.bf16.mxu0 0
      %1744 = vmatpush1.bf16.xpose.msra.mxu0 0
      %1745 = vmatprep.subr.bf16.mxu0 0
      %1746 = vmatpush1.bf16.xpose.msra.mxu0 0
      %1747 = vmatprep.subr.bf16.mxu0 0
      %1748 = vmatpush1.bf16.xpose.msra.mxu0 0
      %1749 = vmatprep.subr.bf16.mxu0 0
      %1750 = vmatpush1.bf16.xpose.msra.mxu0 0
      %1751 = vmatprep.mubr.bf16.mxu0 0
      %1752 = vmatmul.mubr.bf16.gmra.mrb[0].mxu0 %v1708
      %v1753 = vpop.f32.mrb[0].mxu0
      %v1754 = vadd.f32 %v1665, %v1753
      %v1755 = vpop.f32.mrb[0].mxu0
      %v1756 = vpop.f32.mrb[0].mxu0
      %v1757 = vadd.f32 %v1668, %v1756
      %v1758 = vpop.f32.mrb[0].mxu0
      %1759 = vmatprep.mubr.bf16.mxu0 0
      %1760 = vmatmul.mubr.bf16.gmra.mrb[0].mxu0 %v1711
      %v1761 = vpop.f32.mrb[0].mxu0
      %v1762 = vadd.f32 %v1673, %v1761
      %v1763 = vpop.f32.mrb[0].mxu0
      %v1764 = vpop.f32.mrb[0].mxu0
      %v1765 = vadd.f32 %v1676, %v1764
      %v1766 = vpop.f32.mrb[0].mxu0
      %1767 = vdwg.mxu0
      %s1768 = scalar_lea.vmem [#allocation2], 96
      %v1769 = vld [vmem:[%s1768] sm:$0xff]
      %v1770 = vld [vmem:[%s1768 + $0x8] sm:$0xff]
      %v1771 = vld [vmem:[%s1768 + $0x10] sm:$0xff]
      %v1772 = vld [vmem:[%s1768 + $0x18] sm:$0xff]
      %v1773 = vsel %vm643, %v1754, -inf
      %1774 = vmax.xlane.f32.xlu0 %v1773
      %v1775 = vpop.xlane.xlu0 %1774
      %v1776 = vsel %vm643, %v1757, -inf
      %1777 = vmax.xlane.f32.xlu0 %v1776
      %v1778 = vpop.xlane.xlu0 %1777
      %v1779 = vsel %vm643, %v1762, -inf
      %1780 = vmax.xlane.f32.xlu0 %v1779
      %v1781 = vpop.xlane.xlu0 %1780
      %v1782 = vsel %vm643, %v1765, -inf
      %1783 = vmax.xlane.f32.xlu0 %v1782
      %v1784 = vpop.xlane.xlu0 %1783
      %v1785 = vmax.f32 %v1769, %v1775
      %v1786 = vmax.f32 %v1770, %v1778
      %v1787 = vmax.f32 %v1771, %v1781
      %v1788 = vmax.f32 %v1772, %v1784
      %v1789 = vsub.f32 %v1769, %v1785
      %v1790 = vsub.f32 %v1770, %v1786
      %v1791 = vsub.f32 %v1771, %v1787
      %v1792 = vsub.f32 %v1772, %v1788
      %v1793 = vmul.f32 %v1789, 1.442695
      %v1794 = vpow.pop %v1793
      %v1795 = vmul.f32 %v1790, 1.442695
      %v1796 = vpow.pop %v1795
      %v1797 = vmul.f32 %v1791, 1.442695
      %v1798 = vpow.pop %v1797
      %v1799 = vmul.f32 %v1792, 1.442695
      %v1800 = vpow.pop %v1799
      %1802 = vset.pattern.permute.xlu0 0
      %1803 = vperm.xlu0 %1802, %v1785
      %v1804 = vpop.permute.xlu0 %1803
      %1807 = vset.pattern.permute.xlu0 0
      %1808 = vperm.xlu0 %1807, %v1786
      %v1809 = vpop.permute.xlu0 %1808
      %1812 = vset.pattern.permute.xlu0 0
      %1813 = vperm.xlu0 %1812, %v1787
      %v1814 = vpop.permute.xlu0 %1813
      %1817 = vset.pattern.permute.xlu0 0
      %1818 = vperm.xlu0 %1817, %v1788
      %v1819 = vpop.permute.xlu0 %1818
      %v1821 = vsub.f32 %v1754, %v1804
      %v1822 = vsub.f32 %v1757, %v1809
      %v1823 = vsub.f32 %v1762, %v1814
      %v1824 = vsub.f32 %v1765, %v1819
      %v1825 = vmul.f32 %v1821, 1.442695
      %v1826 = vpow.pop %v1825
      %v1827 = vmul.f32 %v1822, 1.442695
      %v1828 = vpow.pop %v1827
      %v1829 = vmul.f32 %v1823, 1.442695
      %v1830 = vpow.pop %v1829
      %v1831 = vmul.f32 %v1824, 1.442695
      %v1832 = vpow.pop %v1831
      %s1833 = scalar_lea.vmem [#allocation3], 96
      %v1834 = vld [vmem:[%s1833] sm:$0xff]
      %v1835 = vld [vmem:[%s1833 + $0x8] sm:$0xff]
      %v1836 = vld [vmem:[%s1833 + $0x10] sm:$0xff]
      %v1837 = vld [vmem:[%s1833 + $0x18] sm:$0xff]
      %v1838 = vmul.f32 %v1794, %v1834
      %v1839 = vmul.f32 %v1796, %v1835
      %v1840 = vmul.f32 %v1798, %v1836
      %v1841 = vmul.f32 %v1800, %v1837
      %v1842 = vsel %vm643, %v1826, 0.0
      %1843 = vadd.xlane.f32.xlu0 %v1842
      %v1844 = vpop.xlane.xlu0 %1843
      %v1845 = vsel %vm643, %v1828, 0.0
      %1846 = vadd.xlane.f32.xlu0 %v1845
      %v1847 = vpop.xlane.xlu0 %1846
      %v1848 = vsel %vm643, %v1830, 0.0
      %1849 = vadd.xlane.f32.xlu0 %v1848
      %v1850 = vpop.xlane.xlu0 %1849
      %v1851 = vsel %vm643, %v1832, 0.0
      %1852 = vadd.xlane.f32.xlu0 %v1851
      %v1853 = vpop.xlane.xlu0 %1852
      %v1854 = vadd.f32 %v1838, %v1844
      %v1855 = vadd.f32 %v1839, %v1847
      %v1856 = vadd.f32 %v1840, %v1850
      %v1857 = vadd.f32 %v1841, %v1853
      %1858 = vst.msk [vmem:[%s1833] sm:$0xff] %vm728, %v1854
      %1859 = vst.msk [vmem:[%s1833 + $0x8] sm:$0xff] %vm728, %v1855
      %1860 = vst.msk [vmem:[%s1833 + $0x10] sm:$0xff] %vm728, %v1856
      %1861 = vst.msk [vmem:[%s1833 + $0x18] sm:$0xff] %vm728, %v1857
      %s1862 = scalar_lea.vmem [#allocation4], 96
      %v1863 = vld [vmem:[%s1862] sm:$0xff]
      %v1864 = vld [vmem:[%s1862 + $0x8] sm:$0xff]
      %v1865 = vld [vmem:[%s1862 + $0x10] sm:$0xff]
      %v1866 = vld [vmem:[%s1862 + $0x18] sm:$0xff]
      %1868 = vset.pattern.permute.xlu0 0
      %1869 = vperm.xlu0 %1868, %v1794
      %v1870 = vpop.permute.xlu0 %1869
      %1873 = vset.pattern.permute.xlu0 0
      %1874 = vperm.xlu0 %1873, %v1796
      %v1875 = vpop.permute.xlu0 %1874
      %1878 = vset.pattern.permute.xlu0 0
      %1879 = vperm.xlu0 %1878, %v1798
      %v1880 = vpop.permute.xlu0 %1879
      %1883 = vset.pattern.permute.xlu0 0
      %1884 = vperm.xlu0 %1883, %v1800
      %v1885 = vpop.permute.xlu0 %1884
      %v1887 = vmul.f32 %v1870, %v1863
      %v1888 = vmul.f32 %v1875, %v1864
      %v1889 = vmul.f32 %v1880, %v1865
      %v1890 = vmul.f32 %v1885, %v1866
      %v1891 = vpack.c.bf16 %v1828, %v1826
      %v1892 = vpack.c.bf16 %v1832, %v1830
      %v1897 = vunpack.c.l.b16 %v1610
      %v1898 = vunpack.c.l.b16 %v1611
      %v1899 = vunpack.c.l.b16 %v1612
      %v1900 = vunpack.c.l.b16 %v1613
      %v1901 = vpack.c.b16 %v1898, %v1897
      %v1902 = vpack.c.b16 %v1900, %v1899
      %1903 = vrot.lane.b32.xlu0 %v1901, 104
      %v1904 = vpop.permute.xlu0 %1903
      %1905 = vrot.lane.b32.xlu0 %v1902, 104
      %v1906 = vpop.permute.xlu0 %1905
      %v1910 = vsel %vm643, %v1891, 0
      %v1913 = vsel %vm643, %v1892, 0
      %1915 = vmatprep.subr.bf16.mxu0 0
      %1916 = vmatpush1.bf16.msra.mxu0 %v1904
      %1917 = vmatprep.subr.bf16.mxu0 0
      %1918 = vmatpush1.bf16.msra.mxu0 %v1906
      %1919 = vmatprep.subr.bf16.mxu0 0
      %1920 = vmatpush1.bf16.msra.mxu0 0
      %1921 = vmatprep.subr.bf16.mxu0 0
      %1922 = vmatpush1.bf16.msra.mxu0 0
      %1923 = vmatprep.subr.bf16.mxu0 0
      %1924 = vmatpush1.bf16.msra.mxu0 0
      %1925 = vmatprep.subr.bf16.mxu0 0
      %1926 = vmatpush1.bf16.msra.mxu0 0
      %1927 = vmatprep.subr.bf16.mxu0 0
      %1928 = vmatpush1.bf16.msra.mxu0 0
      %1929 = vmatprep.subr.bf16.mxu0 0
      %1930 = vmatpush1.bf16.msra.mxu0 0
      %1931 = vmatprep.subr.bf16.mxu0 0
      %1932 = vmatpush1.bf16.msra.mxu0 0
      %1933 = vmatprep.subr.bf16.mxu0 0
      %1934 = vmatpush1.bf16.msra.mxu0 0
      %1935 = vmatprep.subr.bf16.mxu0 0
      %1936 = vmatpush1.bf16.msra.mxu0 0
      %1937 = vmatprep.subr.bf16.mxu0 0
      %1938 = vmatpush1.bf16.msra.mxu0 0
      %1939 = vmatprep.subr.bf16.mxu0 0
      %1940 = vmatpush1.bf16.msra.mxu0 0
      %1941 = vmatprep.subr.bf16.mxu0 0
      %1942 = vmatpush1.bf16.msra.mxu0 0
      %1943 = vmatprep.subr.bf16.mxu0 0
      %1944 = vmatpush1.bf16.msra.mxu0 0
      %1945 = vmatprep.subr.bf16.mxu0 0
      %1946 = vmatpush1.bf16.msra.mxu0 0
      %1947 = vmatprep.mubr.bf16.mxu0 0
      %1948 = vmatmul.mubr.bf16.gmra.mrb[0].mxu0 %v1910
      %v1949 = vpop.f32.mrb[0].mxu0
      %v1950 = vadd.f32 0.0, %v1949
      %v1951 = vpop.f32.mrb[0].mxu0
      %v1952 = vpop.f32.mrb[0].mxu0
      %v1953 = vadd.f32 0.0, %v1952
      %v1954 = vpop.f32.mrb[0].mxu0
      %1955 = vmatprep.mubr.bf16.mxu0 0
      %1956 = vmatmul.mubr.bf16.gmra.mrb[0].mxu0 %v1913
      %v1957 = vpop.f32.mrb[0].mxu0
      %v1958 = vadd.f32 0.0, %v1957
      %v1959 = vpop.f32.mrb[0].mxu0
      %v1960 = vpop.f32.mrb[0].mxu0
      %v1961 = vadd.f32 0.0, %v1960
      %v1962 = vpop.f32.mrb[0].mxu0
      %1963 = vdwg.mxu0
      %v1964 = vadd.f32 %v1887, %v1950
      %v1965 = vadd.f32 %v1888, %v1953
      %v1966 = vadd.f32 %v1889, %v1958
      %v1967 = vadd.f32 %v1890, %v1961
      %1968 = vst.msk [vmem:[%s1862] sm:$0xff] %vm577, %v1964
      %1969 = vst.msk [vmem:[%s1862 + $0x8] sm:$0xff] %vm577, %v1965
      %1970 = vst.msk [vmem:[%s1862 + $0x10] sm:$0xff] %vm577, %v1966
      %1971 = vst.msk [vmem:[%s1862 + $0x18] sm:$0xff] %vm577, %v1967
      %1972 = vst.msk [vmem:[%s1768] sm:$0xff] %vm728, %v1785
      %1973 = vst.msk [vmem:[%s1768 + $0x8] sm:$0xff] %vm728, %v1786
      %1974 = vst.msk [vmem:[%s1768 + $0x10] sm:$0xff] %vm728, %v1787
      %1975 = vst.msk [vmem:[%s1768 + $0x18] sm:$0xff] %vm728, %v1788
      // Predicated region
      $region45: #{attention_rel_pos_forward.8} parent=39 // pred_check
        %p1976 = pneg %p406
      $region46: #{attention_rel_pos_forward.8} parent=39 // pred_check_branch
        %1978 = sbr.rel (%p1976) target = $region48
      $region47: #{attention_rel_pos_forward.8} parent=39 // pred_region
        %v1979 = vld [vmem:[#allocation3] sm:$0xff]
        %v1980 = vld [vmem:[#allocation3 + $0x8] sm:$0xff]
        %v1981 = vld [vmem:[#allocation3 + $0x10] sm:$0xff]
        %v1982 = vld [vmem:[#allocation3 + $0x18] sm:$0xff]
        %v1983 = vrcp.pop %v1979
        %v1984 = vrcp.pop %v1980
        %v1985 = vrcp.pop %v1981
        %v1986 = vrcp.pop %v1982
        %v1987 = vld [vmem:[#allocation4] sm:$0xff]
        %v1988 = vld [vmem:[#allocation4 + $0x8] sm:$0xff]
        %v1989 = vld [vmem:[#allocation4 + $0x10] sm:$0xff]
        %v1990 = vld [vmem:[#allocation4 + $0x18] sm:$0xff]
        %1992 = vset.pattern.permute.xlu0 0
        %1993 = vperm.xlu0 %1992, %v1983
        %v1994 = vpop.permute.xlu0 %1993
        %1997 = vset.pattern.permute.xlu0 0
        %1998 = vperm.xlu0 %1997, %v1984
        %v1999 = vpop.permute.xlu0 %1998
        %2002 = vset.pattern.permute.xlu0 0
        %2003 = vperm.xlu0 %2002, %v1985
        %v2004 = vpop.permute.xlu0 %2003
        %2007 = vset.pattern.permute.xlu0 0
        %2008 = vperm.xlu0 %2007, %v1986
        %v2009 = vpop.permute.xlu0 %2008
        %v2011 = vmul.f32 %v1987, %v1994
        %v2012 = vmul.f32 %v1988, %v1999
        %v2013 = vmul.f32 %v1989, %v2004
        %v2014 = vmul.f32 %v1990, %v2009
        %v2015 = vpack.c.bf16 %v2012, %v2011
        %v2016 = vpack.c.bf16 %v2014, %v2013
        %v2019 = vunpack.c.l.b16 %v2015
        %v2020 = vunpack.c.h.b16 %v2015
        %v2021 = vunpack.c.l.b16 %v2016
        %v2022 = vunpack.c.h.b16 %v2016
        %v2023 = vpack.c.b16 %v2019, %v2019
        %v2024 = vpack.c.b16 %v2020, %v2020
        %v2025 = vpack.c.b16 %v2021, %v2021
        %v2026 = vpack.c.b16 %v2022, %v2022
        %vm2031 = vcmask 60416
        %2032 = vst.msk [vmem:[%s402] sm:$0xf] %vm2031, %v2023
        %2033 = vst.msk [vmem:[%s402 + $0x4] sm:$0xf] %vm2031, %v2024
        %2034 = vst.msk [vmem:[%s402 + $0x8] sm:$0xf] %vm2031, %v2025
        %2035 = vst.msk [vmem:[%s402 + $0xc] sm:$0xf] %vm2031, %v2026
        %v2036 = vld [vmem:[%s1077] sm:$0xff]
        %v2037 = vld [vmem:[%s1077 + $0x8] sm:$0xff]
        %v2038 = vld [vmem:[%s1077 + $0x10] sm:$0xff]
        %v2039 = vld [vmem:[%s1077 + $0x18] sm:$0xff]
        %v2040 = vrcp.pop %v2036
        %v2041 = vrcp.pop %v2037
        %v2042 = vrcp.pop %v2038
        %v2043 = vrcp.pop %v2039
        %v2044 = vld [vmem:[%s1106] sm:$0xff]
        %v2045 = vld [vmem:[%s1106 + $0x8] sm:$0xff]
        %v2046 = vld [vmem:[%s1106 + $0x10] sm:$0xff]
        %v2047 = vld [vmem:[%s1106 + $0x18] sm:$0xff]
        %2049 = vset.pattern.permute.xlu0 0
        %2050 = vperm.xlu0 %2049, %v2040
        %v2051 = vpop.permute.xlu0 %2050
        %2054 = vset.pattern.permute.xlu0 0
        %2055 = vperm.xlu0 %2054, %v2041
        %v2056 = vpop.permute.xlu0 %2055
        %2059 = vset.pattern.permute.xlu0 0
        %2060 = vperm.xlu0 %2059, %v2042
        %v2061 = vpop.permute.xlu0 %2060
        %2064 = vset.pattern.permute.xlu0 0
        %2065 = vperm.xlu0 %2064, %v2043
        %v2066 = vpop.permute.xlu0 %2065
        %v2068 = vmul.f32 %v2044, %v2051
        %v2069 = vmul.f32 %v2045, %v2056
        %v2070 = vmul.f32 %v2046, %v2061
        %v2071 = vmul.f32 %v2047, %v2066
        %v2072 = vpack.c.bf16 %v2069, %v2068
        %v2073 = vpack.c.bf16 %v2071, %v2070
        %v2076 = vunpack.c.l.b16 %v2072
        %v2077 = vunpack.c.h.b16 %v2072
        %v2078 = vunpack.c.l.b16 %v2073
        %v2079 = vunpack.c.h.b16 %v2073
        %v2080 = vpack.c.b16 %v2076, %v2076
        %v2081 = vpack.c.b16 %v2077, %v2077
        %v2082 = vpack.c.b16 %v2078, %v2078
        %v2083 = vpack.c.b16 %v2079, %v2079
        %2084 = vrot.lane.b32.xlu0 %v2080, 8
        %v2085 = vpop.permute.xlu0 %2084
        %2086 = vrot.lane.b32.xlu0 %v2081, 8
        %v2087 = vpop.permute.xlu0 %2086
        %2088 = vrot.lane.b32.xlu0 %v2082, 8
        %v2089 = vpop.permute.xlu0 %2088
        %2090 = vrot.lane.b32.xlu0 %v2083, 8
        %v2091 = vpop.permute.xlu0 %2090
        %vm2096 = vcmask 126016
        %2097 = vst.msk [vmem:[%s402] sm:$0xf] %vm2096, %v2085
        %2098 = vst.msk [vmem:[%s402 + $0x4] sm:$0xf] %vm2096, %v2087
        %2099 = vst.msk [vmem:[%s402 + $0x8] sm:$0xf] %vm2096, %v2089
        %2100 = vst.msk [vmem:[%s402 + $0xc] sm:$0xf] %vm2096, %v2091
        %v2101 = vld [vmem:[%s1455] sm:$0xff]
        %v2102 = vld [vmem:[%s1455 + $0x8] sm:$0xff]
        %v2103 = vld [vmem:[%s1455 + $0x10] sm:$0xff]
        %v2104 = vld [vmem:[%s1455 + $0x18] sm:$0xff]
        %v2105 = vrcp.pop %v2101
        %v2106 = vrcp.pop %v2102
        %v2107 = vrcp.pop %v2103
        %v2108 = vrcp.pop %v2104
        %v2109 = vld [vmem:[%s1484] sm:$0xff]
        %v2110 = vld [vmem:[%s1484 + $0x8] sm:$0xff]
        %v2111 = vld [vmem:[%s1484 + $0x10] sm:$0xff]
        %v2112 = vld [vmem:[%s1484 + $0x18] sm:$0xff]
        %2114 = vset.pattern.permute.xlu0 0
        %2115 = vperm.xlu0 %2114, %v2105
        %v2116 = vpop.permute.xlu0 %2115
        %2119 = vset.pattern.permute.xlu0 0
        %2120 = vperm.xlu0 %2119, %v2106
        %v2121 = vpop.permute.xlu0 %2120
        %2124 = vset.pattern.permute.xlu0 0
        %2125 = vperm.xlu0 %2124, %v2107
        %v2126 = vpop.permute.xlu0 %2125
        %2129 = vset.pattern.permute.xlu0 0
        %2130 = vperm.xlu0 %2129, %v2108
        %v2131 = vpop.permute.xlu0 %2130
        %v2133 = vmul.f32 %v2109, %v2116
        %v2134 = vmul.f32 %v2110, %v2121
        %v2135 = vmul.f32 %v2111, %v2126
        %v2136 = vmul.f32 %v2112, %v2131
        %v2137 = vpack.c.bf16 %v2134, %v2133
        %v2138 = vpack.c.bf16 %v2136, %v2135
        %v2141 = vunpack.c.l.b16 %v2137
        %v2142 = vunpack.c.h.b16 %v2137
        %v2143 = vunpack.c.l.b16 %v2138
        %v2144 = vunpack.c.h.b16 %v2138
        %v2145 = vpack.c.b16 %v2141, %v2141
        %v2146 = vpack.c.b16 %v2142, %v2142
        %v2147 = vpack.c.b16 %v2143, %v2143
        %v2148 = vpack.c.b16 %v2144, %v2144
        %2149 = vrot.lane.b32.xlu0 %v2145, 16
        %v2150 = vpop.permute.xlu0 %2149
        %2151 = vrot.lane.b32.xlu0 %v2146, 16
        %v2152 = vpop.permute.xlu0 %2151
        %2153 = vrot.lane.b32.xlu0 %v2147, 16
        %v2154 = vpop.permute.xlu0 %2153
        %2155 = vrot.lane.b32.xlu0 %v2148, 16
        %v2156 = vpop.permute.xlu0 %2155
        %vm2161 = vcmask 191616
        %2162 = vst.msk [vmem:[%s402] sm:$0xf] %vm2161, %v2150
        %2163 = vst.msk [vmem:[%s402 + $0x4] sm:$0xf] %vm2161, %v2152
        %2164 = vst.msk [vmem:[%s402 + $0x8] sm:$0xf] %vm2161, %v2154
        %2165 = vst.msk [vmem:[%s402 + $0xc] sm:$0xf] %vm2161, %v2156
        %v2166 = vld [vmem:[%s1833] sm:$0xff]
        %v2167 = vld [vmem:[%s1833 + $0x8] sm:$0xff]
        %v2168 = vld [vmem:[%s1833 + $0x10] sm:$0xff]
        %v2169 = vld [vmem:[%s1833 + $0x18] sm:$0xff]
        %v2170 = vrcp.pop %v2166
        %v2171 = vrcp.pop %v2167
        %v2172 = vrcp.pop %v2168
        %v2173 = vrcp.pop %v2169
        %v2174 = vld [vmem:[%s1862] sm:$0xff]
        %v2175 = vld [vmem:[%s1862 + $0x8] sm:$0xff]
        %v2176 = vld [vmem:[%s1862 + $0x10] sm:$0xff]
        %v2177 = vld [vmem:[%s1862 + $0x18] sm:$0xff]
        %2179 = vset.pattern.permute.xlu0 0
        %2180 = vperm.xlu0 %2179, %v2170
        %v2181 = vpop.permute.xlu0 %2180
        %2184 = vset.pattern.permute.xlu0 0
        %2185 = vperm.xlu0 %2184, %v2171
        %v2186 = vpop.permute.xlu0 %2185
        %2189 = vset.pattern.permute.xlu0 0
        %2190 = vperm.xlu0 %2189, %v2172
        %v2191 = vpop.permute.xlu0 %2190
        %2194 = vset.pattern.permute.xlu0 0
        %2195 = vperm.xlu0 %2194, %v2173
        %v2196 = vpop.permute.xlu0 %2195
        %v2198 = vmul.f32 %v2174, %v2181
        %v2199 = vmul.f32 %v2175, %v2186
        %v2200 = vmul.f32 %v2176, %v2191
        %v2201 = vmul.f32 %v2177, %v2196
        %v2202 = vpack.c.bf16 %v2199, %v2198
        %v2203 = vpack.c.bf16 %v2201, %v2200
        %v2206 = vunpack.c.l.b16 %v2202
        %v2207 = vunpack.c.h.b16 %v2202
        %v2208 = vunpack.c.l.b16 %v2203
        %v2209 = vunpack.c.h.b16 %v2203
        %v2210 = vpack.c.b16 %v2206, %v2206
        %v2211 = vpack.c.b16 %v2207, %v2207
        %v2212 = vpack.c.b16 %v2208, %v2208
        %v2213 = vpack.c.b16 %v2209, %v2209
        %2214 = vrot.lane.b32.xlu0 %v2210, 24
        %v2215 = vpop.permute.xlu0 %2214
        %2216 = vrot.lane.b32.xlu0 %v2211, 24
        %v2217 = vpop.permute.xlu0 %2216
        %2218 = vrot.lane.b32.xlu0 %v2212, 24
        %v2219 = vpop.permute.xlu0 %2218
        %2220 = vrot.lane.b32.xlu0 %v2213, 24
        %v2221 = vpop.permute.xlu0 %2220
        %vm2226 = vcmask 257216
        %2227 = vst.msk [vmem:[%s402] sm:$0xf] %vm2226, %v2215
        %2228 = vst.msk [vmem:[%s402 + $0x4] sm:$0xf] %vm2226, %v2217
        %2229 = vst.msk [vmem:[%s402 + $0x8] sm:$0xf] %vm2226, %v2219
        %2230 = vst.msk [vmem:[%s402 + $0xc] sm:$0xf] %vm2226, %v2221
      $region48: #{attention_rel_pos_forward.8} parent=39 // pred_fallthru
        _
      %s2231 = smul.u32 4, %s22
      %p2232 = scmp.lt.s32.totalorder %s21, 1
      %s2233 = scalar_select %p2232, %s21, 1
      %p2234 = scmp.lt.s32.totalorder %s2231, 3
      %s2235 = scalar_select %p2234, %s2231, 3
      %s2236 = smul.addr %s2233, 4
      %s2237 = sadd.s32 %s2235, %s2236
      %s2238 = smul.addr %s2237, 4
      %s2239 = scalar_lea.vmem %s5, %s2238
      // Predicated region
      $region49: #{attention_rel_pos_forward.8} parent=39 // pred_check
        %p2240 = pneg %p193
      $region50: #{attention_rel_pos_forward.8} parent=39 // pred_check_branch
        %2242 = sbr.rel (%p2240) target = $region52
      $region51: #{attention_rel_pos_forward.8} parent=39 // pred_region
        %s2243 = smul.u32 4, %s22
      $region52: #{attention_rel_pos_forward.8} parent=39 // pred_fallthru
        _
    $region40: #{attention_rel_pos_forward.8} parent=5 // pred_fallthru
      _
    %p2244 = scmp.le.s32.totalorder 2, %s11
    // Predicated region
    $region53: #{attention_rel_pos_forward.8} parent=5 // pred_check
      %p2245 = pneg %p2244
    $region54: #{attention_rel_pos_forward.8} parent=5 // pred_check_branch
      %2247 = sbr.rel (%p2245) target = $region56
    $region55: #{attention_rel_pos_forward.8} parent=5 // pred_region
      %s2248 = ssub.s32 %s11, 2
      // Predicated region
      $region57: #{attention_rel_pos_forward.8} parent=55 // pred_check
        %p2249 = pneg %p199
      $region58: #{attention_rel_pos_forward.8} parent=55 // pred_check_branch
        %2251 = sbr.rel (%p2249) target = $region60
      $region59: #{attention_rel_pos_forward.8} parent=55 // pred_region
        %s2252 = smul.u32 4, %s25
        %p2253 = scmp.lt.s32.totalorder %s24, 1
        %s2254 = scalar_select %p2253, %s24, 1
        %p2255 = scmp.lt.s32.totalorder %s2252, 3
        %s2256 = scalar_select %p2255, %s2252, 3
        %s2257 = smul.addr %s2254, 4
        %s2258 = sadd.s32 %s2256, %s2257
        %s2259 = smul.addr %s2258, 4
        %s2260 = scalar_lea.vmem %s5, %s2259
      $region60: #{attention_rel_pos_forward.8} parent=55 // pred_fallthru
        _
    $region56: #{attention_rel_pos_forward.8} parent=5 // pred_fallthru
      _
  $region6: #{attention_rel_pos_forward.8} parent=0 // loop_footer
    %s15 = sadd.s32 1, %s11
  $region7: #{attention_rel_pos_forward.8} parent=0 // loop_footer_branch
    %10 = sbr.rel target = $region3
  $region8: #{attention_rel_pos_forward.8} parent=0 // loop_exit
    _

</llo_original>
